<compile_context>
chip_gen: v6e
topology: v6e:2x2x1
jax: 0.10.0
libtpu: 0.0.40
codegen_flags: <defaults>
</compile_context>

<pallas_src>
import jax
import jax.numpy as jnp
from jax.experimental import pallas as pl
from jax.experimental.pallas import tpu as pltpu

LANE = 128   # lane width: feature dims are padded to multiples of this
SUB = 8      # f32 sublane count: batch tile is a multiple of this


def _round_up(x, m):
    return (x + m - 1) // m * m


def decoder_kernel(hidden_ref, cell_ref, emb_ref, enc_ref,          # batch-tiled activations
                   w_h_ref, w_e_ref, attn_b_ref, v_row_ref,         # attention weights
                   w_gates_ref, b_gates_ref,                        # fused LSTM weights
                   out_w_ref, out_b_ref,                            # fused output projection
                   pred_ref, h_out_ref, c_out_ref):                 # outputs
    H_p = hidden_ref.shape[1]
    TB, S, E_p = enc_ref.shape

    hidden = hidden_ref[...]                                # (TB, H_p) f32
    cell = cell_ref[...]                                    # (TB, H_p) f32
    enc_bf = enc_ref[...]                                   # (TB, S, E_p) bf16
    emb_bf = emb_ref[...]                                   # (TB, Ed_p) bf16
    hid_bf = hidden.astype(jnp.bfloat16)

    # --- attention: softmax_s( v . tanh(W_h h + W_e enc + b) ) ---
    # single (TB*S, E_p) x (E_p, H_p) MXU matmul for the encoder part
    enc_part = jnp.dot(enc_bf.reshape(TB * S, E_p), w_e_ref[...],
                       preferred_element_type=jnp.float32).reshape(TB, S, H_p)
    hid_part = jnp.dot(hid_bf, w_h_ref[...],
                       preferred_element_type=jnp.float32) + attn_b_ref[...]
    energy = jnp.tanh(enc_part + hid_part[:, None, :])      # (TB, S, H_p) f32
    # N=1 score projection as a VPU multiply + cross-lane reduce (MXU stays free)
    scores = jnp.sum(energy * v_row_ref[...][None, :, :], axis=-1)   # (TB, S)
    m = jnp.max(scores, axis=1, keepdims=True)
    ex = jnp.exp(scores - m)
    denom = jnp.sum(ex, axis=1, keepdims=True)
    attn = ex * pl.reciprocal(denom, approx=True)            # (TB, S) f32

    # context = attn @ enc — batched bf16 MXU dot, f32 accumulation; no f32
    # copy of the encoder tile is materialized.
    ctx3 = jnp.einsum('bqs,bse->bqe',
                      attn.astype(jnp.bfloat16)[:, None, :], enc_bf,
                      preferred_element_type=jnp.float32)    # (TB, 1, E_p)
    context = ctx3[:, 0, :]                                  # (TB, E_p) f32
    ctx_bf = context.astype(jnp.bfloat16)

    # --- one LSTM step on cat(embedded, context); PyTorch gate order (i,f,g,o) ---
    # fused single dot: (TB, Ed_p+E_p+H_p) x (Ed_p+E_p+H_p, 4*H_p)
    x_g = jnp.concatenate([emb_bf, ctx_bf, hid_bf], axis=1)
    gates = (jnp.dot(x_g, w_gates_ref[...], preferred_element_type=jnp.float32)
             + b_gates_ref[...])                             # (TB, 4*H_p) f32
    i_g = jax.nn.sigmoid(gates[:, 0:H_p])
    f_g = jax.nn.sigmoid(gates[:, H_p:2 * H_p])
    g_g = jnp.tanh(gates[:, 2 * H_p:3 * H_p])
    o_g = jax.nn.sigmoid(gates[:, 3 * H_p:4 * H_p])
    c_new = f_g * cell + i_g * g_g
    h_new = o_g * jnp.tanh(c_new)

    # --- output projection: out(cat(h_new, context, embedded)) as one fused dot ---
    x_o = jnp.concatenate([h_new.astype(jnp.bfloat16), ctx_bf, emb_bf], axis=1)
    pred = (jnp.dot(x_o, out_w_ref[...], preferred_element_type=jnp.float32)
            + out_b_ref[...])                                # (TB, V_p) f32

    pred_ref[...] = pred
    h_out_ref[...] = h_new
    c_out_ref[...] = c_new


def decoder_forward(tokens, hidden, cell, encoder_outputs, params, *, tb=None):
    """tokens: (B,) int32; hidden/cell: (1, B, H); encoder_outputs: (B, S, E)."""
    B, S, E = encoder_outputs.shape
    H = hidden.shape[-1]
    V, Ed = params['emb_w'].shape

    # Batch tile: as large as reasonable (sweep 64-256 for big B); for small B
    # keep padding minimal. Keeping >=2 tiles feeds both v7x TensorCores.
    if tb is None:
        tb = min(128, _round_up(B, SUB))
    tb = _round_up(tb, SUB)

    B_p = _round_up(B, tb)
    H_p = _round_up(H, LANE)
    E_p = _round_up(E, LANE)
    Ed_p = _round_up(Ed, LANE)
    V_p = _round_up(V, LANE)
    K_p = Ed_p + E_p + H_p          # fused contraction dim (same for out proj)

    f32, bf16 = jnp.float32, jnp.bfloat16

    def pad2(x, r, c, dtype):
        return jnp.pad(x, ((0, r - x.shape[0]), (0, c - x.shape[1]))).astype(dtype)

    def pad_gate_cols(w):
        # (K, 4H) -> (K, 4*H_p): pad each of the i,f,g,o blocks separately so the
        # in-kernel 128-aligned gate slices keep PyTorch gate order.
        blocks = [jnp.pad(w[:, g * H:(g + 1) * H], ((0, 0), (0, H_p - H)))
                  for g in range(4)]
        return jnp.concatenate(blocks, axis=1)

    # --- pre-split / stack / zero-pad / cast weights (layout plumbing only) ---
    attn_w = params['attn_w']
    w_h = pad2(attn_w[:H, :], H_p, H_p, bf16)
    w_e = pad2(attn_w[H:, :], E_p, H_p, bf16)
    attn_b = pad2(params['attn_b'], 1, H_p, f32)
    v_row = pad2(params['v_w'].T, 1, H_p, f32)                      # (1, H_p)

    w_ih = params['w_ih']
    w_gates = jnp.concatenate([
        jnp.pad(pad_gate_cols(w_ih[:Ed, :]), ((0, Ed_p - Ed), (0, 0))),
        jnp.pad(pad_gate_cols(w_ih[Ed:, :]), ((0, E_p - E), (0, 0))),
        jnp.pad(pad_gate_cols(params['w_hh']), ((0, H_p - H), (0, 0))),
    ], axis=0).astype(bf16)                                         # (K_p, 4*H_p)
    b_gates = pad_gate_cols(params['b_ih'] + params['b_hh']).astype(f32)

    out_w = params['out_w']
    out_w_cat = jnp.concatenate([
        jnp.pad(out_w[:H, :],      ((0, H_p - H),   (0, V_p - V))),
        jnp.pad(out_w[H:H + E, :], ((0, E_p - E),   (0, V_p - V))),
        jnp.pad(out_w[H + E:, :],  ((0, Ed_p - Ed), (0, V_p - V))),
    ], axis=0).astype(bf16)                                         # (K_p, V_p)
    out_b = pad2(params['out_b'], 1, V_p, f32)

    # --- activations: embedding gather done as a wrapper-side XLA gather ---
    emb_rows = params['emb_w'][tokens.astype(jnp.int32)]            # (B, Ed)
    emb_p = pad2(emb_rows, B_p, Ed_p, bf16)
    hid_p = pad2(hidden[0], B_p, H_p, f32)
    cell_p = pad2(cell[0], B_p, H_p, f32)
    enc_p = jnp.pad(encoder_outputs,
                    ((0, B_p - B), (0, 0), (0, E_p - E))).astype(bf16)

    def bmap(i):            # batch-tiled activations / outputs
        return (i, 0)

    def bmap3(i):
        return (i, 0, 0)

    def wmap(i):            # weights: same block every iteration (stay resident)
        return (0, 0)

    # VMEM budget derived from the running chip (leave headroom for scratch /
    # double buffers): ~48 MiB on v7x (64 MiB physical), ~96 MiB on v5e/v6e.
    try:
        vmem_phys = int(pltpu.get_tpu_info().vmem_capacity_bytes)
    except Exception:
        vmem_phys = 128 * 1024 * 1024
    vmem_limit = int(min(vmem_phys * 3 // 4, 100 * 1024 * 1024))

    out_shape = (
        jax.ShapeDtypeStruct((B_p, V_p), jnp.float32),
        jax.ShapeDtypeStruct((B_p, H_p), jnp.float32),
        jax.ShapeDtypeStruct((B_p, H_p), jnp.float32),
    )

    def build_call(weight_pipeline_mode):
        def wspec(shape):
            if weight_pipeline_mode is None:
                return pl.BlockSpec(shape, wmap)
            return pl.BlockSpec(shape, wmap, pipeline_mode=weight_pipeline_mode)

        grid_spec = pltpu.PrefetchScalarGridSpec(
            num_scalar_prefetch=0,
            grid=(B_p // tb,),
            in_specs=[
                pl.BlockSpec((tb, H_p), bmap),           # hidden
                pl.BlockSpec((tb, H_p), bmap),           # cell
                pl.BlockSpec((tb, Ed_p), bmap),          # pre-gathered embeddings
                pl.BlockSpec((tb, S, E_p), bmap3),       # encoder outputs
                wspec((H_p, H_p)),                       # w_h
                wspec((E_p, H_p)),                       # w_e
                wspec((1, H_p)),                         # attn_b
                wspec((1, H_p)),                         # v (as a row)
                wspec((K_p, 4 * H_p)),                   # fused gate weights
                wspec((1, 4 * H_p)),                     # fused b_ih + b_hh
                wspec((K_p, V_p)),                       # fused output weights
                wspec((1, V_p)),                         # out_b
            ],
            out_specs=(
                pl.BlockSpec((tb, V_p), bmap),
                pl.BlockSpec((tb, H_p), bmap),
                pl.BlockSpec((tb, H_p), bmap),
            ),
        )
        return pl.pallas_call(
            decoder_kernel,
            out_shape=out_shape,
            grid_spec=grid_spec,
            compiler_params=pltpu.CompilerParams(
                dimension_semantics=("parallel",),
                vmem_limit_bytes=vmem_limit,
            ),
        )

    args = (hid_p, cell_p, emb_p, enc_p,
            w_h, w_e, attn_b, v_row,
            w_gates, b_gates, out_w_cat, out_b)
    try:
        # single-buffer the constant-index weight blocks (never re-fetched)
        pred_p, h_p, c_p = build_call(pl.Buffered(1))(*args)
    except Exception:
        # fallback if this JAX build rejects pipeline_mode on BlockSpec
        pred_p, h_p, c_p = build_call(None)(*args)

    pred = pred_p[:B, :V]
    h_new = h_p[:B, :H][None]
    c_new = c_p[:B, :H][None]
    return pred, h_new, c_new


def decoder_reference(tokens, hidden, cell, enc, p):
    """Pure-JAX f32 reference mirroring the PyTorch forward pass."""
    B, S, E = enc.shape
    h0 = hidden[0]
    c0 = cell[0]
    H = h0.shape[-1]
    embedded = p['emb_w'][tokens]                                          # (B, Ed)
    dec_rep = jnp.broadcast_to(h0[:, None, :], (B, S, H))
    energy = jnp.tanh(jnp.concatenate([dec_rep, enc], axis=2) @ p['attn_w']
                      + p['attn_b'])
    scores = (energy @ p['v_w'])[:, :, 0]
    attn = jax.nn.softmax(scores, axis=1)
    context = jnp.einsum('bs,bse->be', attn, enc)
    x = jnp.concatenate([embedded, context], axis=1)
    gates = x @ p['w_ih'] + p['b_ih'] + h0 @ p['w_hh'] + p['b_hh']
    i_g = jax.nn.sigmoid(gates[:, 0:H])
    f_g = jax.nn.sigmoid(gates[:, H:2 * H])
    g_g = jnp.tanh(gates[:, 2 * H:3 * H])
    o_g = jax.nn.sigmoid(gates[:, 3 * H:4 * H])
    c_new = f_g * c0 + i_g * g_g
    h_new = o_g * jnp.tanh(c_new)
    pred = (jnp.concatenate([h_new, context, embedded], axis=1) @ p['out_w']
            + p['out_b'])
    return pred, h_new[None], c_new[None]


def init_params(key, output_dim, embed_dim, enc_h, dec_h):
    ks = jax.random.split(key, 10)
    s = 0.1
    return {
        'emb_w':  s * jax.random.normal(ks[0], (output_dim, embed_dim), jnp.float32),
        'attn_w': s * jax.random.normal(ks[1], (dec_h + enc_h, dec_h), jnp.float32),
        'attn_b': s * jax.random.normal(ks[2], (1, dec_h), jnp.float32),
        'v_w':    s * jax.random.normal(ks[3], (dec_h, 1), jnp.float32),
        'w_ih':   s * jax.random.normal(ks[4], (embed_dim + enc_h, 4 * dec_h), jnp.float32),
        'b_ih':   s * jax.random.normal(ks[5], (1, 4 * dec_h), jnp.float32),
        'w_hh':   s * jax.random.normal(ks[6], (dec_h, 4 * dec_h), jnp.float32),
        'b_hh':   s * jax.random.normal(ks[7], (1, 4 * dec_h), jnp.float32),
        'out_w':  s * jax.random.normal(ks[8], (dec_h + enc_h + embed_dim, output_dim), jnp.float32),
        'out_b':  s * jax.random.normal(ks[9], (1, output_dim), jnp.float32),
    }


if __name__ == "__main__":
    B, S = 2, 8
    OUTPUT_DIM = 16    # vocab size
    EMBED_DIM = 32
    ENC_H = 32         # encoder_hidden_dim (FUSION_OUTPUT_DIM, scaled down)
    DEC_H = 32         # decoder_hidden_dim (DECODER_HIDDEN_SIZE, scaled down)

    key = jax.random.PRNGKey(0)
    k_p, k_t, k_h, k_c, k_e = jax.random.split(key, 5)
    params = init_params(k_p, OUTPUT_DIM, EMBED_DIM, ENC_H, DEC_H)

    tokens = jax.random.randint(k_t, (B,), 0, OUTPUT_DIM, dtype=jnp.int32)
    hidden = jax.random.normal(k_h, (1, B, DEC_H), jnp.float32)
    cell = jax.random.normal(k_c, (1, B, DEC_H), jnp.float32)
    encoder_outputs = jax.random.normal(k_e, (B, S, ENC_H), jnp.float32)

    pred, h_new, c_new = decoder_forward(tokens, hidden, cell, encoder_outputs, params)
    jax.block_until_ready((pred, h_new, c_new))

    # correctness check against the pure-JAX f32 reference (bf16 MXU operands
    # with f32 accumulation -> loosened tolerances)
    ref_pred, ref_h, ref_c = decoder_reference(tokens, hidden, cell, encoder_outputs, params)
    assert jnp.allclose(pred, ref_pred, atol=2e-2, rtol=2e-2)
    assert jnp.allclose(h_new, ref_h, atol=2e-2, rtol=2e-2)
    assert jnp.allclose(c_new, ref_c, atol=2e-2, rtol=2e-2)

    print("KERNEL_OK")
</pallas_src>

<mosaic_0001>
module attributes {stable_mosaic.version = 11 : i64} {
  func.func @decoder_kernel(%arg0: i32, %arg1: memref<8x128xf32, #tpu.memory_space<vmem>>, %arg2: memref<8x128xf32, #tpu.memory_space<vmem>>, %arg3: memref<8x128xbf16, #tpu.memory_space<vmem>>, %arg4: memref<8x8x128xbf16, #tpu.memory_space<vmem>>, %arg5: memref<128x128xbf16, #tpu.memory_space<vmem>>, %arg6: memref<128x128xbf16, #tpu.memory_space<vmem>>, %arg7: memref<1x128xf32, #tpu.memory_space<vmem>>, %arg8: memref<1x128xf32, #tpu.memory_space<vmem>>, %arg9: memref<384x512xbf16, #tpu.memory_space<vmem>>, %arg10: memref<1x512xf32, #tpu.memory_space<vmem>>, %arg11: memref<384x128xbf16, #tpu.memory_space<vmem>>, %arg12: memref<1x128xf32, #tpu.memory_space<vmem>>, %arg13: memref<8x128xf32, #tpu.memory_space<vmem>>, %arg14: memref<8x128xf32, #tpu.memory_space<vmem>>, %arg15: memref<8x128xf32, #tpu.memory_space<vmem>>) attributes {dimension_semantics = [#tpu.dimension_semantics<parallel>], iteration_bounds = array<i64: 1>, scalar_prefetch = 0 : i64, scratch_operands = 0 : i64, tpu.core_type = #tpu.core_type<tc>, window_params = [{transform_indices = @transform_0, window_bounds = array<i64: 8, 128>}, {transform_indices = @transform_1, window_bounds = array<i64: 8, 128>}, {transform_indices = @transform_2, window_bounds = array<i64: 8, 128>}, {transform_indices = @transform_3, window_bounds = array<i64: 8, 8, 128>}, {pipeline_mode = #tpu.pipeline_mode<synchronous>, transform_indices = @transform_4, window_bounds = array<i64: 128, 128>}, {pipeline_mode = #tpu.pipeline_mode<synchronous>, transform_indices = @transform_5, window_bounds = array<i64: 128, 128>}, {pipeline_mode = #tpu.pipeline_mode<synchronous>, transform_indices = @transform_6, window_bounds = array<i64: 1, 128>}, {pipeline_mode = #tpu.pipeline_mode<synchronous>, transform_indices = @transform_7, window_bounds = array<i64: 1, 128>}, {pipeline_mode = #tpu.pipeline_mode<synchronous>, transform_indices = @transform_8, window_bounds = array<i64: 384, 512>}, {pipeline_mode = #tpu.pipeline_mode<synchronous>, transform_indices = @transform_9, window_bounds = array<i64: 1, 512>}, {pipeline_mode = #tpu.pipeline_mode<synchronous>, transform_indices = @transform_10, window_bounds = array<i64: 384, 128>}, {pipeline_mode = #tpu.pipeline_mode<synchronous>, transform_indices = @transform_11, window_bounds = array<i64: 1, 128>}, {transform_indices = @transform_12, window_bounds = array<i64: 8, 128>}, {transform_indices = @transform_13, window_bounds = array<i64: 8, 128>}, {transform_indices = @transform_14, window_bounds = array<i64: 8, 128>}]} {
    %c0 = arith.constant 0 : index
    %c0_0 = arith.constant 0 : index
    %0 = vector.load %arg1[%c0, %c0_0] : memref<8x128xf32, #tpu.memory_space<vmem>>, vector<8x128xf32>
    %c0_1 = arith.constant 0 : index
    %c0_2 = arith.constant 0 : index
    %1 = vector.load %arg2[%c0_1, %c0_2] : memref<8x128xf32, #tpu.memory_space<vmem>>, vector<8x128xf32>
    %c0_3 = arith.constant 0 : index
    %c0_4 = arith.constant 0 : index
    %c0_5 = arith.constant 0 : index
    %2 = vector.load %arg4[%c0_3, %c0_4, %c0_5] : memref<8x8x128xbf16, #tpu.memory_space<vmem>>, vector<8x8x128xbf16>
    %c0_6 = arith.constant 0 : index
    %c0_7 = arith.constant 0 : index
    %3 = vector.load %arg3[%c0_6, %c0_7] : memref<8x128xbf16, #tpu.memory_space<vmem>>, vector<8x128xbf16>
    %4 = arith.truncf %0 : vector<8x128xf32> to vector<8x128xbf16>
    %5 = vector.shape_cast %2 : vector<8x8x128xbf16> to vector<64x128xbf16>
    %c0_8 = arith.constant 0 : index
    %c0_9 = arith.constant 0 : index
    %6 = vector.load %arg6[%c0_8, %c0_9] : memref<128x128xbf16, #tpu.memory_space<vmem>>, vector<128x128xbf16>
    %cst = arith.constant dense<0.000000e+00> : vector<64x128xf32>
    %7 = tpu.matmul %5, %6, %cst {dimension_numbers = #tpu.dot_dimension_numbers<[1], [0], [0], [1], [0, 0, 1, 1], [], []>} : vector<64x128xbf16>, vector<128x128xbf16>, vector<64x128xf32> -> vector<64x128xf32>
    %8 = vector.shape_cast %7 : vector<64x128xf32> to vector<8x8x128xf32>
    %c0_10 = arith.constant 0 : index
    %c0_11 = arith.constant 0 : index
    %9 = vector.load %arg5[%c0_10, %c0_11] : memref<128x128xbf16, #tpu.memory_space<vmem>>, vector<128x128xbf16>
    %cst_12 = arith.constant dense<0.000000e+00> : vector<8x128xf32>
    %10 = tpu.matmul %4, %9, %cst_12 {dimension_numbers = #tpu.dot_dimension_numbers<[1], [0], [0], [1], [0, 0, 1, 1], [], []>} : vector<8x128xbf16>, vector<128x128xbf16>, vector<8x128xf32> -> vector<8x128xf32>
    %c0_13 = arith.constant 0 : index
    %c0_14 = arith.constant 0 : index
    %11 = vector.load %arg7[%c0_13, %c0_14] : memref<1x128xf32, #tpu.memory_space<vmem>>, vector<1x128xf32>
    %12 = vector.broadcast %11 : vector<1x128xf32> to vector<8x128xf32>
    %13 = arith.addf %10, %12 : vector<8x128xf32>
    %14 = vector.shape_cast %13 : vector<8x128xf32> to vector<8x1x128xf32>
    %15 = vector.broadcast %14 : vector<8x1x128xf32> to vector<8x8x128xf32>
    %16 = arith.addf %8, %15 : vector<8x8x128xf32>
    %17 = math.tanh %16 : vector<8x8x128xf32>
    %c0_15 = arith.constant 0 : index
    %c0_16 = arith.constant 0 : index
    %18 = vector.load %arg8[%c0_15, %c0_16] : memref<1x128xf32, #tpu.memory_space<vmem>>, vector<1x128xf32>
    %19 = vector.shape_cast %18 : vector<1x128xf32> to vector<1x1x128xf32>
    %20 = vector.broadcast %19 : vector<1x1x128xf32> to vector<8x8x128xf32>
    %21 = arith.mulf %17, %20 : vector<8x8x128xf32>
    %cst_17 = arith.constant dense<0.000000e+00> : vector<8x8xf32>
    %22 = vector.multi_reduction <add>, %21, %cst_17 [2] : vector<8x8x128xf32> to vector<8x8xf32>
    %cst_18 = arith.constant dense<0xFF800000> : vector<8xf32>
    %23 = vector.multi_reduction <maximumf>, %22, %cst_18 [1] : vector<8x8xf32> to vector<8xf32>
    %24 = vector.shape_cast %23 : vector<8xf32> to vector<8x1xf32>
    %25 = vector.broadcast %24 : vector<8x1xf32> to vector<8x8xf32>
    %26 = arith.subf %22, %25 : vector<8x8xf32>
    %27 = math.exp %26 : vector<8x8xf32>
    %cst_19 = arith.constant dense<0.000000e+00> : vector<8xf32>
    %28 = vector.multi_reduction <add>, %27, %cst_19 [1] : vector<8x8xf32> to vector<8xf32>
    %29 = vector.shape_cast %28 : vector<8xf32> to vector<8x1xf32>
    %30 = tpu.reciprocal %29 {approx = true} : vector<8x1xf32> -> vector<8x1xf32>
    %31 = vector.broadcast %30 : vector<8x1xf32> to vector<8x8xf32>
    %32 = arith.mulf %27, %31 : vector<8x8xf32>
    %33 = arith.truncf %32 : vector<8x8xf32> to vector<8x8xbf16>
    %34 = vector.shape_cast %33 : vector<8x8xbf16> to vector<8x1x8xbf16>
    "tpu.trace_start"() <{level = 10 : i32, message = "bqs,bse->bqe"}> : () -> ()
    %cst_20 = arith.constant dense<0.000000e+00> : vector<8x1x128xf32>
    %35 = tpu.matmul %34, %2, %cst_20 {dimension_numbers = #tpu.dot_dimension_numbers<[2], [1], [1], [2], [0, 0, 0, 1, 1, 2], [0], [0]>} : vector<8x1x8xbf16>, vector<8x8x128xbf16>, vector<8x1x128xf32> -> vector<8x1x128xf32>
    "tpu.trace_stop"() : () -> ()
    %36 = vector.shape_cast %35 : vector<8x1x128xf32> to vector<8x128xf32>
    %37 = arith.truncf %36 : vector<8x128xf32> to vector<8x128xbf16>
    %38 = tpu.concatenate %3, %37, %4 in 1 : vector<8x128xbf16>, vector<8x128xbf16>, vector<8x128xbf16> -> vector<8x384xbf16>
    %c0_21 = arith.constant 0 : index
    %c0_22 = arith.constant 0 : index
    %39 = vector.load %arg9[%c0_21, %c0_22] : memref<384x512xbf16, #tpu.memory_space<vmem>>, vector<384x512xbf16>
    %cst_23 = arith.constant dense<0.000000e+00> : vector<8x512xf32>
    %40 = tpu.matmul %38, %39, %cst_23 {dimension_numbers = #tpu.dot_dimension_numbers<[1], [0], [0], [1], [0, 0, 1, 1], [], []>} : vector<8x384xbf16>, vector<384x512xbf16>, vector<8x512xf32> -> vector<8x512xf32>
    %c0_24 = arith.constant 0 : index
    %c0_25 = arith.constant 0 : index
    %41 = vector.load %arg10[%c0_24, %c0_25] : memref<1x512xf32, #tpu.memory_space<vmem>>, vector<1x512xf32>
    %42 = vector.broadcast %41 : vector<1x512xf32> to vector<8x512xf32>
    %43 = arith.addf %40, %42 : vector<8x512xf32>
    %44 = vector.extract_strided_slice %43 {offsets = [0, 0], sizes = [8, 128], strides = [1, 1]} : vector<8x512xf32> to vector<8x128xf32>
    %45 = arith.negf %44 : vector<8x128xf32>
    %46 = math.exp %45 : vector<8x128xf32>
    %cst_26 = arith.constant 1.000000e+00 : f32
    %47 = vector.broadcast %cst_26 : f32 to vector<8x128xf32>
    %48 = arith.addf %47, %46 : vector<8x128xf32>
    %49 = arith.divf %47, %48 : vector<8x128xf32>
    %50 = vector.extract_strided_slice %43 {offsets = [0, 128], sizes = [8, 128], strides = [1, 1]} : vector<8x512xf32> to vector<8x128xf32>
    %51 = arith.negf %50 : vector<8x128xf32>
    %52 = math.exp %51 : vector<8x128xf32>
    %cst_27 = arith.constant 1.000000e+00 : f32
    %53 = vector.broadcast %cst_27 : f32 to vector<8x128xf32>
    %54 = arith.addf %53, %52 : vector<8x128xf32>
    %55 = arith.divf %53, %54 : vector<8x128xf32>
    %56 = vector.extract_strided_slice %43 {offsets = [0, 256], sizes = [8, 128], strides = [1, 1]} : vector<8x512xf32> to vector<8x128xf32>
    %57 = math.tanh %56 : vector<8x128xf32>
    %58 = vector.extract_strided_slice %43 {offsets = [0, 384], sizes = [8, 128], strides = [1, 1]} : vector<8x512xf32> to vector<8x128xf32>
    %59 = arith.negf %58 : vector<8x128xf32>
    %60 = math.exp %59 : vector<8x128xf32>
    %cst_28 = arith.constant 1.000000e+00 : f32
    %61 = vector.broadcast %cst_28 : f32 to vector<8x128xf32>
    %62 = arith.addf %61, %60 : vector<8x128xf32>
    %63 = arith.divf %61, %62 : vector<8x128xf32>
    %64 = arith.mulf %55, %1 : vector<8x128xf32>
    %65 = arith.mulf %49, %57 : vector<8x128xf32>
    %66 = arith.addf %64, %65 : vector<8x128xf32>
    %67 = math.tanh %66 : vector<8x128xf32>
    %68 = arith.mulf %63, %67 : vector<8x128xf32>
    %69 = arith.truncf %68 : vector<8x128xf32> to vector<8x128xbf16>
    %70 = tpu.concatenate %69, %37, %3 in 1 : vector<8x128xbf16>, vector<8x128xbf16>, vector<8x128xbf16> -> vector<8x384xbf16>
    %c0_29 = arith.constant 0 : index
    %c0_30 = arith.constant 0 : index
    %71 = vector.load %arg11[%c0_29, %c0_30] : memref<384x128xbf16, #tpu.memory_space<vmem>>, vector<384x128xbf16>
    %cst_31 = arith.constant dense<0.000000e+00> : vector<8x128xf32>
    %72 = tpu.matmul %70, %71, %cst_31 {dimension_numbers = #tpu.dot_dimension_numbers<[1], [0], [0], [1], [0, 0, 1, 1], [], []>} : vector<8x384xbf16>, vector<384x128xbf16>, vector<8x128xf32> -> vector<8x128xf32>
    %c0_32 = arith.constant 0 : index
    %c0_33 = arith.constant 0 : index
    %73 = vector.load %arg12[%c0_32, %c0_33] : memref<1x128xf32, #tpu.memory_space<vmem>>, vector<1x128xf32>
    %74 = vector.broadcast %73 : vector<1x128xf32> to vector<8x128xf32>
    %75 = arith.addf %72, %74 : vector<8x128xf32>
    %c0_34 = arith.constant 0 : index
    %c0_35 = arith.constant 0 : index
    %76 = vector.load %arg13[%c0_34, %c0_35] : memref<8x128xf32, #tpu.memory_space<vmem>>, vector<8x128xf32>
    tpu.vector_store %arg13[%c0_34, %c0_35], %75 {strides = array<i32>} : memref<8x128xf32, #tpu.memory_space<vmem>>, vector<8x128xf32>,
    %c0_36 = arith.constant 0 : index
    %c0_37 = arith.constant 0 : index
    %77 = vector.load %arg14[%c0_36, %c0_37] : memref<8x128xf32, #tpu.memory_space<vmem>>, vector<8x128xf32>
    tpu.vector_store %arg14[%c0_36, %c0_37], %68 {strides = array<i32>} : memref<8x128xf32, #tpu.memory_space<vmem>>, vector<8x128xf32>,
    %c0_38 = arith.constant 0 : index
    %c0_39 = arith.constant 0 : index
    %78 = vector.load %arg15[%c0_38, %c0_39] : memref<8x128xf32, #tpu.memory_space<vmem>>, vector<8x128xf32>
    tpu.vector_store %arg15[%c0_38, %c0_39], %66 {strides = array<i32>} : memref<8x128xf32, #tpu.memory_space<vmem>>, vector<8x128xf32>,
    return
  }
  func.func @transform_0(%arg0: i32) -> (i32, i32) {
    %c0_i32 = arith.constant 0 : i32
    %c0_i32_0 = arith.constant 0 : i32
    return %arg0, %c0_i32 : i32, i32
  }
  func.func @transform_1(%arg0: i32) -> (i32, i32) {
    %c0_i32 = arith.constant 0 : i32
    %c0_i32_0 = arith.constant 0 : i32
    return %arg0, %c0_i32 : i32, i32
  }
  func.func @transform_2(%arg0: i32) -> (i32, i32) {
    %c0_i32 = arith.constant 0 : i32
    %c0_i32_0 = arith.constant 0 : i32
    return %arg0, %c0_i32 : i32, i32
  }
  func.func @transform_3(%arg0: i32) -> (i32, i32, i32) {
    %c0_i32 = arith.constant 0 : i32
    %c0_i32_0 = arith.constant 0 : i32
    %c0_i32_1 = arith.constant 0 : i32
    return %arg0, %c0_i32, %c0_i32_0 : i32, i32, i32
  }
  func.func @transform_4(%arg0: i32) -> (i32, i32) {
    %c0_i32 = arith.constant 0 : i32
    %c0_i32_0 = arith.constant 0 : i32
    %c0_i32_1 = arith.constant 0 : i32
    return %c0_i32, %c0_i32_0 : i32, i32
  }
  func.func @transform_5(%arg0: i32) -> (i32, i32) {
    %c0_i32 = arith.constant 0 : i32
    %c0_i32_0 = arith.constant 0 : i32
    %c0_i32_1 = arith.constant 0 : i32
    return %c0_i32, %c0_i32_0 : i32, i32
  }
  func.func @transform_6(%arg0: i32) -> (i32, i32) {
    %c0_i32 = arith.constant 0 : i32
    %c0_i32_0 = arith.constant 0 : i32
    %c0_i32_1 = arith.constant 0 : i32
    return %c0_i32, %c0_i32_0 : i32, i32
  }
  func.func @transform_7(%arg0: i32) -> (i32, i32) {
    %c0_i32 = arith.constant 0 : i32
    %c0_i32_0 = arith.constant 0 : i32
    %c0_i32_1 = arith.constant 0 : i32
    return %c0_i32, %c0_i32_0 : i32, i32
  }
  func.func @transform_8(%arg0: i32) -> (i32, i32) {
    %c0_i32 = arith.constant 0 : i32
    %c0_i32_0 = arith.constant 0 : i32
    %c0_i32_1 = arith.constant 0 : i32
    return %c0_i32, %c0_i32_0 : i32, i32
  }
  func.func @transform_9(%arg0: i32) -> (i32, i32) {
    %c0_i32 = arith.constant 0 : i32
    %c0_i32_0 = arith.constant 0 : i32
    %c0_i32_1 = arith.constant 0 : i32
    return %c0_i32, %c0_i32_0 : i32, i32
  }
  func.func @transform_10(%arg0: i32) -> (i32, i32) {
    %c0_i32 = arith.constant 0 : i32
    %c0_i32_0 = arith.constant 0 : i32
    %c0_i32_1 = arith.constant 0 : i32
    return %c0_i32, %c0_i32_0 : i32, i32
  }
  func.func @transform_11(%arg0: i32) -> (i32, i32) {
    %c0_i32 = arith.constant 0 : i32
    %c0_i32_0 = arith.constant 0 : i32
    %c0_i32_1 = arith.constant 0 : i32
    return %c0_i32, %c0_i32_0 : i32, i32
  }
  func.func @transform_12(%arg0: i32) -> (i32, i32) {
    %c0_i32 = arith.constant 0 : i32
    %c0_i32_0 = arith.constant 0 : i32
    return %arg0, %c0_i32 : i32, i32
  }
  func.func @transform_13(%arg0: i32) -> (i32, i32) {
    %c0_i32 = arith.constant 0 : i32
    %c0_i32_0 = arith.constant 0 : i32
    return %arg0, %c0_i32 : i32, i32
  }
  func.func @transform_14(%arg0: i32) -> (i32, i32) {
    %c0_i32 = arith.constant 0 : i32
    %c0_i32_0 = arith.constant 0 : i32
    return %arg0, %c0_i32 : i32, i32
  }
}

module attributes {stable_mosaic.version = 11 : i64} {
  func.func @decoder_kernel(%arg0: i32, %arg1: memref<8x128xf32, #tpu.memory_space<vmem>>, %arg2: memref<8x128xf32, #tpu.memory_space<vmem>>, %arg3: memref<8x128xbf16, #tpu.memory_space<vmem>>, %arg4: memref<8x8x128xbf16, #tpu.memory_space<vmem>>, %arg5: memref<128x128xbf16, #tpu.memory_space<vmem>>, %arg6: memref<128x128xbf16, #tpu.memory_space<vmem>>, %arg7: memref<1x128xf32, #tpu.memory_space<vmem>>, %arg8: memref<1x128xf32, #tpu.memory_space<vmem>>, %arg9: memref<384x512xbf16, #tpu.memory_space<vmem>>, %arg10: memref<1x512xf32, #tpu.memory_space<vmem>>, %arg11: memref<384x128xbf16, #tpu.memory_space<vmem>>, %arg12: memref<1x128xf32, #tpu.memory_space<vmem>>, %arg13: memref<8x128xf32, #tpu.memory_space<vmem>>, %arg14: memref<8x128xf32, #tpu.memory_space<vmem>>, %arg15: memref<8x128xf32, #tpu.memory_space<vmem>>) attributes {dimension_semantics = [#tpu.dimension_semantics<parallel>], iteration_bounds = array<i64: 1>, scalar_prefetch = 0 : i64, scratch_operands = 0 : i64, tpu.core_type = #tpu.core_type<tc>, window_params = [{transform_indices = @transform_0, window_bounds = array<i64: 8, 128>}, {transform_indices = @transform_1, window_bounds = array<i64: 8, 128>}, {transform_indices = @transform_2, window_bounds = array<i64: 8, 128>}, {transform_indices = @transform_3, window_bounds = array<i64: 8, 8, 128>}, {pipeline_mode = #tpu.pipeline_mode<synchronous>, transform_indices = @transform_4, window_bounds = array<i64: 128, 128>}, {pipeline_mode = #tpu.pipeline_mode<synchronous>, transform_indices = @transform_5, window_bounds = array<i64: 128, 128>}, {pipeline_mode = #tpu.pipeline_mode<synchronous>, transform_indices = @transform_6, window_bounds = array<i64: 1, 128>}, {pipeline_mode = #tpu.pipeline_mode<synchronous>, transform_indices = @transform_7, window_bounds = array<i64: 1, 128>}, {pipeline_mode = #tpu.pipeline_mode<synchronous>, transform_indices = @transform_8, window_bounds = array<i64: 384, 512>}, {pipeline_mode = #tpu.pipeline_mode<synchronous>, transform_indices = @transform_9, window_bounds = array<i64: 1, 512>}, {pipeline_mode = #tpu.pipeline_mode<synchronous>, transform_indices = @transform_10, window_bounds = array<i64: 384, 128>}, {pipeline_mode = #tpu.pipeline_mode<synchronous>, transform_indices = @transform_11, window_bounds = array<i64: 1, 128>}, {transform_indices = @transform_12, window_bounds = array<i64: 8, 128>}, {transform_indices = @transform_13, window_bounds = array<i64: 8, 128>}, {transform_indices = @transform_14, window_bounds = array<i64: 8, 128>}]} {
    %c0 = arith.constant 0 : index
    %c0_0 = arith.constant 0 : index
    %0 = vector.load %arg1[%c0, %c0_0] : memref<8x128xf32, #tpu.memory_space<vmem>>, vector<8x128xf32>
    %c0_1 = arith.constant 0 : index
    %c0_2 = arith.constant 0 : index
    %1 = vector.load %arg2[%c0_1, %c0_2] : memref<8x128xf32, #tpu.memory_space<vmem>>, vector<8x128xf32>
    %c0_3 = arith.constant 0 : index
    %c0_4 = arith.constant 0 : index
    %c0_5 = arith.constant 0 : index
    %2 = vector.load %arg4[%c0_3, %c0_4, %c0_5] : memref<8x8x128xbf16, #tpu.memory_space<vmem>>, vector<8x8x128xbf16>
    %c0_6 = arith.constant 0 : index
    %c0_7 = arith.constant 0 : index
    %3 = vector.load %arg3[%c0_6, %c0_7] : memref<8x128xbf16, #tpu.memory_space<vmem>>, vector<8x128xbf16>
    %4 = arith.truncf %0 : vector<8x128xf32> to vector<8x128xbf16>
    %5 = vector.shape_cast %2 : vector<8x8x128xbf16> to vector<64x128xbf16>
    %c0_8 = arith.constant 0 : index
    %c0_9 = arith.constant 0 : index
    %6 = vector.load %arg6[%c0_8, %c0_9] : memref<128x128xbf16, #tpu.memory_space<vmem>>, vector<128x128xbf16>
    %cst = arith.constant dense<0.000000e+00> : vector<64x128xf32>
    %7 = tpu.matmul %5, %6, %cst {dimension_numbers = #tpu.dot_dimension_numbers<[1], [0], [0], [1], [0, 0, 1, 1], [], []>} : vector<64x128xbf16>, vector<128x128xbf16>, vector<64x128xf32> -> vector<64x128xf32>
    %8 = vector.shape_cast %7 : vector<64x128xf32> to vector<8x8x128xf32>
    %c0_10 = arith.constant 0 : index
    %c0_11 = arith.constant 0 : index
    %9 = vector.load %arg5[%c0_10, %c0_11] : memref<128x128xbf16, #tpu.memory_space<vmem>>, vector<128x128xbf16>
    %cst_12 = arith.constant dense<0.000000e+00> : vector<8x128xf32>
    %10 = tpu.matmul %4, %9, %cst_12 {dimension_numbers = #tpu.dot_dimension_numbers<[1], [0], [0], [1], [0, 0, 1, 1], [], []>} : vector<8x128xbf16>, vector<128x128xbf16>, vector<8x128xf32> -> vector<8x128xf32>
    %c0_13 = arith.constant 0 : index
    %c0_14 = arith.constant 0 : index
    %11 = vector.load %arg7[%c0_13, %c0_14] : memref<1x128xf32, #tpu.memory_space<vmem>>, vector<1x128xf32>
    %12 = vector.broadcast %11 : vector<1x128xf32> to vector<8x128xf32>
    %13 = arith.addf %10, %12 : vector<8x128xf32>
    %14 = vector.shape_cast %13 : vector<8x128xf32> to vector<8x1x128xf32>
    %15 = vector.broadcast %14 : vector<8x1x128xf32> to vector<8x8x128xf32>
    %16 = arith.addf %8, %15 : vector<8x8x128xf32>
    %17 = math.tanh %16 : vector<8x8x128xf32>
    %c0_15 = arith.constant 0 : index
    %c0_16 = arith.constant 0 : index
    %18 = vector.load %arg8[%c0_15, %c0_16] : memref<1x128xf32, #tpu.memory_space<vmem>>, vector<1x128xf32>
    %19 = vector.shape_cast %18 : vector<1x128xf32> to vector<1x1x128xf32>
    %20 = vector.broadcast %19 : vector<1x1x128xf32> to vector<8x8x128xf32>
    %21 = arith.mulf %17, %20 : vector<8x8x128xf32>
    %cst_17 = arith.constant dense<0.000000e+00> : vector<8x8xf32>
    %22 = vector.multi_reduction <add>, %21, %cst_17 [2] : vector<8x8x128xf32> to vector<8x8xf32>
    %cst_18 = arith.constant dense<0xFF800000> : vector<8xf32>
    %23 = vector.multi_reduction <maximumf>, %22, %cst_18 [1] : vector<8x8xf32> to vector<8xf32>
    %24 = vector.shape_cast %23 : vector<8xf32> to vector<8x1xf32>
    %25 = vector.broadcast %24 : vector<8x1xf32> to vector<8x8xf32>
    %26 = arith.subf %22, %25 : vector<8x8xf32>
    %27 = math.exp %26 : vector<8x8xf32>
    %cst_19 = arith.constant dense<0.000000e+00> : vector<8xf32>
    %28 = vector.multi_reduction <add>, %27, %cst_19 [1] : vector<8x8xf32> to vector<8xf32>
    %29 = vector.shape_cast %28 : vector<8xf32> to vector<8x1xf32>
    %30 = tpu.reciprocal %29 {approx = true} : vector<8x1xf32> -> vector<8x1xf32>
    %31 = vector.broadcast %30 : vector<8x1xf32> to vector<8x8xf32>
    %32 = arith.mulf %27, %31 : vector<8x8xf32>
    %33 = arith.truncf %32 : vector<8x8xf32> to vector<8x8xbf16>
    %34 = vector.shape_cast %33 : vector<8x8xbf16> to vector<8x1x8xbf16>
    "tpu.trace_start"() <{level = 10 : i32, message = "bqs,bse->bqe"}> : () -> ()
    %cst_20 = arith.constant dense<0.000000e+00> : vector<8x1x128xf32>
    %35 = tpu.matmul %34, %2, %cst_20 {dimension_numbers = #tpu.dot_dimension_numbers<[2], [1], [1], [2], [0, 0, 0, 1, 1, 2], [0], [0]>} : vector<8x1x8xbf16>, vector<8x8x128xbf16>, vector<8x1x128xf32> -> vector<8x1x128xf32>
    "tpu.trace_stop"() : () -> ()
    %36 = vector.shape_cast %35 : vector<8x1x128xf32> to vector<8x128xf32>
    %37 = arith.truncf %36 : vector<8x128xf32> to vector<8x128xbf16>
    %38 = tpu.concatenate %3, %37, %4 in 1 : vector<8x128xbf16>, vector<8x128xbf16>, vector<8x128xbf16> -> vector<8x384xbf16>
    %c0_21 = arith.constant 0 : index
    %c0_22 = arith.constant 0 : index
    %39 = vector.load %arg9[%c0_21, %c0_22] : memref<384x512xbf16, #tpu.memory_space<vmem>>, vector<384x512xbf16>
    %cst_23 = arith.constant dense<0.000000e+00> : vector<8x512xf32>
    %40 = tpu.matmul %38, %39, %cst_23 {dimension_numbers = #tpu.dot_dimension_numbers<[1], [0], [0], [1], [0, 0, 1, 1], [], []>} : vector<8x384xbf16>, vector<384x512xbf16>, vector<8x512xf32> -> vector<8x512xf32>
    %c0_24 = arith.constant 0 : index
    %c0_25 = arith.constant 0 : index
    %41 = vector.load %arg10[%c0_24, %c0_25] : memref<1x512xf32, #tpu.memory_space<vmem>>, vector<1x512xf32>
    %42 = vector.broadcast %41 : vector<1x512xf32> to vector<8x512xf32>
    %43 = arith.addf %40, %42 : vector<8x512xf32>
    %44 = vector.extract_strided_slice %43 {offsets = [0, 0], sizes = [8, 128], strides = [1, 1]} : vector<8x512xf32> to vector<8x128xf32>
    %45 = arith.negf %44 : vector<8x128xf32>
    %46 = math.exp %45 : vector<8x128xf32>
    %cst_26 = arith.constant 1.000000e+00 : f32
    %47 = vector.broadcast %cst_26 : f32 to vector<8x128xf32>
    %48 = arith.addf %47, %46 : vector<8x128xf32>
    %49 = arith.divf %47, %48 : vector<8x128xf32>
    %50 = vector.extract_strided_slice %43 {offsets = [0, 128], sizes = [8, 128], strides = [1, 1]} : vector<8x512xf32> to vector<8x128xf32>
    %51 = arith.negf %50 : vector<8x128xf32>
    %52 = math.exp %51 : vector<8x128xf32>
    %cst_27 = arith.constant 1.000000e+00 : f32
    %53 = vector.broadcast %cst_27 : f32 to vector<8x128xf32>
    %54 = arith.addf %53, %52 : vector<8x128xf32>
    %55 = arith.divf %53, %54 : vector<8x128xf32>
    %56 = vector.extract_strided_slice %43 {offsets = [0, 256], sizes = [8, 128], strides = [1, 1]} : vector<8x512xf32> to vector<8x128xf32>
    %57 = math.tanh %56 : vector<8x128xf32>
    %58 = vector.extract_strided_slice %43 {offsets = [0, 384], sizes = [8, 128], strides = [1, 1]} : vector<8x512xf32> to vector<8x128xf32>
    %59 = arith.negf %58 : vector<8x128xf32>
    %60 = math.exp %59 : vector<8x128xf32>
    %cst_28 = arith.constant 1.000000e+00 : f32
    %61 = vector.broadcast %cst_28 : f32 to vector<8x128xf32>
    %62 = arith.addf %61, %60 : vector<8x128xf32>
    %63 = arith.divf %61, %62 : vector<8x128xf32>
    %64 = arith.mulf %55, %1 : vector<8x128xf32>
    %65 = arith.mulf %49, %57 : vector<8x128xf32>
    %66 = arith.addf %64, %65 : vector<8x128xf32>
    %67 = math.tanh %66 : vector<8x128xf32>
    %68 = arith.mulf %63, %67 : vector<8x128xf32>
    %69 = arith.truncf %68 : vector<8x128xf32> to vector<8x128xbf16>
    %70 = tpu.concatenate %69, %37, %3 in 1 : vector<8x128xbf16>, vector<8x128xbf16>, vector<8x128xbf16> -> vector<8x384xbf16>
    %c0_29 = arith.constant 0 : index
    %c0_30 = arith.constant 0 : index
    %71 = vector.load %arg11[%c0_29, %c0_30] : memref<384x128xbf16, #tpu.memory_space<vmem>>, vector<384x128xbf16>
    %cst_31 = arith.constant dense<0.000000e+00> : vector<8x128xf32>
    %72 = tpu.matmul %70, %71, %cst_31 {dimension_numbers = #tpu.dot_dimension_numbers<[1], [0], [0], [1], [0, 0, 1, 1], [], []>} : vector<8x384xbf16>, vector<384x128xbf16>, vector<8x128xf32> -> vector<8x128xf32>
    %c0_32 = arith.constant 0 : index
    %c0_33 = arith.constant 0 : index
    %73 = vector.load %arg12[%c0_32, %c0_33] : memref<1x128xf32, #tpu.memory_space<vmem>>, vector<1x128xf32>
    %74 = vector.broadcast %73 : vector<1x128xf32> to vector<8x128xf32>
    %75 = arith.addf %72, %74 : vector<8x128xf32>
    %c0_34 = arith.constant 0 : index
    %c0_35 = arith.constant 0 : index
    %76 = vector.load %arg13[%c0_34, %c0_35] : memref<8x128xf32, #tpu.memory_space<vmem>>, vector<8x128xf32>
    tpu.vector_store %arg13[%c0_34, %c0_35], %75 {strides = array<i32>} : memref<8x128xf32, #tpu.memory_space<vmem>>, vector<8x128xf32>,
    %c0_36 = arith.constant 0 : index
    %c0_37 = arith.constant 0 : index
    %77 = vector.load %arg14[%c0_36, %c0_37] : memref<8x128xf32, #tpu.memory_space<vmem>>, vector<8x128xf32>
    tpu.vector_store %arg14[%c0_36, %c0_37], %68 {strides = array<i32>} : memref<8x128xf32, #tpu.memory_space<vmem>>, vector<8x128xf32>,
    %c0_38 = arith.constant 0 : index
    %c0_39 = arith.constant 0 : index
    %78 = vector.load %arg15[%c0_38, %c0_39] : memref<8x128xf32, #tpu.memory_space<vmem>>, vector<8x128xf32>
    tpu.vector_store %arg15[%c0_38, %c0_39], %66 {strides = array<i32>} : memref<8x128xf32, #tpu.memory_space<vmem>>, vector<8x128xf32>,
    return
  }
  func.func @transform_0(%arg0: i32) -> (i32, i32) {
    %c0_i32 = arith.constant 0 : i32
    %c0_i32_0 = arith.constant 0 : i32
    return %arg0, %c0_i32 : i32, i32
  }
  func.func @transform_1(%arg0: i32) -> (i32, i32) {
    %c0_i32 = arith.constant 0 : i32
    %c0_i32_0 = arith.constant 0 : i32
    return %arg0, %c0_i32 : i32, i32
  }
  func.func @transform_2(%arg0: i32) -> (i32, i32) {
    %c0_i32 = arith.constant 0 : i32
    %c0_i32_0 = arith.constant 0 : i32
    return %arg0, %c0_i32 : i32, i32
  }
  func.func @transform_3(%arg0: i32) -> (i32, i32, i32) {
    %c0_i32 = arith.constant 0 : i32
    %c0_i32_0 = arith.constant 0 : i32
    %c0_i32_1 = arith.constant 0 : i32
    return %arg0, %c0_i32, %c0_i32_0 : i32, i32, i32
  }
  func.func @transform_4(%arg0: i32) -> (i32, i32) {
    %c0_i32 = arith.constant 0 : i32
    %c0_i32_0 = arith.constant 0 : i32
    %c0_i32_1 = arith.constant 0 : i32
    return %c0_i32, %c0_i32_0 : i32, i32
  }
  func.func @transform_5(%arg0: i32) -> (i32, i32) {
    %c0_i32 = arith.constant 0 : i32
    %c0_i32_0 = arith.constant 0 : i32
    %c0_i32_1 = arith.constant 0 : i32
    return %c0_i32, %c0_i32_0 : i32, i32
  }
  func.func @transform_6(%arg0: i32) -> (i32, i32) {
    %c0_i32 = arith.constant 0 : i32
    %c0_i32_0 = arith.constant 0 : i32
    %c0_i32_1 = arith.constant 0 : i32
    return %c0_i32, %c0_i32_0 : i32, i32
  }
  func.func @transform_7(%arg0: i32) -> (i32, i32) {
    %c0_i32 = arith.constant 0 : i32
    %c0_i32_0 = arith.constant 0 : i32
    %c0_i32_1 = arith.constant 0 : i32
    return %c0_i32, %c0_i32_0 : i32, i32
  }
  func.func @transform_8(%arg0: i32) -> (i32, i32) {
    %c0_i32 = arith.constant 0 : i32
    %c0_i32_0 = arith.constant 0 : i32
    %c0_i32_1 = arith.constant 0 : i32
    return %c0_i32, %c0_i32_0 : i32, i32
  }
  func.func @transform_9(%arg0: i32) -> (i32, i32) {
    %c0_i32 = arith.constant 0 : i32
    %c0_i32_0 = arith.constant 0 : i32
    %c0_i32_1 = arith.constant 0 : i32
    return %c0_i32, %c0_i32_0 : i32, i32
  }
  func.func @transform_10(%arg0: i32) -> (i32, i32) {
    %c0_i32 = arith.constant 0 : i32
    %c0_i32_0 = arith.constant 0 : i32
    %c0_i32_1 = arith.constant 0 : i32
    return %c0_i32, %c0_i32_0 : i32, i32
  }
  func.func @transform_11(%arg0: i32) -> (i32, i32) {
    %c0_i32 = arith.constant 0 : i32
    %c0_i32_0 = arith.constant 0 : i32
    %c0_i32_1 = arith.constant 0 : i32
    return %c0_i32, %c0_i32_0 : i32, i32
  }
  func.func @transform_12(%arg0: i32) -> (i32, i32) {
    %c0_i32 = arith.constant 0 : i32
    %c0_i32_0 = arith.constant 0 : i32
    return %arg0, %c0_i32 : i32, i32
  }
  func.func @transform_13(%arg0: i32) -> (i32, i32) {
    %c0_i32 = arith.constant 0 : i32
    %c0_i32_0 = arith.constant 0 : i32
    return %arg0, %c0_i32 : i32, i32
  }
  func.func @transform_14(%arg0: i32) -> (i32, i32) {
    %c0_i32 = arith.constant 0 : i32
    %c0_i32_0 = arith.constant 0 : i32
    return %arg0, %c0_i32 : i32, i32
  }
}

</mosaic_0001>

<llo_original>
// kernel: tpu_custom_call.1
$region0: #{tpu_custom_call.1}
  #allocation0 [shape = 'u32[]', space=smem, size = 0x4, offset = 0x4, fixed_abs, tag = 'smem constant byte address 0x4 - core index']
  #allocation1 [shape = 'u32[144,128]{1,0:T(1,128)}', space=vmem, size = 0x12000, scoped, tag = 'internal scratch']
  %s0 = inlined_call_operand.hbm [shape: f32[8,128], index: 0, kind: input, shape index: {}]
  %s1 = inlined_call_operand.hbm [shape: f32[8,128], index: 1, kind: input, shape index: {}]
  %s2 = inlined_call_operand.hbm [shape: bf16[8,128], index: 2, kind: input, shape index: {}]
  %s3 = inlined_call_operand.hbm [shape: bf16[8,8,128], index: 3, kind: input, shape index: {}]
  %s4 = inlined_call_operand.hbm [shape: bf16[128,128], index: 4, kind: input, shape index: {}]
  %s5 = inlined_call_operand.hbm [shape: bf16[128,128], index: 5, kind: input, shape index: {}]
  %s6 = inlined_call_operand.vmem [shape: f32[1,128], index: 6, kind: input, shape index: {}]
  %s7 = inlined_call_operand.vmem [shape: f32[1,128], index: 7, kind: input, shape index: {}]
  %s8 = inlined_call_operand.hbm [shape: bf16[384,512], index: 8, kind: input, shape index: {}]
  %s9 = inlined_call_operand.vmem [shape: f32[1,512], index: 9, kind: input, shape index: {}]
  %s10 = inlined_call_operand.hbm [shape: bf16[384,128], index: 10, kind: input, shape index: {}]
  %s11 = inlined_call_operand.vmem [shape: f32[1,128], index: 11, kind: input, shape index: {}]
  %s12 = inlined_call_operand.hbm [shape: f32[8,128], index: 12, kind: output, shape index: {0}]
  %s13 = inlined_call_operand.hbm [shape: f32[8,128], index: 13, kind: output, shape index: {1}]
  %s14 = inlined_call_operand.hbm [shape: f32[8,128], index: 14, kind: output, shape index: {2}]
  %15 = xla_tuple %s12, %s13, %s14
  %s16 = sld [smem:[#allocation0]]
  $region106: #{tpu_custom_call.1} parent=0
    _
  %s18 = ssub.s32 1, %s16
  %s19 = scalar_select 0, %s18, %s16
  $region1: #{tpu_custom_call.1} parent=0
    #allocation2 [shape = 'u8[4096]{0}', space=vmem, size = 0x1000, scoped, tag = 'input window, operand 0, single buffered']
    #allocation3 [shape = 's32[1]{0}', space=sflag, size = 0x4, scoped, tag = 'scoped memory for tpu_custom_call.1']
    #allocation4 [shape = 's32[1]{0}', space=sflag, size = 0x4, scoped, tag = 'scoped memory for tpu_custom_call.1']
    #allocation5 [shape = 'u8[4096]{0}', space=vmem, size = 0x1000, scoped, tag = 'input window, operand 1, single buffered']
    #allocation6 [shape = 's32[1]{0}', space=sflag, size = 0x4, scoped, tag = 'scoped memory for tpu_custom_call.1']
    #allocation7 [shape = 'u8[2048]{0}', space=vmem, size = 0x800, scoped, tag = 'input window, operand 2, single buffered']
    #allocation8 [shape = 'u8[16384]{0}', space=vmem, size = 0x4000, scoped, tag = 'input window, operand 3, single buffered']
    #allocation9 [shape = 's32[1]{0}', space=sflag, size = 0x4, scoped, tag = 'scoped memory for tpu_custom_call.1']
    #allocation10 [shape = 'u8[32768]{0}', space=vmem, size = 0x8000, scoped, tag = 'input window, operand 4, single buffered']
    #allocation11 [shape = 'u8[32768]{0}', space=vmem, size = 0x8000, scoped, tag = 'input window, operand 5, single buffered']
    #allocation12 [shape = 's32[1]{0}', space=sflag, size = 0x4, scoped, tag = 'scoped memory for tpu_custom_call.1']
    #allocation13 [shape = 'u8[393216]{0}', space=vmem, size = 0x60000, scoped, tag = 'input window, operand 8, single buffered']
    #allocation14 [shape = 'u8[98304]{0}', space=vmem, size = 0x18000, scoped, tag = 'input window, operand 10, single buffered']
    #allocation15 [shape = 's32[1]{0}', space=sflag, size = 0x4, scoped, tag = 'scoped memory for tpu_custom_call.1']
    #allocation16 [shape = 'u8[4096]{0}', space=vmem, size = 0x1000, scoped, tag = 'output window, operand 0, single buffered']
    #allocation17 [shape = 'u8[4096]{0}', space=vmem, size = 0x1000, scoped, tag = 'output window, operand 1, single buffered']
    #allocation18 [shape = 's32[1]{0}', space=sflag, size = 0x4, scoped, tag = 'scoped memory for tpu_custom_call.1']
    #allocation19 [shape = 'u8[4096]{0}', space=vmem, size = 0x1000, scoped, tag = 'output window, operand 2, single buffered']
    %20 = vsyncpa [#allocation3], 0
    %21 = vsyncpa [#allocation6], 0
    %22 = vsyncpa [#allocation9], 0
    %23 = vsyncpa [#allocation12], 0
    %24 = vsyncpa [#allocation15], 0
    %25 = vsyncpa [#allocation4], 0
    %26 = vsyncpa [#allocation18], 0
    // Predicated region
    $region2: #{tpu_custom_call.1} parent=1 // pred_check
      _
    $region3: #{tpu_custom_call.1} parent=1 // pred_check_branch
      %28 = sbr.rel (0) target = $region5
    $region4: #{tpu_custom_call.1} parent=1 // pred_region
      %s30 = ssub.s32 128, 128
      %31 = vsyncadd [#allocation3], %s30
      %s33 = sshll.u32 [#allocation2], 4
      %s34 = int_to_ptr.vmem [resolvable:$true] %s33
      %36 = dma.hbm_to_vmem [thread:$0]  %s0, 128, %s34, [#allocation3]
    $region5: #{tpu_custom_call.1} parent=1 // pred_fallthru
      _
    // Predicated region
    $region6: #{tpu_custom_call.1} parent=1 // pred_check
      _
    $region7: #{tpu_custom_call.1} parent=1 // pred_check_branch
      %38 = sbr.rel (0) target = $region9
    $region8: #{tpu_custom_call.1} parent=1 // pred_region
      %s40 = ssub.s32 128, 128
      %41 = vsyncadd [#allocation6], %s40
      %s43 = sshll.u32 [#allocation5], 4
      %s44 = int_to_ptr.vmem [resolvable:$true] %s43
      %46 = dma.hbm_to_vmem [thread:$0]  %s1, 128, %s44, [#allocation6]
    $region9: #{tpu_custom_call.1} parent=1 // pred_fallthru
      _
    // Predicated region
    $region10: #{tpu_custom_call.1} parent=1 // pred_check
      _
    $region11: #{tpu_custom_call.1} parent=1 // pred_check_branch
      %48 = sbr.rel (0) target = $region13
    $region12: #{tpu_custom_call.1} parent=1 // pred_region
      %s50 = ssub.s32 64, 64
      %51 = vsyncadd [#allocation6], %s50
      %s53 = sshll.u32 [#allocation7], 4
      %s54 = int_to_ptr.vmem [resolvable:$true] %s53
      %56 = dma.hbm_to_vmem [thread:$0]  %s2, 64, %s54, [#allocation6]
    $region13: #{tpu_custom_call.1} parent=1 // pred_fallthru
      _
    // Predicated region
    $region14: #{tpu_custom_call.1} parent=1 // pred_check
      _
    $region15: #{tpu_custom_call.1} parent=1 // pred_check_branch
      %58 = sbr.rel (0) target = $region17
    $region16: #{tpu_custom_call.1} parent=1 // pred_region
      %s60 = ssub.s32 512, 512
      %61 = vsyncadd [#allocation9], %s60
      %s62 = sshll.u32 [#allocation8], 4
      %s63 = int_to_ptr.vmem [resolvable:$true] %s62
      %68 = dma.hbm_to_vmem [thread:$0]  %s3, 512, %s63, [#allocation9], 64, 64, 4
    $region17: #{tpu_custom_call.1} parent=1 // pred_fallthru
      _
    // Predicated region
    $region18: #{tpu_custom_call.1} parent=1 // pred_check
      _
    $region19: #{tpu_custom_call.1} parent=1 // pred_check_branch
      %70 = sbr.rel (0) target = $region21
    $region20: #{tpu_custom_call.1} parent=1 // pred_region
      %s72 = ssub.s32 1024, 1024
      %73 = vsyncadd [#allocation9], %s72
      %s74 = sshll.u32 [#allocation10], 4
      %s75 = int_to_ptr.vmem [resolvable:$true] %s74
      %80 = dma.hbm_to_vmem [thread:$0]  %s4, 1024, %s75, [#allocation9], 64, 64, 4
    $region21: #{tpu_custom_call.1} parent=1 // pred_fallthru
      _
    // Predicated region
    $region22: #{tpu_custom_call.1} parent=1 // pred_check
      _
    $region23: #{tpu_custom_call.1} parent=1 // pred_check_branch
      %82 = sbr.rel (0) target = $region25
    $region24: #{tpu_custom_call.1} parent=1 // pred_region
      %s84 = ssub.s32 1024, 1024
      %85 = vsyncadd [#allocation12], %s84
      %s86 = sshll.u32 [#allocation11], 4
      %s87 = int_to_ptr.vmem [resolvable:$true] %s86
      %92 = dma.hbm_to_vmem [thread:$0]  %s5, 1024, %s87, [#allocation12], 64, 64, 4
    $region25: #{tpu_custom_call.1} parent=1 // pred_fallthru
      _
    // Predicated region
    $region26: #{tpu_custom_call.1} parent=1 // pred_check
      _
    $region27: #{tpu_custom_call.1} parent=1 // pred_check_branch
      %94 = sbr.rel (0) target = $region29
    $region28: #{tpu_custom_call.1} parent=1 // pred_region
      _
    $region29: #{tpu_custom_call.1} parent=1 // pred_fallthru
      _
    // Predicated region
    $region30: #{tpu_custom_call.1} parent=1 // pred_check
      _
    $region31: #{tpu_custom_call.1} parent=1 // pred_check_branch
      %96 = sbr.rel (0) target = $region33
    $region32: #{tpu_custom_call.1} parent=1 // pred_region
      _
    $region33: #{tpu_custom_call.1} parent=1 // pred_fallthru
      _
    // Predicated region
    $region34: #{tpu_custom_call.1} parent=1 // pred_check
      _
    $region35: #{tpu_custom_call.1} parent=1 // pred_check_branch
      %98 = sbr.rel (0) target = $region37
    $region36: #{tpu_custom_call.1} parent=1 // pred_region
      %s100 = ssub.s32 12288, 12288
      %101 = vsyncadd [#allocation12], %s100
      %s102 = sshll.u32 [#allocation13], 4
      %s103 = int_to_ptr.vmem [resolvable:$true] %s102
      %108 = dma.hbm_to_vmem [thread:$0]  %s8, 12288, %s103, [#allocation12], 256, 256, 16
    $region37: #{tpu_custom_call.1} parent=1 // pred_fallthru
      _
    // Predicated region
    $region38: #{tpu_custom_call.1} parent=1 // pred_check
      _
    $region39: #{tpu_custom_call.1} parent=1 // pred_check_branch
      %110 = sbr.rel (0) target = $region41
    $region40: #{tpu_custom_call.1} parent=1 // pred_region
      _
    $region41: #{tpu_custom_call.1} parent=1 // pred_fallthru
      _
    // Predicated region
    $region42: #{tpu_custom_call.1} parent=1 // pred_check
      _
    $region43: #{tpu_custom_call.1} parent=1 // pred_check_branch
      %112 = sbr.rel (0) target = $region45
    $region44: #{tpu_custom_call.1} parent=1 // pred_region
      %s114 = ssub.s32 3072, 3072
      %115 = vsyncadd [#allocation15], %s114
      %s116 = sshll.u32 [#allocation14], 4
      %s117 = int_to_ptr.vmem [resolvable:$true] %s116
      %122 = dma.hbm_to_vmem [thread:$0]  %s10, 3072, %s117, [#allocation15], 64, 64, 4
    $region45: #{tpu_custom_call.1} parent=1 // pred_fallthru
      _
    // Predicated region
    $region46: #{tpu_custom_call.1} parent=1 // pred_check
      _
    $region47: #{tpu_custom_call.1} parent=1 // pred_check_branch
      %124 = sbr.rel (0) target = $region49
    $region48: #{tpu_custom_call.1} parent=1 // pred_region
      _
    $region49: #{tpu_custom_call.1} parent=1 // pred_fallthru
      _
    // Predicated region
    $region50: #{tpu_custom_call.1} parent=1 // pred_check
      _
    $region51: #{tpu_custom_call.1} parent=1 // pred_check_branch
      %126 = sbr.rel (0) target = $region53
    $region52: #{tpu_custom_call.1} parent=1 // pred_region
      %127 = dma.done [#allocation3], 128
    $region53: #{tpu_custom_call.1} parent=1 // pred_fallthru
      _
    // Predicated region
    $region54: #{tpu_custom_call.1} parent=1 // pred_check
      _
    $region55: #{tpu_custom_call.1} parent=1 // pred_check_branch
      %129 = sbr.rel (0) target = $region57
    $region56: #{tpu_custom_call.1} parent=1 // pred_region
      %130 = dma.done [#allocation6], 128
    $region57: #{tpu_custom_call.1} parent=1 // pred_fallthru
      _
    // Predicated region
    $region58: #{tpu_custom_call.1} parent=1 // pred_check
      _
    $region59: #{tpu_custom_call.1} parent=1 // pred_check_branch
      %132 = sbr.rel (0) target = $region61
    $region60: #{tpu_custom_call.1} parent=1 // pred_region
      %133 = dma.done [#allocation6], 64
    $region61: #{tpu_custom_call.1} parent=1 // pred_fallthru
      _
    // Predicated region
    $region62: #{tpu_custom_call.1} parent=1 // pred_check
      _
    $region63: #{tpu_custom_call.1} parent=1 // pred_check_branch
      %135 = sbr.rel (0) target = $region65
    $region64: #{tpu_custom_call.1} parent=1 // pred_region
      %136 = dma.done [#allocation9], 512
    $region65: #{tpu_custom_call.1} parent=1 // pred_fallthru
      _
    // Predicated region
    $region66: #{tpu_custom_call.1} parent=1 // pred_check
      _
    $region67: #{tpu_custom_call.1} parent=1 // pred_check_branch
      %138 = sbr.rel (0) target = $region69
    $region68: #{tpu_custom_call.1} parent=1 // pred_region
      %139 = dma.done [#allocation9], 1024
    $region69: #{tpu_custom_call.1} parent=1 // pred_fallthru
      _
    // Predicated region
    $region70: #{tpu_custom_call.1} parent=1 // pred_check
      _
    $region71: #{tpu_custom_call.1} parent=1 // pred_check_branch
      %141 = sbr.rel (0) target = $region73
    $region72: #{tpu_custom_call.1} parent=1 // pred_region
      %142 = dma.done [#allocation12], 1024
    $region73: #{tpu_custom_call.1} parent=1 // pred_fallthru
      _
    // Predicated region
    $region74: #{tpu_custom_call.1} parent=1 // pred_check
      _
    $region75: #{tpu_custom_call.1} parent=1 // pred_check_branch
      %144 = sbr.rel (0) target = $region77
    $region76: #{tpu_custom_call.1} parent=1 // pred_region
      %145 = dma.done [#allocation12], 12288
    $region77: #{tpu_custom_call.1} parent=1 // pred_fallthru
      _
    // Predicated region
    $region78: #{tpu_custom_call.1} parent=1 // pred_check
      _
    $region79: #{tpu_custom_call.1} parent=1 // pred_check_branch
      %147 = sbr.rel (0) target = $region81
    $region80: #{tpu_custom_call.1} parent=1 // pred_region
      %148 = dma.done [#allocation15], 3072
    $region81: #{tpu_custom_call.1} parent=1 // pred_fallthru
      _
    %v150 = vld [vmem:[#allocation2] sm:$0xff]
    %v151 = vld [vmem:[#allocation5] sm:$0xff]
    %v152 = vld [vmem:[#allocation8] sm:$0xf]
    %v153 = vld [vmem:[#allocation8 + $0x4] sm:$0xf]
    %v154 = vld [vmem:[#allocation8 + $0x8] sm:$0xf]
    %v155 = vld [vmem:[#allocation8 + $0xc] sm:$0xf]
    %v156 = vld [vmem:[#allocation8 + $0x10] sm:$0xf]
    %v157 = vld [vmem:[#allocation8 + $0x14] sm:$0xf]
    %v158 = vld [vmem:[#allocation8 + $0x18] sm:$0xf]
    %v159 = vld [vmem:[#allocation8 + $0x1c] sm:$0xf]
    %v160 = vld [vmem:[#allocation7] sm:$0xf]
    %v161 = vpack.c.bf16 %v150, %v150
    %v162 = vld [vmem:[#allocation11] sm:$0xf]
    %v163 = vld [vmem:[#allocation11 + $0x4] sm:$0xf]
    %v164 = vld [vmem:[#allocation11 + $0x8] sm:$0xf]
    %v165 = vld [vmem:[#allocation11 + $0xc] sm:$0xf]
    %v166 = vld [vmem:[#allocation11 + $0x10] sm:$0xf]
    %v167 = vld [vmem:[#allocation11 + $0x14] sm:$0xf]
    %v168 = vld [vmem:[#allocation11 + $0x18] sm:$0xf]
    %v169 = vld [vmem:[#allocation11 + $0x1c] sm:$0xf]
    %v170 = vld [vmem:[#allocation11 + $0x20] sm:$0xf]
    %v171 = vld [vmem:[#allocation11 + $0x24] sm:$0xf]
    %v172 = vld [vmem:[#allocation11 + $0x28] sm:$0xf]
    %v173 = vld [vmem:[#allocation11 + $0x2c] sm:$0xf]
    %v174 = vld [vmem:[#allocation11 + $0x30] sm:$0xf]
    %v175 = vld [vmem:[#allocation11 + $0x34] sm:$0xf]
    %v176 = vld [vmem:[#allocation11 + $0x38] sm:$0xf]
    %v177 = vld [vmem:[#allocation11 + $0x3c] sm:$0xf]
    %v186 = vunpack.c.l.b16 %v152
    %v187 = vunpack.c.l.b16 %v153
    %v188 = vunpack.c.l.b16 %v154
    %v189 = vunpack.c.l.b16 %v155
    %v190 = vunpack.c.l.b16 %v156
    %v191 = vunpack.c.l.b16 %v157
    %v192 = vunpack.c.l.b16 %v158
    %v193 = vunpack.c.l.b16 %v159
    %v194 = vpack.c.b16 %v187, %v186
    %v195 = vpack.c.b16 %v189, %v188
    %v196 = vpack.c.b16 %v191, %v190
    %v197 = vpack.c.b16 %v193, %v192
    %v218 = vunpack.c.l.b16 %v162
    %v219 = vunpack.c.l.b16 %v163
    %v220 = vunpack.c.l.b16 %v164
    %v221 = vunpack.c.l.b16 %v165
    %v222 = vunpack.c.l.b16 %v166
    %v223 = vunpack.c.l.b16 %v167
    %v224 = vunpack.c.l.b16 %v168
    %v225 = vunpack.c.l.b16 %v169
    %v226 = vunpack.c.l.b16 %v170
    %v227 = vunpack.c.l.b16 %v171
    %v228 = vunpack.c.l.b16 %v172
    %v229 = vunpack.c.l.b16 %v173
    %v230 = vunpack.c.l.b16 %v174
    %v231 = vunpack.c.l.b16 %v175
    %v232 = vunpack.c.l.b16 %v176
    %v233 = vunpack.c.l.b16 %v177
    %v234 = vpack.c.b16 %v219, %v218
    %v235 = vpack.c.b16 %v221, %v220
    %v236 = vpack.c.b16 %v223, %v222
    %v237 = vpack.c.b16 %v225, %v224
    %v238 = vpack.c.b16 %v227, %v226
    %v239 = vpack.c.b16 %v229, %v228
    %v240 = vpack.c.b16 %v231, %v230
    %v241 = vpack.c.b16 %v233, %v232
    %250 = vmatprep.subr.bf16.mxu0 0
    %251 = vmatpush1.bf16.msra.mxu0 %v241
    %252 = vmatprep.subr.bf16.mxu0 0
    %253 = vmatpush1.bf16.msra.mxu0 %v240
    %254 = vmatprep.subr.bf16.mxu0 0
    %255 = vmatpush1.bf16.msra.mxu0 %v239
    %256 = vmatprep.subr.bf16.mxu0 0
    %257 = vmatpush1.bf16.msra.mxu0 %v238
    %258 = vmatprep.subr.bf16.mxu0 0
    %259 = vmatpush1.bf16.msra.mxu0 %v237
    %260 = vmatprep.subr.bf16.mxu0 0
    %261 = vmatpush1.bf16.msra.mxu0 %v236
    %262 = vmatprep.subr.bf16.mxu0 0
    %263 = vmatpush1.bf16.msra.mxu0 %v235
    %264 = vmatprep.subr.bf16.mxu0 0
    %265 = vmatpush1.bf16.msra.mxu0 %v234
    %266 = vmatprep.subr.bf16.mxu0 0
    %267 = vmatpush2.bf16.msra.mxu0 0
    %268 = vmatprep.subr.bf16.mxu0 0
    %269 = vmatpush2.bf16.msra.mxu0 0
    %270 = vmatprep.subr.bf16.mxu0 0
    %271 = vmatpush2.bf16.msra.mxu0 0
    %272 = vmatprep.subr.bf16.mxu0 0
    %273 = vmatpush2.bf16.msra.mxu0 0
    %274 = vmatprep.subr.bf16.mxu0 0
    %275 = vmatpush2.bf16.msra.mxu0 0
    %276 = vmatprep.subr.bf16.mxu0 0
    %277 = vmatpush2.bf16.msra.mxu0 0
    %278 = vmatprep.subr.bf16.mxu0 0
    %279 = vmatpush2.bf16.msra.mxu0 0
    %280 = vmatprep.subr.bf16.mxu0 0
    %281 = vmatpush2.bf16.msra.mxu0 0
    %282 = vmatprep.mubr.bf16.mxu0 0
    %283 = vmatmul.mubr.bf16.gmra.mxu0 %v194
    %v284 = vpop.f32.mrf.mxu0
    %v285 = vadd.f32 0.0, %v284
    %v286 = vpop.f32.mrf.mxu0
    %v287 = vpop.f32.mrf.mxu0
    %v288 = vadd.f32 0.0, %v287
    %v289 = vpop.f32.mrf.mxu0
    %290 = vmatprep.mubr.bf16.mxu0 0
    %291 = vmatmul.mubr.bf16.gmra.mxu0 %v195
    %v292 = vpop.f32.mrf.mxu0
    %v293 = vadd.f32 0.0, %v292
    %v294 = vpop.f32.mrf.mxu0
    %v295 = vpop.f32.mrf.mxu0
    %v296 = vadd.f32 0.0, %v295
    %v297 = vpop.f32.mrf.mxu0
    %298 = vmatprep.mubr.bf16.mxu0 0
    %299 = vmatmul.mubr.bf16.gmra.mxu0 %v196
    %v300 = vpop.f32.mrf.mxu0
    %v301 = vadd.f32 0.0, %v300
    %v302 = vpop.f32.mrf.mxu0
    %v303 = vpop.f32.mrf.mxu0
    %v304 = vadd.f32 0.0, %v303
    %v305 = vpop.f32.mrf.mxu0
    %306 = vmatprep.mubr.bf16.mxu0 0
    %307 = vmatmul.mubr.bf16.gmra.mxu0 %v197
    %v308 = vpop.f32.mrf.mxu0
    %v309 = vadd.f32 0.0, %v308
    %v310 = vpop.f32.mrf.mxu0
    %v311 = vpop.f32.mrf.mxu0
    %v312 = vadd.f32 0.0, %v311
    %v313 = vpop.f32.mrf.mxu0
    %314 = vdwg.mxu0
    %v315 = vld [vmem:[#allocation10] sm:$0xf]
    %v316 = vld [vmem:[#allocation10 + $0x4] sm:$0xf]
    %v317 = vld [vmem:[#allocation10 + $0x8] sm:$0xf]
    %v318 = vld [vmem:[#allocation10 + $0xc] sm:$0xf]
    %v319 = vld [vmem:[#allocation10 + $0x10] sm:$0xf]
    %v320 = vld [vmem:[#allocation10 + $0x14] sm:$0xf]
    %v321 = vld [vmem:[#allocation10 + $0x18] sm:$0xf]
    %v322 = vld [vmem:[#allocation10 + $0x1c] sm:$0xf]
    %v323 = vld [vmem:[#allocation10 + $0x20] sm:$0xf]
    %v324 = vld [vmem:[#allocation10 + $0x24] sm:$0xf]
    %v325 = vld [vmem:[#allocation10 + $0x28] sm:$0xf]
    %v326 = vld [vmem:[#allocation10 + $0x2c] sm:$0xf]
    %v327 = vld [vmem:[#allocation10 + $0x30] sm:$0xf]
    %v328 = vld [vmem:[#allocation10 + $0x34] sm:$0xf]
    %v329 = vld [vmem:[#allocation10 + $0x38] sm:$0xf]
    %v330 = vld [vmem:[#allocation10 + $0x3c] sm:$0xf]
    %v331 = vld [vmem:[%s6] sm:$0x1]
    %v333 = vlaneseq
    %v334 = vshrl.u32 %v333, 7
    %v335 = vsub.s32 0, %v334
    %v336 = vrot.slane %v331, %v335
    %v354 = vunpack.c.l.b16 %v315
    %v355 = vunpack.c.l.b16 %v316
    %v356 = vunpack.c.l.b16 %v317
    %v357 = vunpack.c.l.b16 %v318
    %v358 = vunpack.c.l.b16 %v319
    %v359 = vunpack.c.l.b16 %v320
    %v360 = vunpack.c.l.b16 %v321
    %v361 = vunpack.c.l.b16 %v322
    %v362 = vunpack.c.l.b16 %v323
    %v363 = vunpack.c.l.b16 %v324
    %v364 = vunpack.c.l.b16 %v325
    %v365 = vunpack.c.l.b16 %v326
    %v366 = vunpack.c.l.b16 %v327
    %v367 = vunpack.c.l.b16 %v328
    %v368 = vunpack.c.l.b16 %v329
    %v369 = vunpack.c.l.b16 %v330
    %v370 = vpack.c.b16 %v355, %v354
    %v371 = vpack.c.b16 %v357, %v356
    %v372 = vpack.c.b16 %v359, %v358
    %v373 = vpack.c.b16 %v361, %v360
    %v374 = vpack.c.b16 %v363, %v362
    %v375 = vpack.c.b16 %v365, %v364
    %v376 = vpack.c.b16 %v367, %v366
    %v377 = vpack.c.b16 %v369, %v368
    %386 = vmatprep.subr.bf16.mxu0 0
    %387 = vmatpush1.bf16.msra.mxu0 %v377
    %388 = vmatprep.subr.bf16.mxu0 0
    %389 = vmatpush1.bf16.msra.mxu0 %v376
    %390 = vmatprep.subr.bf16.mxu0 0
    %391 = vmatpush1.bf16.msra.mxu0 %v375
    %392 = vmatprep.subr.bf16.mxu0 0
    %393 = vmatpush1.bf16.msra.mxu0 %v374
    %394 = vmatprep.subr.bf16.mxu0 0
    %395 = vmatpush1.bf16.msra.mxu0 %v373
    %396 = vmatprep.subr.bf16.mxu0 0
    %397 = vmatpush1.bf16.msra.mxu0 %v372
    %398 = vmatprep.subr.bf16.mxu0 0
    %399 = vmatpush1.bf16.msra.mxu0 %v371
    %400 = vmatprep.subr.bf16.mxu0 0
    %401 = vmatpush1.bf16.msra.mxu0 %v370
    %402 = vmatprep.subr.bf16.mxu0 0
    %403 = vmatpush2.bf16.msra.mxu0 0
    %404 = vmatprep.subr.bf16.mxu0 0
    %405 = vmatpush2.bf16.msra.mxu0 0
    %406 = vmatprep.subr.bf16.mxu0 0
    %407 = vmatpush2.bf16.msra.mxu0 0
    %408 = vmatprep.subr.bf16.mxu0 0
    %409 = vmatpush2.bf16.msra.mxu0 0
    %410 = vmatprep.subr.bf16.mxu0 0
    %411 = vmatpush2.bf16.msra.mxu0 0
    %412 = vmatprep.subr.bf16.mxu0 0
    %413 = vmatpush2.bf16.msra.mxu0 0
    %414 = vmatprep.subr.bf16.mxu0 0
    %415 = vmatpush2.bf16.msra.mxu0 0
    %416 = vmatprep.subr.bf16.mxu0 0
    %417 = vmatpush2.bf16.msra.mxu0 0
    %418 = vmatprep.mubr.bf16.mxu0 0
    %419 = vmatmul.mubr.bf16.gmra.mxu0 %v161
    %v420 = vpop.f32.mrf.mxu0
    %v421 = vadd.f32 %v336, %v420
    %v422 = vpop.f32.mrf.mxu0
    %v423 = vpop.f32.mrf.mxu0
    %v424 = vpop.f32.mrf.mxu0
    %425 = vdwg.mxu0
    %v427 = vcombine.high %v421, %v421
    %v429 = vunpack.c.l.s4 1966171168
    %v430 = vunpack.c.0.s8 %v429
    %v431 = vlaneseq
    %v432 = vshrl.u32 %v431, 7
    %v433 = vsub.s32 %v430, %v432
    %v434 = vrot.slane %v421, %v433
    %v436 = vunpack.c.l.s4 1966171168
    %v437 = vunpack.c.0.s8 %v436
    %v438 = vlaneseq
    %v439 = vshrl.u32 %v438, 7
    %v440 = vsub.s32 %v437, %v439
    %v441 = vrot.slane %v427, %v440
    %v442 = vcombine.high %v434, %v434
    %v443 = vcombine.high %v441, %v441
    %v445 = vunpack.c.l.s4 1966171168
    %v446 = vunpack.c.0.s8 %v445
    %v447 = vlaneseq
    %v448 = vshrl.u32 %v447, 7
    %v449 = vsub.s32 %v446, %v448
    %v450 = vrot.slane %v434, %v449
    %v452 = vunpack.c.l.s4 1966171168
    %v453 = vunpack.c.0.s8 %v452
    %v454 = vlaneseq
    %v455 = vshrl.u32 %v454, 7
    %v456 = vsub.s32 %v453, %v455
    %v457 = vrot.slane %v441, %v456
    %v459 = vunpack.c.l.s4 1966171168
    %v460 = vunpack.c.0.s8 %v459
    %v461 = vlaneseq
    %v462 = vshrl.u32 %v461, 7
    %v463 = vsub.s32 %v460, %v462
    %v464 = vrot.slane %v442, %v463
    %v466 = vunpack.c.l.s4 1966171168
    %v467 = vunpack.c.0.s8 %v466
    %v468 = vlaneseq
    %v469 = vshrl.u32 %v468, 7
    %v470 = vsub.s32 %v467, %v469
    %v471 = vrot.slane %v443, %v470
    %v472 = vcombine.high %v450, %v450
    %v473 = vcombine.high %v457, %v457
    %v474 = vcombine.high %v464, %v464
    %v475 = vcombine.high %v471, %v471
    %v476 = vlaneseq
    %v477 = vshrl.u32 %v476, 7
    %v478 = vsub.s32 0, %v477
    %v479 = vrot.slane %v450, %v478
    %v480 = vlaneseq
    %v481 = vshrl.u32 %v480, 7
    %v482 = vsub.s32 0, %v481
    %v483 = vrot.slane %v464, %v482
    %v484 = vlaneseq
    %v485 = vshrl.u32 %v484, 7
    %v486 = vsub.s32 0, %v485
    %v487 = vrot.slane %v472, %v486
    %v488 = vlaneseq
    %v489 = vshrl.u32 %v488, 7
    %v490 = vsub.s32 0, %v489
    %v491 = vrot.slane %v474, %v490
    %v492 = vlaneseq
    %v493 = vshrl.u32 %v492, 7
    %v494 = vsub.s32 0, %v493
    %v495 = vrot.slane %v457, %v494
    %v496 = vlaneseq
    %v497 = vshrl.u32 %v496, 7
    %v498 = vsub.s32 0, %v497
    %v499 = vrot.slane %v471, %v498
    %v500 = vlaneseq
    %v501 = vshrl.u32 %v500, 7
    %v502 = vsub.s32 0, %v501
    %v503 = vrot.slane %v473, %v502
    %v504 = vlaneseq
    %v505 = vshrl.u32 %v504, 7
    %v506 = vsub.s32 0, %v505
    %v507 = vrot.slane %v475, %v506
    %v516 = vadd.f32 %v285, %v479
    %v517 = vadd.f32 %v288, %v483
    %v518 = vadd.f32 %v293, %v487
    %v519 = vadd.f32 %v296, %v491
    %v520 = vadd.f32 %v301, %v495
    %v521 = vadd.f32 %v304, %v499
    %v522 = vadd.f32 %v309, %v503
    %v523 = vadd.f32 %v312, %v507
    %v524 = vtanh.pop %v516
    %v525 = vtanh.pop %v517
    %v526 = vtanh.pop %v518
    %v527 = vtanh.pop %v519
    %v528 = vtanh.pop %v520
    %v529 = vtanh.pop %v521
    %v530 = vtanh.pop %v522
    %v531 = vtanh.pop %v523
    %v532 = vld [vmem:[%s7] sm:$0x1]
    %v534 = vlaneseq
    %v535 = vshrl.u32 %v534, 7
    %v536 = vsub.s32 0, %v535
    %v537 = vrot.slane %v532, %v536
    %v539 = vmul.f32 %v524, %v537
    %v540 = vmul.f32 %v525, %v537
    %v541 = vmul.f32 %v526, %v537
    %v542 = vmul.f32 %v527, %v537
    %v543 = vmul.f32 %v528, %v537
    %v544 = vmul.f32 %v529, %v537
    %v545 = vmul.f32 %v530, %v537
    %v546 = vmul.f32 %v531, %v537
    %547 = vadd.xlane.f32.xlu0 %v539
    %v548 = vpop.xlane.xlu0 %547
    %549 = vadd.xlane.f32.xlu0 %v540
    %v550 = vpop.xlane.xlu0 %549
    %551 = vadd.xlane.f32.xlu0 %v541
    %v552 = vpop.xlane.xlu0 %551
    %553 = vadd.xlane.f32.xlu0 %v542
    %v554 = vpop.xlane.xlu0 %553
    %555 = vadd.xlane.f32.xlu0 %v543
    %v556 = vpop.xlane.xlu0 %555
    %557 = vadd.xlane.f32.xlu0 %v544
    %v558 = vpop.xlane.xlu0 %557
    %559 = vadd.xlane.f32.xlu0 %v545
    %v560 = vpop.xlane.xlu0 %559
    %561 = vadd.xlane.f32.xlu0 %v546
    %v562 = vpop.xlane.xlu0 %561
    %v571 = vlaneseq
    %v572 = vand.u32 %v571, 127
    %v573 = vlaneseq
    %v574 = vshrl.u32 %v573, 7
    %v575 = vsub.s32 %v572, %v574
    %v576 = vrot.slane %v548, %v575
    %v577 = vlaneseq
    %v578 = vshrl.u32 %v577, 7
    %v579 = vsub.s32 %v572, %v578
    %v580 = vrot.slane %v550, %v579
    %v581 = vlaneseq
    %v582 = vshrl.u32 %v581, 7
    %v583 = vsub.s32 %v572, %v582
    %v584 = vrot.slane %v552, %v583
    %v585 = vlaneseq
    %v586 = vshrl.u32 %v585, 7
    %v587 = vsub.s32 %v572, %v586
    %v588 = vrot.slane %v554, %v587
    %v589 = vlaneseq
    %v590 = vshrl.u32 %v589, 7
    %v591 = vsub.s32 %v572, %v590
    %v592 = vrot.slane %v556, %v591
    %v593 = vlaneseq
    %v594 = vshrl.u32 %v593, 7
    %v595 = vsub.s32 %v572, %v594
    %v596 = vrot.slane %v558, %v595
    %v597 = vlaneseq
    %v598 = vshrl.u32 %v597, 7
    %v599 = vsub.s32 %v572, %v598
    %v600 = vrot.slane %v560, %v599
    %v601 = vlaneseq
    %v602 = vshrl.u32 %v601, 7
    %v603 = vsub.s32 %v572, %v602
    %v604 = vrot.slane %v562, %v603
    %vm605 = vcmask 1041409
    %v606 = vsel %vm605, %v580, %v576
    %vm607 = vcmask 1042434
    %v608 = vsel %vm607, %v584, %v606
    %vm609 = vcmask 1043459
    %v610 = vsel %vm609, %v588, %v608
    %vm611 = vcmask 1044484
    %v612 = vsel %vm611, %v592, %v610
    %vm613 = vcmask 1045509
    %v614 = vsel %vm613, %v596, %v612
    %vm615 = vcmask 1046534
    %v616 = vsel %vm615, %v600, %v614
    %vm617 = vcmask 1047559
    %v618 = vsel %vm617, %v604, %v616
    %vm620 = vcmask 64512
    %v621 = vsel %vm620, %v618, -inf
    %622 = vmax.xlane.f32.xlu0 %v621
    %v623 = vpop.xlane.xlu0 %622
    %v625 = vlaneseq
    %v626 = vshrl.u32 %v625, 7
    %v627 = vsub.s32 0, %v626
    %v628 = vrot.slane %v623, %v627
    %v629 = vlaneseq
    %v630 = vshrl.u32 %v629, 7
    %v631 = vsub.s32 1, %v630
    %v632 = vrot.slane %v623, %v631
    %v633 = vlaneseq
    %v634 = vshrl.u32 %v633, 7
    %v635 = vsub.s32 2, %v634
    %v636 = vrot.slane %v623, %v635
    %v637 = vlaneseq
    %v638 = vshrl.u32 %v637, 7
    %v639 = vsub.s32 3, %v638
    %v640 = vrot.slane %v623, %v639
    %v641 = vlaneseq
    %v642 = vshrl.u32 %v641, 7
    %v643 = vsub.s32 4, %v642
    %v644 = vrot.slane %v623, %v643
    %v645 = vlaneseq
    %v646 = vshrl.u32 %v645, 7
    %v647 = vsub.s32 5, %v646
    %v648 = vrot.slane %v623, %v647
    %v649 = vlaneseq
    %v650 = vshrl.u32 %v649, 7
    %v651 = vsub.s32 6, %v650
    %v652 = vrot.slane %v623, %v651
    %v653 = vlaneseq
    %v654 = vshrl.u32 %v653, 7
    %v655 = vsub.s32 7, %v654
    %v656 = vrot.slane %v623, %v655
    %v665 = vsub.f32 %v548, %v628
    %v666 = vsub.f32 %v550, %v632
    %v667 = vsub.f32 %v552, %v636
    %v668 = vsub.f32 %v554, %v640
    %v669 = vsub.f32 %v556, %v644
    %v670 = vsub.f32 %v558, %v648
    %v671 = vsub.f32 %v560, %v652
    %v672 = vsub.f32 %v562, %v656
    %v673 = vmul.f32 %v665, 1.442695
    %v674 = vpow.pop %v673
    %v675 = vmul.f32 %v666, 1.442695
    %v676 = vpow.pop %v675
    %v677 = vmul.f32 %v667, 1.442695
    %v678 = vpow.pop %v677
    %v679 = vmul.f32 %v668, 1.442695
    %v680 = vpow.pop %v679
    %v681 = vmul.f32 %v669, 1.442695
    %v682 = vpow.pop %v681
    %v683 = vmul.f32 %v670, 1.442695
    %v684 = vpow.pop %v683
    %v685 = vmul.f32 %v671, 1.442695
    %v686 = vpow.pop %v685
    %v687 = vmul.f32 %v672, 1.442695
    %v688 = vpow.pop %v687
    %697 = vset.pattern.permute.xlu0 0
    %698 = vperm.xlu0 %697, %v674
    %v699 = vpop.permute.xlu0 %698
    %700 = vset.pattern.permute.xlu0 0
    %701 = vperm.xlu0 %700, %v676
    %v702 = vpop.permute.xlu0 %701
    %703 = vset.pattern.permute.xlu0 0
    %704 = vperm.xlu0 %703, %v678
    %v705 = vpop.permute.xlu0 %704
    %706 = vset.pattern.permute.xlu0 0
    %707 = vperm.xlu0 %706, %v680
    %v708 = vpop.permute.xlu0 %707
    %709 = vset.pattern.permute.xlu0 0
    %710 = vperm.xlu0 %709, %v682
    %v711 = vpop.permute.xlu0 %710
    %712 = vset.pattern.permute.xlu0 0
    %713 = vperm.xlu0 %712, %v684
    %v714 = vpop.permute.xlu0 %713
    %715 = vset.pattern.permute.xlu0 0
    %716 = vperm.xlu0 %715, %v686
    %v717 = vpop.permute.xlu0 %716
    %718 = vset.pattern.permute.xlu0 0
    %719 = vperm.xlu0 %718, %v688
    %v720 = vpop.permute.xlu0 %719
    %v721 = vlaneseq
    %v722 = vshrl.u32 %v721, 7
    %v723 = vsub.s32 %v572, %v722
    %v724 = vrot.slane %v699, %v723
    %v725 = vlaneseq
    %v726 = vshrl.u32 %v725, 7
    %v727 = vsub.s32 %v572, %v726
    %v728 = vrot.slane %v702, %v727
    %v729 = vlaneseq
    %v730 = vshrl.u32 %v729, 7
    %v731 = vsub.s32 %v572, %v730
    %v732 = vrot.slane %v705, %v731
    %v733 = vlaneseq
    %v734 = vshrl.u32 %v733, 7
    %v735 = vsub.s32 %v572, %v734
    %v736 = vrot.slane %v708, %v735
    %v737 = vlaneseq
    %v738 = vshrl.u32 %v737, 7
    %v739 = vsub.s32 %v572, %v738
    %v740 = vrot.slane %v711, %v739
    %v741 = vlaneseq
    %v742 = vshrl.u32 %v741, 7
    %v743 = vsub.s32 %v572, %v742
    %v744 = vrot.slane %v714, %v743
    %v745 = vlaneseq
    %v746 = vshrl.u32 %v745, 7
    %v747 = vsub.s32 %v572, %v746
    %v748 = vrot.slane %v717, %v747
    %v749 = vlaneseq
    %v750 = vshrl.u32 %v749, 7
    %v751 = vsub.s32 %v572, %v750
    %v752 = vrot.slane %v720, %v751
    %v753 = vsel %vm605, %v728, %v724
    %v754 = vsel %vm607, %v732, %v753
    %v755 = vsel %vm609, %v736, %v754
    %v756 = vsel %vm611, %v740, %v755
    %v757 = vsel %vm613, %v744, %v756
    %v758 = vsel %vm615, %v748, %v757
    %v759 = vsel %vm617, %v752, %v758
    %v761 = vsel %vm620, %v759, 0.0
    %762 = vadd.xlane.f32.xlu0 %v761
    %v763 = vpop.xlane.xlu0 %762
    %v764 = vrcp.pop %v763
    %v766 = vlaneseq
    %v767 = vshrl.u32 %v766, 7
    %v768 = vsub.s32 0, %v767
    %v769 = vrot.slane %v764, %v768
    %v770 = vlaneseq
    %v771 = vshrl.u32 %v770, 7
    %v772 = vsub.s32 1, %v771
    %v773 = vrot.slane %v764, %v772
    %v774 = vlaneseq
    %v775 = vshrl.u32 %v774, 7
    %v776 = vsub.s32 2, %v775
    %v777 = vrot.slane %v764, %v776
    %v778 = vlaneseq
    %v779 = vshrl.u32 %v778, 7
    %v780 = vsub.s32 3, %v779
    %v781 = vrot.slane %v764, %v780
    %v782 = vlaneseq
    %v783 = vshrl.u32 %v782, 7
    %v784 = vsub.s32 4, %v783
    %v785 = vrot.slane %v764, %v784
    %v786 = vlaneseq
    %v787 = vshrl.u32 %v786, 7
    %v788 = vsub.s32 5, %v787
    %v789 = vrot.slane %v764, %v788
    %v790 = vlaneseq
    %v791 = vshrl.u32 %v790, 7
    %v792 = vsub.s32 6, %v791
    %v793 = vrot.slane %v764, %v792
    %v794 = vlaneseq
    %v795 = vshrl.u32 %v794, 7
    %v796 = vsub.s32 7, %v795
    %v797 = vrot.slane %v764, %v796
    %v806 = vmul.f32 %v674, %v769
    %v807 = vmul.f32 %v676, %v773
    %v808 = vmul.f32 %v678, %v777
    %v809 = vmul.f32 %v680, %v781
    %v810 = vmul.f32 %v682, %v785
    %v811 = vmul.f32 %v684, %v789
    %v812 = vmul.f32 %v686, %v793
    %v813 = vmul.f32 %v688, %v797
    %v814 = vpack.c.bf16 %v806, %v806
    %v815 = vpack.c.bf16 %v807, %v807
    %v816 = vpack.c.bf16 %v808, %v808
    %v817 = vpack.c.bf16 %v809, %v809
    %v818 = vpack.c.bf16 %v810, %v810
    %v819 = vpack.c.bf16 %v811, %v811
    %v820 = vpack.c.bf16 %v812, %v812
    %v821 = vpack.c.bf16 %v813, %v813
    %v823 = vunpack.c.l.b16 %v814
    %824 = vset.pattern.permute.xlu0 0
    %825 = vperm.xlu0 %824, %v823
    %v826 = vpop.permute.xlu0 %825
    %v827 = vlaneseq
    %v828 = vshrl.u32 %v827, 7
    %v829 = vsub.s32 %v572, %v828
    %v830 = vrot.slane %v826, %v829
    %v831 = vpack.c.b16 %v830, %v830
    %v833 = vsel %vm620, %v831, 0
    %vm835 = vcmask 1043456
    %v837 = vsel %vm835, %v152, 0
    %839 = vmatprep.subr.bf16.mxu0 0
    %840 = vmatpush1.bf16.msra.mxu0 0
    %841 = vmatprep.subr.bf16.mxu0 0
    %842 = vmatpush1.bf16.msra.mxu0 0
    %843 = vmatprep.subr.bf16.mxu0 0
    %844 = vmatpush1.bf16.msra.mxu0 0
    %845 = vmatprep.subr.bf16.mxu0 0
    %846 = vmatpush1.bf16.msra.mxu0 0
    %847 = vmatprep.subr.bf16.mxu0 0
    %848 = vmatpush1.bf16.msra.mxu0 0
    %849 = vmatprep.subr.bf16.mxu0 0
    %850 = vmatpush1.bf16.msra.mxu0 0
    %851 = vmatprep.subr.bf16.mxu0 0
    %852 = vmatpush1.bf16.msra.mxu0 0
    %853 = vmatprep.subr.bf16.mxu0 0
    %854 = vmatpush1.bf16.msra.mxu0 %v837
    %855 = vmatprep.subr.bf16.mxu0 0
    %856 = vmatpush2.bf16.msra.mxu0 0
    %857 = vmatprep.subr.bf16.mxu0 0
    %858 = vmatpush2.bf16.msra.mxu0 0
    %859 = vmatprep.subr.bf16.mxu0 0
    %860 = vmatpush2.bf16.msra.mxu0 0
    %861 = vmatprep.subr.bf16.mxu0 0
    %862 = vmatpush2.bf16.msra.mxu0 0
    %863 = vmatprep.subr.bf16.mxu0 0
    %864 = vmatpush2.bf16.msra.mxu0 0
    %865 = vmatprep.subr.bf16.mxu0 0
    %866 = vmatpush2.bf16.msra.mxu0 0
    %867 = vmatprep.subr.bf16.mxu0 0
    %868 = vmatpush2.bf16.msra.mxu0 0
    %869 = vmatprep.subr.bf16.mxu0 0
    %870 = vmatpush2.bf16.msra.mxu0 0
    %871 = vmatprep.mubr.bf16.mxu0 0
    %872 = vmatmul.mubr.bf16.gmra.mxu0 %v833
    %v873 = vpop.f32.mrf.mxu0
    %v874 = vadd.f32 0.0, %v873
    %v875 = vpop.f32.mrf.mxu0
    %v876 = vpop.f32.mrf.mxu0
    %v877 = vpop.f32.mrf.mxu0
    %878 = vdwg.mxu0
    %v880 = vunpack.c.l.b16 %v815
    %881 = vset.pattern.permute.xlu0 0
    %882 = vperm.xlu0 %881, %v880
    %v883 = vpop.permute.xlu0 %882
    %v884 = vlaneseq
    %v885 = vshrl.u32 %v884, 7
    %v886 = vsub.s32 %v572, %v885
    %v887 = vrot.slane %v883, %v886
    %v888 = vpack.c.b16 %v887, %v887
    %v890 = vsel %vm620, %v888, 0
    %v893 = vsel %vm835, %v153, 0
    %895 = vmatprep.subr.bf16.mxu0 0
    %896 = vmatpush1.bf16.msra.mxu0 0
    %897 = vmatprep.subr.bf16.mxu0 0
    %898 = vmatpush1.bf16.msra.mxu0 0
    %899 = vmatprep.subr.bf16.mxu0 0
    %900 = vmatpush1.bf16.msra.mxu0 0
    %901 = vmatprep.subr.bf16.mxu0 0
    %902 = vmatpush1.bf16.msra.mxu0 0
    %903 = vmatprep.subr.bf16.mxu0 0
    %904 = vmatpush1.bf16.msra.mxu0 0
    %905 = vmatprep.subr.bf16.mxu0 0
    %906 = vmatpush1.bf16.msra.mxu0 0
    %907 = vmatprep.subr.bf16.mxu0 0
    %908 = vmatpush1.bf16.msra.mxu0 0
    %909 = vmatprep.subr.bf16.mxu0 0
    %910 = vmatpush1.bf16.msra.mxu0 %v893
    %911 = vmatprep.subr.bf16.mxu0 0
    %912 = vmatpush2.bf16.msra.mxu0 0
    %913 = vmatprep.subr.bf16.mxu0 0
    %914 = vmatpush2.bf16.msra.mxu0 0
    %915 = vmatprep.subr.bf16.mxu0 0
    %916 = vmatpush2.bf16.msra.mxu0 0
    %917 = vmatprep.subr.bf16.mxu0 0
    %918 = vmatpush2.bf16.msra.mxu0 0
    %919 = vmatprep.subr.bf16.mxu0 0
    %920 = vmatpush2.bf16.msra.mxu0 0
    %921 = vmatprep.subr.bf16.mxu0 0
    %922 = vmatpush2.bf16.msra.mxu0 0
    %923 = vmatprep.subr.bf16.mxu0 0
    %924 = vmatpush2.bf16.msra.mxu0 0
    %925 = vmatprep.subr.bf16.mxu0 0
    %926 = vmatpush2.bf16.msra.mxu0 0
    %927 = vmatprep.mubr.bf16.mxu0 0
    %928 = vmatmul.mubr.bf16.gmra.mxu0 %v890
    %v929 = vpop.f32.mrf.mxu0
    %v930 = vadd.f32 0.0, %v929
    %v931 = vpop.f32.mrf.mxu0
    %v932 = vpop.f32.mrf.mxu0
    %v933 = vpop.f32.mrf.mxu0
    %934 = vdwg.mxu0
    %v936 = vunpack.c.l.b16 %v816
    %937 = vset.pattern.permute.xlu0 0
    %938 = vperm.xlu0 %937, %v936
    %v939 = vpop.permute.xlu0 %938
    %v940 = vlaneseq
    %v941 = vshrl.u32 %v940, 7
    %v942 = vsub.s32 %v572, %v941
    %v943 = vrot.slane %v939, %v942
    %v944 = vpack.c.b16 %v943, %v943
    %v946 = vsel %vm620, %v944, 0
    %v949 = vsel %vm835, %v154, 0
    %951 = vmatprep.subr.bf16.mxu0 0
    %952 = vmatpush1.bf16.msra.mxu0 0
    %953 = vmatprep.subr.bf16.mxu0 0
    %954 = vmatpush1.bf16.msra.mxu0 0
    %955 = vmatprep.subr.bf16.mxu0 0
    %956 = vmatpush1.bf16.msra.mxu0 0
    %957 = vmatprep.subr.bf16.mxu0 0
    %958 = vmatpush1.bf16.msra.mxu0 0
    %959 = vmatprep.subr.bf16.mxu0 0
    %960 = vmatpush1.bf16.msra.mxu0 0
    %961 = vmatprep.subr.bf16.mxu0 0
    %962 = vmatpush1.bf16.msra.mxu0 0
    %963 = vmatprep.subr.bf16.mxu0 0
    %964 = vmatpush1.bf16.msra.mxu0 0
    %965 = vmatprep.subr.bf16.mxu0 0
    %966 = vmatpush1.bf16.msra.mxu0 %v949
    %967 = vmatprep.subr.bf16.mxu0 0
    %968 = vmatpush2.bf16.msra.mxu0 0
    %969 = vmatprep.subr.bf16.mxu0 0
    %970 = vmatpush2.bf16.msra.mxu0 0
    %971 = vmatprep.subr.bf16.mxu0 0
    %972 = vmatpush2.bf16.msra.mxu0 0
    %973 = vmatprep.subr.bf16.mxu0 0
    %974 = vmatpush2.bf16.msra.mxu0 0
    %975 = vmatprep.subr.bf16.mxu0 0
    %976 = vmatpush2.bf16.msra.mxu0 0
    %977 = vmatprep.subr.bf16.mxu0 0
    %978 = vmatpush2.bf16.msra.mxu0 0
    %979 = vmatprep.subr.bf16.mxu0 0
    %980 = vmatpush2.bf16.msra.mxu0 0
    %981 = vmatprep.subr.bf16.mxu0 0
    %982 = vmatpush2.bf16.msra.mxu0 0
    %983 = vmatprep.mubr.bf16.mxu0 0
    %984 = vmatmul.mubr.bf16.gmra.mxu0 %v946
    %v985 = vpop.f32.mrf.mxu0
    %v986 = vadd.f32 0.0, %v985
    %v987 = vpop.f32.mrf.mxu0
    %v988 = vpop.f32.mrf.mxu0
    %v989 = vpop.f32.mrf.mxu0
    %990 = vdwg.mxu0
    %v992 = vunpack.c.l.b16 %v817
    %993 = vset.pattern.permute.xlu0 0
    %994 = vperm.xlu0 %993, %v992
    %v995 = vpop.permute.xlu0 %994
    %v996 = vlaneseq
    %v997 = vshrl.u32 %v996, 7
    %v998 = vsub.s32 %v572, %v997
    %v999 = vrot.slane %v995, %v998
    %v1000 = vpack.c.b16 %v999, %v999
    %v1002 = vsel %vm620, %v1000, 0
    %v1005 = vsel %vm835, %v155, 0
    %1007 = vmatprep.subr.bf16.mxu0 0
    %1008 = vmatpush1.bf16.msra.mxu0 0
    %1009 = vmatprep.subr.bf16.mxu0 0
    %1010 = vmatpush1.bf16.msra.mxu0 0
    %1011 = vmatprep.subr.bf16.mxu0 0
    %1012 = vmatpush1.bf16.msra.mxu0 0
    %1013 = vmatprep.subr.bf16.mxu0 0
    %1014 = vmatpush1.bf16.msra.mxu0 0
    %1015 = vmatprep.subr.bf16.mxu0 0
    %1016 = vmatpush1.bf16.msra.mxu0 0
    %1017 = vmatprep.subr.bf16.mxu0 0
    %1018 = vmatpush1.bf16.msra.mxu0 0
    %1019 = vmatprep.subr.bf16.mxu0 0
    %1020 = vmatpush1.bf16.msra.mxu0 0
    %1021 = vmatprep.subr.bf16.mxu0 0
    %1022 = vmatpush1.bf16.msra.mxu0 %v1005
    %1023 = vmatprep.subr.bf16.mxu0 0
    %1024 = vmatpush2.bf16.msra.mxu0 0
    %1025 = vmatprep.subr.bf16.mxu0 0
    %1026 = vmatpush2.bf16.msra.mxu0 0
    %1027 = vmatprep.subr.bf16.mxu0 0
    %1028 = vmatpush2.bf16.msra.mxu0 0
    %1029 = vmatprep.subr.bf16.mxu0 0
    %1030 = vmatpush2.bf16.msra.mxu0 0
    %1031 = vmatprep.subr.bf16.mxu0 0
    %1032 = vmatpush2.bf16.msra.mxu0 0
    %1033 = vmatprep.subr.bf16.mxu0 0
    %1034 = vmatpush2.bf16.msra.mxu0 0
    %1035 = vmatprep.subr.bf16.mxu0 0
    %1036 = vmatpush2.bf16.msra.mxu0 0
    %1037 = vmatprep.subr.bf16.mxu0 0
    %1038 = vmatpush2.bf16.msra.mxu0 0
    %1039 = vmatprep.mubr.bf16.mxu0 0
    %1040 = vmatmul.mubr.bf16.gmra.mxu0 %v1002
    %v1041 = vpop.f32.mrf.mxu0
    %v1042 = vadd.f32 0.0, %v1041
    %v1043 = vpop.f32.mrf.mxu0
    %v1044 = vpop.f32.mrf.mxu0
    %v1045 = vpop.f32.mrf.mxu0
    %1046 = vdwg.mxu0
    %v1048 = vunpack.c.l.b16 %v818
    %1049 = vset.pattern.permute.xlu0 0
    %1050 = vperm.xlu0 %1049, %v1048
    %v1051 = vpop.permute.xlu0 %1050
    %v1052 = vlaneseq
    %v1053 = vshrl.u32 %v1052, 7
    %v1054 = vsub.s32 %v572, %v1053
    %v1055 = vrot.slane %v1051, %v1054
    %v1056 = vpack.c.b16 %v1055, %v1055
    %v1058 = vsel %vm620, %v1056, 0
    %v1061 = vsel %vm835, %v156, 0
    %1063 = vmatprep.subr.bf16.mxu0 0
    %1064 = vmatpush1.bf16.msra.mxu0 0
    %1065 = vmatprep.subr.bf16.mxu0 0
    %1066 = vmatpush1.bf16.msra.mxu0 0
    %1067 = vmatprep.subr.bf16.mxu0 0
    %1068 = vmatpush1.bf16.msra.mxu0 0
    %1069 = vmatprep.subr.bf16.mxu0 0
    %1070 = vmatpush1.bf16.msra.mxu0 0
    %1071 = vmatprep.subr.bf16.mxu0 0
    %1072 = vmatpush1.bf16.msra.mxu0 0
    %1073 = vmatprep.subr.bf16.mxu0 0
    %1074 = vmatpush1.bf16.msra.mxu0 0
    %1075 = vmatprep.subr.bf16.mxu0 0
    %1076 = vmatpush1.bf16.msra.mxu0 0
    %1077 = vmatprep.subr.bf16.mxu0 0
    %1078 = vmatpush1.bf16.msra.mxu0 %v1061
    %1079 = vmatprep.subr.bf16.mxu0 0
    %1080 = vmatpush2.bf16.msra.mxu0 0
    %1081 = vmatprep.subr.bf16.mxu0 0
    %1082 = vmatpush2.bf16.msra.mxu0 0
    %1083 = vmatprep.subr.bf16.mxu0 0
    %1084 = vmatpush2.bf16.msra.mxu0 0
    %1085 = vmatprep.subr.bf16.mxu0 0
    %1086 = vmatpush2.bf16.msra.mxu0 0
    %1087 = vmatprep.subr.bf16.mxu0 0
    %1088 = vmatpush2.bf16.msra.mxu0 0
    %1089 = vmatprep.subr.bf16.mxu0 0
    %1090 = vmatpush2.bf16.msra.mxu0 0
    %1091 = vmatprep.subr.bf16.mxu0 0
    %1092 = vmatpush2.bf16.msra.mxu0 0
    %1093 = vmatprep.subr.bf16.mxu0 0
    %1094 = vmatpush2.bf16.msra.mxu0 0
    %1095 = vmatprep.mubr.bf16.mxu0 0
    %1096 = vmatmul.mubr.bf16.gmra.mxu0 %v1058
    %v1097 = vpop.f32.mrf.mxu0
    %v1098 = vadd.f32 0.0, %v1097
    %v1099 = vpop.f32.mrf.mxu0
    %v1100 = vpop.f32.mrf.mxu0
    %v1101 = vpop.f32.mrf.mxu0
    %1102 = vdwg.mxu0
    %v1104 = vunpack.c.l.b16 %v819
    %1105 = vset.pattern.permute.xlu0 0
    %1106 = vperm.xlu0 %1105, %v1104
    %v1107 = vpop.permute.xlu0 %1106
    %v1108 = vlaneseq
    %v1109 = vshrl.u32 %v1108, 7
    %v1110 = vsub.s32 %v572, %v1109
    %v1111 = vrot.slane %v1107, %v1110
    %v1112 = vpack.c.b16 %v1111, %v1111
    %v1114 = vsel %vm620, %v1112, 0
    %v1117 = vsel %vm835, %v157, 0
    %1119 = vmatprep.subr.bf16.mxu0 0
    %1120 = vmatpush1.bf16.msra.mxu0 0
    %1121 = vmatprep.subr.bf16.mxu0 0
    %1122 = vmatpush1.bf16.msra.mxu0 0
    %1123 = vmatprep.subr.bf16.mxu0 0
    %1124 = vmatpush1.bf16.msra.mxu0 0
    %1125 = vmatprep.subr.bf16.mxu0 0
    %1126 = vmatpush1.bf16.msra.mxu0 0
    %1127 = vmatprep.subr.bf16.mxu0 0
    %1128 = vmatpush1.bf16.msra.mxu0 0
    %1129 = vmatprep.subr.bf16.mxu0 0
    %1130 = vmatpush1.bf16.msra.mxu0 0
    %1131 = vmatprep.subr.bf16.mxu0 0
    %1132 = vmatpush1.bf16.msra.mxu0 0
    %1133 = vmatprep.subr.bf16.mxu0 0
    %1134 = vmatpush1.bf16.msra.mxu0 %v1117
    %1135 = vmatprep.subr.bf16.mxu0 0
    %1136 = vmatpush2.bf16.msra.mxu0 0
    %1137 = vmatprep.subr.bf16.mxu0 0
    %1138 = vmatpush2.bf16.msra.mxu0 0
    %1139 = vmatprep.subr.bf16.mxu0 0
    %1140 = vmatpush2.bf16.msra.mxu0 0
    %1141 = vmatprep.subr.bf16.mxu0 0
    %1142 = vmatpush2.bf16.msra.mxu0 0
    %1143 = vmatprep.subr.bf16.mxu0 0
    %1144 = vmatpush2.bf16.msra.mxu0 0
    %1145 = vmatprep.subr.bf16.mxu0 0
    %1146 = vmatpush2.bf16.msra.mxu0 0
    %1147 = vmatprep.subr.bf16.mxu0 0
    %1148 = vmatpush2.bf16.msra.mxu0 0
    %1149 = vmatprep.subr.bf16.mxu0 0
    %1150 = vmatpush2.bf16.msra.mxu0 0
    %1151 = vmatprep.mubr.bf16.mxu0 0
    %1152 = vmatmul.mubr.bf16.gmra.mxu0 %v1114
    %v1153 = vpop.f32.mrf.mxu0
    %v1154 = vadd.f32 0.0, %v1153
    %v1155 = vpop.f32.mrf.mxu0
    %v1156 = vpop.f32.mrf.mxu0
    %v1157 = vpop.f32.mrf.mxu0
    %1158 = vdwg.mxu0
    %v1160 = vunpack.c.l.b16 %v820
    %1161 = vset.pattern.permute.xlu0 0
    %1162 = vperm.xlu0 %1161, %v1160
    %v1163 = vpop.permute.xlu0 %1162
    %v1164 = vlaneseq
    %v1165 = vshrl.u32 %v1164, 7
    %v1166 = vsub.s32 %v572, %v1165
    %v1167 = vrot.slane %v1163, %v1166
    %v1168 = vpack.c.b16 %v1167, %v1167
    %v1170 = vsel %vm620, %v1168, 0
    %v1173 = vsel %vm835, %v158, 0
    %1175 = vmatprep.subr.bf16.mxu0 0
    %1176 = vmatpush1.bf16.msra.mxu0 0
    %1177 = vmatprep.subr.bf16.mxu0 0
    %1178 = vmatpush1.bf16.msra.mxu0 0
    %1179 = vmatprep.subr.bf16.mxu0 0
    %1180 = vmatpush1.bf16.msra.mxu0 0
    %1181 = vmatprep.subr.bf16.mxu0 0
    %1182 = vmatpush1.bf16.msra.mxu0 0
    %1183 = vmatprep.subr.bf16.mxu0 0
    %1184 = vmatpush1.bf16.msra.mxu0 0
    %1185 = vmatprep.subr.bf16.mxu0 0
    %1186 = vmatpush1.bf16.msra.mxu0 0
    %1187 = vmatprep.subr.bf16.mxu0 0
    %1188 = vmatpush1.bf16.msra.mxu0 0
    %1189 = vmatprep.subr.bf16.mxu0 0
    %1190 = vmatpush1.bf16.msra.mxu0 %v1173
    %1191 = vmatprep.subr.bf16.mxu0 0
    %1192 = vmatpush2.bf16.msra.mxu0 0
    %1193 = vmatprep.subr.bf16.mxu0 0
    %1194 = vmatpush2.bf16.msra.mxu0 0
    %1195 = vmatprep.subr.bf16.mxu0 0
    %1196 = vmatpush2.bf16.msra.mxu0 0
    %1197 = vmatprep.subr.bf16.mxu0 0
    %1198 = vmatpush2.bf16.msra.mxu0 0
    %1199 = vmatprep.subr.bf16.mxu0 0
    %1200 = vmatpush2.bf16.msra.mxu0 0
    %1201 = vmatprep.subr.bf16.mxu0 0
    %1202 = vmatpush2.bf16.msra.mxu0 0
    %1203 = vmatprep.subr.bf16.mxu0 0
    %1204 = vmatpush2.bf16.msra.mxu0 0
    %1205 = vmatprep.subr.bf16.mxu0 0
    %1206 = vmatpush2.bf16.msra.mxu0 0
    %1207 = vmatprep.mubr.bf16.mxu0 0
    %1208 = vmatmul.mubr.bf16.gmra.mxu0 %v1170
    %v1209 = vpop.f32.mrf.mxu0
    %v1210 = vadd.f32 0.0, %v1209
    %v1211 = vpop.f32.mrf.mxu0
    %v1212 = vpop.f32.mrf.mxu0
    %v1213 = vpop.f32.mrf.mxu0
    %1214 = vdwg.mxu0
    %v1216 = vunpack.c.l.b16 %v821
    %1217 = vset.pattern.permute.xlu0 0
    %1218 = vperm.xlu0 %1217, %v1216
    %v1219 = vpop.permute.xlu0 %1218
    %v1220 = vlaneseq
    %v1221 = vshrl.u32 %v1220, 7
    %v1222 = vsub.s32 %v572, %v1221
    %v1223 = vrot.slane %v1219, %v1222
    %v1224 = vpack.c.b16 %v1223, %v1223
    %v1226 = vsel %vm620, %v1224, 0
    %v1229 = vsel %vm835, %v159, 0
    %1231 = vmatprep.subr.bf16.mxu0 0
    %1232 = vmatpush1.bf16.msra.mxu0 0
    %1233 = vmatprep.subr.bf16.mxu0 0
    %1234 = vmatpush1.bf16.msra.mxu0 0
    %1235 = vmatprep.subr.bf16.mxu0 0
    %1236 = vmatpush1.bf16.msra.mxu0 0
    %1237 = vmatprep.subr.bf16.mxu0 0
    %1238 = vmatpush1.bf16.msra.mxu0 0
    %1239 = vmatprep.subr.bf16.mxu0 0
    %1240 = vmatpush1.bf16.msra.mxu0 0
    %1241 = vmatprep.subr.bf16.mxu0 0
    %1242 = vmatpush1.bf16.msra.mxu0 0
    %1243 = vmatprep.subr.bf16.mxu0 0
    %1244 = vmatpush1.bf16.msra.mxu0 0
    %1245 = vmatprep.subr.bf16.mxu0 0
    %1246 = vmatpush1.bf16.msra.mxu0 %v1229
    %1247 = vmatprep.subr.bf16.mxu0 0
    %1248 = vmatpush2.bf16.msra.mxu0 0
    %1249 = vmatprep.subr.bf16.mxu0 0
    %1250 = vmatpush2.bf16.msra.mxu0 0
    %1251 = vmatprep.subr.bf16.mxu0 0
    %1252 = vmatpush2.bf16.msra.mxu0 0
    %1253 = vmatprep.subr.bf16.mxu0 0
    %1254 = vmatpush2.bf16.msra.mxu0 0
    %1255 = vmatprep.subr.bf16.mxu0 0
    %1256 = vmatpush2.bf16.msra.mxu0 0
    %1257 = vmatprep.subr.bf16.mxu0 0
    %1258 = vmatpush2.bf16.msra.mxu0 0
    %1259 = vmatprep.subr.bf16.mxu0 0
    %1260 = vmatpush2.bf16.msra.mxu0 0
    %1261 = vmatprep.subr.bf16.mxu0 0
    %1262 = vmatpush2.bf16.msra.mxu0 0
    %1263 = vmatprep.mubr.bf16.mxu0 0
    %1264 = vmatmul.mubr.bf16.gmra.mxu0 %v1226
    %v1265 = vpop.f32.mrf.mxu0
    %v1266 = vadd.f32 0.0, %v1265
    %v1267 = vpop.f32.mrf.mxu0
    %v1268 = vpop.f32.mrf.mxu0
    %v1269 = vpop.f32.mrf.mxu0
    %1270 = vdwg.mxu0
    %v1271 = vpack.c.bf16 %v874, %v874
    %v1272 = vpack.c.bf16 %v930, %v930
    %v1273 = vpack.c.bf16 %v986, %v986
    %v1274 = vpack.c.bf16 %v1042, %v1042
    %v1275 = vpack.c.bf16 %v1098, %v1098
    %v1276 = vpack.c.bf16 %v1154, %v1154
    %v1277 = vpack.c.bf16 %v1210, %v1210
    %v1278 = vpack.c.bf16 %v1266, %v1266
    %v1287 = vunpack.c.l.b16 %v1271
    %v1288 = vunpack.c.l.b16 %v1272
    %v1289 = vunpack.c.l.b16 %v1273
    %v1290 = vunpack.c.l.b16 %v1274
    %v1291 = vunpack.c.l.b16 %v1275
    %v1292 = vunpack.c.l.b16 %v1276
    %v1293 = vunpack.c.l.b16 %v1277
    %v1294 = vunpack.c.l.b16 %v1278
    %v1295 = vrot.slane %v1288, 7
    %v1296 = vsel %vm605, %v1295, %v1287
    %v1297 = vrot.slane %v1289, 6
    %v1298 = vsel %vm607, %v1297, %v1296
    %v1299 = vrot.slane %v1290, 5
    %v1300 = vsel %vm609, %v1299, %v1298
    %v1301 = vrot.slane %v1291, 4
    %v1302 = vsel %vm611, %v1301, %v1300
    %v1303 = vrot.slane %v1292, 3
    %v1304 = vsel %vm613, %v1303, %v1302
    %v1305 = vrot.slane %v1293, 2
    %v1306 = vsel %vm615, %v1305, %v1304
    %v1307 = vrot.slane %v1294, 1
    %v1308 = vsel %vm617, %v1307, %v1306
    %v1309 = vpack.c.b16 %v1308, %v1308
    %v1311 = vld [vmem:[#allocation13] sm:$0xff]
    %v1312 = vld [vmem:[#allocation13 + $0x8] sm:$0xff]
    %v1313 = vld [vmem:[#allocation13 + $0x10] sm:$0xff]
    %v1314 = vld [vmem:[#allocation13 + $0x18] sm:$0xff]
    %v1315 = vld [vmem:[#allocation13 + $0x20] sm:$0xff]
    %v1316 = vld [vmem:[#allocation13 + $0x28] sm:$0xff]
    %v1317 = vld [vmem:[#allocation13 + $0x30] sm:$0xff]
    %v1318 = vld [vmem:[#allocation13 + $0x38] sm:$0xff]
    %v1319 = vld [vmem:[#allocation13 + $0x40] sm:$0xff]
    %v1320 = vld [vmem:[#allocation13 + $0x48] sm:$0xff]
    %v1321 = vld [vmem:[#allocation13 + $0x50] sm:$0xff]
    %v1322 = vld [vmem:[#allocation13 + $0x58] sm:$0xff]
    %v1323 = vld [vmem:[#allocation13 + $0x60] sm:$0xff]
    %v1324 = vld [vmem:[#allocation13 + $0x68] sm:$0xff]
    %v1325 = vld [vmem:[#allocation13 + $0x70] sm:$0xff]
    %v1326 = vld [vmem:[#allocation13 + $0x78] sm:$0xff]
    %v1327 = vld [vmem:[#allocation13 + $0x80] sm:$0xff]
    %v1328 = vld [vmem:[#allocation13 + $0x88] sm:$0xff]
    %v1329 = vld [vmem:[#allocation13 + $0x90] sm:$0xff]
    %v1330 = vld [vmem:[#allocation13 + $0x98] sm:$0xff]
    %v1331 = vld [vmem:[#allocation13 + $0xa0] sm:$0xff]
    %v1332 = vld [vmem:[#allocation13 + $0xa8] sm:$0xff]
    %v1333 = vld [vmem:[#allocation13 + $0xb0] sm:$0xff]
    %v1334 = vld [vmem:[#allocation13 + $0xb8] sm:$0xff]
    %v1335 = vld [vmem:[#allocation13 + $0xc0] sm:$0xff]
    %v1336 = vld [vmem:[#allocation13 + $0xc8] sm:$0xff]
    %v1337 = vld [vmem:[#allocation13 + $0xd0] sm:$0xff]
    %v1338 = vld [vmem:[#allocation13 + $0xd8] sm:$0xff]
    %v1339 = vld [vmem:[#allocation13 + $0xe0] sm:$0xff]
    %v1340 = vld [vmem:[#allocation13 + $0xe8] sm:$0xff]
    %v1341 = vld [vmem:[#allocation13 + $0xf0] sm:$0xff]
    %v1342 = vld [vmem:[#allocation13 + $0xf8] sm:$0xff]
    %v1343 = vld [vmem:[#allocation13 + $0x100] sm:$0xff]
    %v1344 = vld [vmem:[#allocation13 + $0x108] sm:$0xff]
    %v1345 = vld [vmem:[#allocation13 + $0x110] sm:$0xff]
    %v1346 = vld [vmem:[#allocation13 + $0x118] sm:$0xff]
    %v1347 = vld [vmem:[#allocation13 + $0x120] sm:$0xff]
    %v1348 = vld [vmem:[#allocation13 + $0x128] sm:$0xff]
    %v1349 = vld [vmem:[#allocation13 + $0x130] sm:$0xff]
    %v1350 = vld [vmem:[#allocation13 + $0x138] sm:$0xff]
    %v1351 = vld [vmem:[#allocation13 + $0x140] sm:$0xff]
    %v1352 = vld [vmem:[#allocation13 + $0x148] sm:$0xff]
    %v1353 = vld [vmem:[#allocation13 + $0x150] sm:$0xff]
    %v1354 = vld [vmem:[#allocation13 + $0x158] sm:$0xff]
    %v1355 = vld [vmem:[#allocation13 + $0x160] sm:$0xff]
    %v1356 = vld [vmem:[#allocation13 + $0x168] sm:$0xff]
    %v1357 = vld [vmem:[#allocation13 + $0x170] sm:$0xff]
    %v1358 = vld [vmem:[#allocation13 + $0x178] sm:$0xff]
    %v1359 = vld [vmem:[#allocation13 + $0x180] sm:$0xff]
    %v1360 = vld [vmem:[#allocation13 + $0x188] sm:$0xff]
    %v1361 = vld [vmem:[#allocation13 + $0x190] sm:$0xff]
    %v1362 = vld [vmem:[#allocation13 + $0x198] sm:$0xff]
    %v1363 = vld [vmem:[#allocation13 + $0x1a0] sm:$0xff]
    %v1364 = vld [vmem:[#allocation13 + $0x1a8] sm:$0xff]
    %v1365 = vld [vmem:[#allocation13 + $0x1b0] sm:$0xff]
    %v1366 = vld [vmem:[#allocation13 + $0x1b8] sm:$0xff]
    %v1367 = vld [vmem:[#allocation13 + $0x1c0] sm:$0xff]
    %v1368 = vld [vmem:[#allocation13 + $0x1c8] sm:$0xff]
    %v1369 = vld [vmem:[#allocation13 + $0x1d0] sm:$0xff]
    %v1370 = vld [vmem:[#allocation13 + $0x1d8] sm:$0xff]
    %v1371 = vld [vmem:[#allocation13 + $0x1e0] sm:$0xff]
    %v1372 = vld [vmem:[#allocation13 + $0x1e8] sm:$0xff]
    %v1373 = vld [vmem:[#allocation13 + $0x1f0] sm:$0xff]
    %v1374 = vld [vmem:[#allocation13 + $0x1f8] sm:$0xff]
    %v1375 = vld [vmem:[#allocation13 + $0x200] sm:$0xff]
    %v1376 = vld [vmem:[#allocation13 + $0x208] sm:$0xff]
    %v1377 = vld [vmem:[#allocation13 + $0x210] sm:$0xff]
    %v1378 = vld [vmem:[#allocation13 + $0x218] sm:$0xff]
    %v1379 = vld [vmem:[#allocation13 + $0x220] sm:$0xff]
    %v1380 = vld [vmem:[#allocation13 + $0x228] sm:$0xff]
    %v1381 = vld [vmem:[#allocation13 + $0x230] sm:$0xff]
    %v1382 = vld [vmem:[#allocation13 + $0x238] sm:$0xff]
    %v1383 = vld [vmem:[#allocation13 + $0x240] sm:$0xff]
    %v1384 = vld [vmem:[#allocation13 + $0x248] sm:$0xff]
    %v1385 = vld [vmem:[#allocation13 + $0x250] sm:$0xff]
    %v1386 = vld [vmem:[#allocation13 + $0x258] sm:$0xff]
    %v1387 = vld [vmem:[#allocation13 + $0x260] sm:$0xff]
    %v1388 = vld [vmem:[#allocation13 + $0x268] sm:$0xff]
    %v1389 = vld [vmem:[#allocation13 + $0x270] sm:$0xff]
    %v1390 = vld [vmem:[#allocation13 + $0x278] sm:$0xff]
    %v1391 = vld [vmem:[#allocation13 + $0x280] sm:$0xff]
    %v1392 = vld [vmem:[#allocation13 + $0x288] sm:$0xff]
    %v1393 = vld [vmem:[#allocation13 + $0x290] sm:$0xff]
    %v1394 = vld [vmem:[#allocation13 + $0x298] sm:$0xff]
    %v1395 = vld [vmem:[#allocation13 + $0x2a0] sm:$0xff]
    %v1396 = vld [vmem:[#allocation13 + $0x2a8] sm:$0xff]
    %v1397 = vld [vmem:[#allocation13 + $0x2b0] sm:$0xff]
    %v1398 = vld [vmem:[#allocation13 + $0x2b8] sm:$0xff]
    %v1399 = vld [vmem:[#allocation13 + $0x2c0] sm:$0xff]
    %v1400 = vld [vmem:[#allocation13 + $0x2c8] sm:$0xff]
    %v1401 = vld [vmem:[#allocation13 + $0x2d0] sm:$0xff]
    %v1402 = vld [vmem:[#allocation13 + $0x2d8] sm:$0xff]
    %v1403 = vld [vmem:[#allocation13 + $0x2e0] sm:$0xff]
    %v1404 = vld [vmem:[#allocation13 + $0x2e8] sm:$0xff]
    %v1405 = vld [vmem:[#allocation13 + $0x2f0] sm:$0xff]
    %v1406 = vld [vmem:[#allocation13 + $0x2f8] sm:$0xff]
    %v1407 = vld [vmem:[%s9] sm:$0xf]
    %v1409 = vlaneseq
    %v1410 = vshrl.u32 %v1409, 7
    %v1411 = vsub.s32 0, %v1410
    %v1412 = vrot.slane %v1407, %v1411
    %v1413 = vlaneseq
    %v1414 = vshrl.u32 %v1413, 7
    %v1415 = vsub.s32 1, %v1414
    %v1416 = vrot.slane %v1407, %v1415
    %v1417 = vlaneseq
    %v1418 = vshrl.u32 %v1417, 7
    %v1419 = vsub.s32 2, %v1418
    %v1420 = vrot.slane %v1407, %v1419
    %v1421 = vlaneseq
    %v1422 = vshrl.u32 %v1421, 7
    %v1423 = vsub.s32 3, %v1422
    %v1424 = vrot.slane %v1407, %v1423
    %v1525 = vunpack.c.l.b16 %v1311
    %v1526 = vunpack.c.h.b16 %v1311
    %v1527 = vunpack.c.l.b16 %v1312
    %v1528 = vunpack.c.h.b16 %v1312
    %v1529 = vunpack.c.l.b16 %v1313
    %v1530 = vunpack.c.h.b16 %v1313
    %v1531 = vunpack.c.l.b16 %v1314
    %v1532 = vunpack.c.h.b16 %v1314
    %v1533 = vunpack.c.l.b16 %v1315
    %v1534 = vunpack.c.h.b16 %v1315
    %v1535 = vunpack.c.l.b16 %v1316
    %v1536 = vunpack.c.h.b16 %v1316
    %v1537 = vunpack.c.l.b16 %v1317
    %v1538 = vunpack.c.h.b16 %v1317
    %v1539 = vunpack.c.l.b16 %v1318
    %v1540 = vunpack.c.h.b16 %v1318
    %v1541 = vunpack.c.l.b16 %v1319
    %v1542 = vunpack.c.h.b16 %v1319
    %v1543 = vunpack.c.l.b16 %v1320
    %v1544 = vunpack.c.h.b16 %v1320
    %v1545 = vunpack.c.l.b16 %v1321
    %v1546 = vunpack.c.h.b16 %v1321
    %v1547 = vunpack.c.l.b16 %v1322
    %v1548 = vunpack.c.h.b16 %v1322
    %v1549 = vunpack.c.l.b16 %v1323
    %v1550 = vunpack.c.h.b16 %v1323
    %v1551 = vunpack.c.l.b16 %v1324
    %v1552 = vunpack.c.h.b16 %v1324
    %v1553 = vunpack.c.l.b16 %v1325
    %v1554 = vunpack.c.h.b16 %v1325
    %v1555 = vunpack.c.l.b16 %v1326
    %v1556 = vunpack.c.h.b16 %v1326
    %v1557 = vunpack.c.l.b16 %v1327
    %v1558 = vunpack.c.h.b16 %v1327
    %v1559 = vunpack.c.l.b16 %v1328
    %v1560 = vunpack.c.h.b16 %v1328
    %v1561 = vunpack.c.l.b16 %v1329
    %v1562 = vunpack.c.h.b16 %v1329
    %v1563 = vunpack.c.l.b16 %v1330
    %v1564 = vunpack.c.h.b16 %v1330
    %v1565 = vunpack.c.l.b16 %v1331
    %v1566 = vunpack.c.h.b16 %v1331
    %v1567 = vunpack.c.l.b16 %v1332
    %v1568 = vunpack.c.h.b16 %v1332
    %v1569 = vunpack.c.l.b16 %v1333
    %v1570 = vunpack.c.h.b16 %v1333
    %v1571 = vunpack.c.l.b16 %v1334
    %v1572 = vunpack.c.h.b16 %v1334
    %v1573 = vunpack.c.l.b16 %v1335
    %v1574 = vunpack.c.h.b16 %v1335
    %v1575 = vunpack.c.l.b16 %v1336
    %v1576 = vunpack.c.h.b16 %v1336
    %v1577 = vunpack.c.l.b16 %v1337
    %v1578 = vunpack.c.h.b16 %v1337
    %v1579 = vunpack.c.l.b16 %v1338
    %v1580 = vunpack.c.h.b16 %v1338
    %v1581 = vunpack.c.l.b16 %v1339
    %v1582 = vunpack.c.h.b16 %v1339
    %v1583 = vunpack.c.l.b16 %v1340
    %v1584 = vunpack.c.h.b16 %v1340
    %v1585 = vunpack.c.l.b16 %v1341
    %v1586 = vunpack.c.h.b16 %v1341
    %v1587 = vunpack.c.l.b16 %v1342
    %v1588 = vunpack.c.h.b16 %v1342
    %v1589 = vunpack.c.l.b16 %v1343
    %v1590 = vunpack.c.h.b16 %v1343
    %v1591 = vunpack.c.l.b16 %v1344
    %v1592 = vunpack.c.h.b16 %v1344
    %v1593 = vunpack.c.l.b16 %v1345
    %v1594 = vunpack.c.h.b16 %v1345
    %v1595 = vunpack.c.l.b16 %v1346
    %v1596 = vunpack.c.h.b16 %v1346
    %v1597 = vunpack.c.l.b16 %v1347
    %v1598 = vunpack.c.h.b16 %v1347
    %v1599 = vunpack.c.l.b16 %v1348
    %v1600 = vunpack.c.h.b16 %v1348
    %v1601 = vunpack.c.l.b16 %v1349
    %v1602 = vunpack.c.h.b16 %v1349
    %v1603 = vunpack.c.l.b16 %v1350
    %v1604 = vunpack.c.h.b16 %v1350
    %v1605 = vunpack.c.l.b16 %v1351
    %v1606 = vunpack.c.h.b16 %v1351
    %v1607 = vunpack.c.l.b16 %v1352
    %v1608 = vunpack.c.h.b16 %v1352
    %v1609 = vunpack.c.l.b16 %v1353
    %v1610 = vunpack.c.h.b16 %v1353
    %v1611 = vunpack.c.l.b16 %v1354
    %v1612 = vunpack.c.h.b16 %v1354
    %v1613 = vunpack.c.l.b16 %v1355
    %v1614 = vunpack.c.h.b16 %v1355
    %v1615 = vunpack.c.l.b16 %v1356
    %v1616 = vunpack.c.h.b16 %v1356
    %v1617 = vunpack.c.l.b16 %v1357
    %v1618 = vunpack.c.h.b16 %v1357
    %v1619 = vunpack.c.l.b16 %v1358
    %v1620 = vunpack.c.h.b16 %v1358
    %v1621 = vunpack.c.l.b16 %v1359
    %v1622 = vunpack.c.h.b16 %v1359
    %v1623 = vunpack.c.l.b16 %v1360
    %v1624 = vunpack.c.h.b16 %v1360
    %v1625 = vunpack.c.l.b16 %v1361
    %v1626 = vunpack.c.h.b16 %v1361
    %v1627 = vunpack.c.l.b16 %v1362
    %v1628 = vunpack.c.h.b16 %v1362
    %v1629 = vunpack.c.l.b16 %v1363
    %v1630 = vunpack.c.h.b16 %v1363
    %v1631 = vunpack.c.l.b16 %v1364
    %v1632 = vunpack.c.h.b16 %v1364
    %v1633 = vunpack.c.l.b16 %v1365
    %v1634 = vunpack.c.h.b16 %v1365
    %v1635 = vunpack.c.l.b16 %v1366
    %v1636 = vunpack.c.h.b16 %v1366
    %v1637 = vunpack.c.l.b16 %v1367
    %v1638 = vunpack.c.h.b16 %v1367
    %v1639 = vunpack.c.l.b16 %v1368
    %v1640 = vunpack.c.h.b16 %v1368
    %v1641 = vunpack.c.l.b16 %v1369
    %v1642 = vunpack.c.h.b16 %v1369
    %v1643 = vunpack.c.l.b16 %v1370
    %v1644 = vunpack.c.h.b16 %v1370
    %v1645 = vunpack.c.l.b16 %v1371
    %v1646 = vunpack.c.h.b16 %v1371
    %v1647 = vunpack.c.l.b16 %v1372
    %v1648 = vunpack.c.h.b16 %v1372
    %v1649 = vunpack.c.l.b16 %v1373
    %v1650 = vunpack.c.h.b16 %v1373
    %v1651 = vunpack.c.l.b16 %v1374
    %v1652 = vunpack.c.h.b16 %v1374
    %v1653 = vunpack.c.l.b16 %v1375
    %v1654 = vunpack.c.h.b16 %v1375
    %v1655 = vunpack.c.l.b16 %v1376
    %v1656 = vunpack.c.h.b16 %v1376
    %v1657 = vunpack.c.l.b16 %v1377
    %v1658 = vunpack.c.h.b16 %v1377
    %v1659 = vunpack.c.l.b16 %v1378
    %v1660 = vunpack.c.h.b16 %v1378
    %v1661 = vunpack.c.l.b16 %v1379
    %v1662 = vunpack.c.h.b16 %v1379
    %v1663 = vunpack.c.l.b16 %v1380
    %v1664 = vunpack.c.h.b16 %v1380
    %v1665 = vunpack.c.l.b16 %v1381
    %v1666 = vunpack.c.h.b16 %v1381
    %v1667 = vunpack.c.l.b16 %v1382
    %v1668 = vunpack.c.h.b16 %v1382
    %v1669 = vunpack.c.l.b16 %v1383
    %v1670 = vunpack.c.h.b16 %v1383
    %v1671 = vunpack.c.l.b16 %v1384
    %v1672 = vunpack.c.h.b16 %v1384
    %v1673 = vunpack.c.l.b16 %v1385
    %v1674 = vunpack.c.h.b16 %v1385
    %v1675 = vunpack.c.l.b16 %v1386
    %v1676 = vunpack.c.h.b16 %v1386
    %v1677 = vunpack.c.l.b16 %v1387
    %v1678 = vunpack.c.h.b16 %v1387
    %v1679 = vunpack.c.l.b16 %v1388
    %v1680 = vunpack.c.h.b16 %v1388
    %v1681 = vunpack.c.l.b16 %v1389
    %v1682 = vunpack.c.h.b16 %v1389
    %v1683 = vunpack.c.l.b16 %v1390
    %v1684 = vunpack.c.h.b16 %v1390
    %v1685 = vunpack.c.l.b16 %v1391
    %v1686 = vunpack.c.h.b16 %v1391
    %v1687 = vunpack.c.l.b16 %v1392
    %v1688 = vunpack.c.h.b16 %v1392
    %v1689 = vunpack.c.l.b16 %v1393
    %v1690 = vunpack.c.h.b16 %v1393
    %v1691 = vunpack.c.l.b16 %v1394
    %v1692 = vunpack.c.h.b16 %v1394
    %v1693 = vunpack.c.l.b16 %v1395
    %v1694 = vunpack.c.h.b16 %v1395
    %v1695 = vunpack.c.l.b16 %v1396
    %v1696 = vunpack.c.h.b16 %v1396
    %v1697 = vunpack.c.l.b16 %v1397
    %v1698 = vunpack.c.h.b16 %v1397
    %v1699 = vunpack.c.l.b16 %v1398
    %v1700 = vunpack.c.h.b16 %v1398
    %v1701 = vunpack.c.l.b16 %v1399
    %v1702 = vunpack.c.h.b16 %v1399
    %v1703 = vunpack.c.l.b16 %v1400
    %v1704 = vunpack.c.h.b16 %v1400
    %v1705 = vunpack.c.l.b16 %v1401
    %v1706 = vunpack.c.h.b16 %v1401
    %v1707 = vunpack.c.l.b16 %v1402
    %v1708 = vunpack.c.h.b16 %v1402
    %v1709 = vunpack.c.l.b16 %v1403
    %v1710 = vunpack.c.h.b16 %v1403
    %v1711 = vunpack.c.l.b16 %v1404
    %v1712 = vunpack.c.h.b16 %v1404
    %v1713 = vunpack.c.l.b16 %v1405
    %v1714 = vunpack.c.h.b16 %v1405
    %v1715 = vunpack.c.l.b16 %v1406
    %v1716 = vunpack.c.h.b16 %v1406
    %v1717 = vpack.c.b16 %v1529, %v1525
    %v1718 = vpack.c.b16 %v1530, %v1526
    %v1719 = vpack.c.b16 %v1531, %v1527
    %v1720 = vpack.c.b16 %v1532, %v1528
    %v1721 = vpack.c.b16 %v1537, %v1533
    %v1722 = vpack.c.b16 %v1538, %v1534
    %v1723 = vpack.c.b16 %v1539, %v1535
    %v1724 = vpack.c.b16 %v1540, %v1536
    %v1725 = vpack.c.b16 %v1545, %v1541
    %v1726 = vpack.c.b16 %v1546, %v1542
    %v1727 = vpack.c.b16 %v1547, %v1543
    %v1728 = vpack.c.b16 %v1548, %v1544
    %v1729 = vpack.c.b16 %v1553, %v1549
    %v1730 = vpack.c.b16 %v1554, %v1550
    %v1731 = vpack.c.b16 %v1555, %v1551
    %v1732 = vpack.c.b16 %v1556, %v1552
    %v1733 = vpack.c.b16 %v1561, %v1557
    %v1734 = vpack.c.b16 %v1562, %v1558
    %v1735 = vpack.c.b16 %v1563, %v1559
    %v1736 = vpack.c.b16 %v1564, %v1560
    %v1737 = vpack.c.b16 %v1569, %v1565
    %v1738 = vpack.c.b16 %v1570, %v1566
    %v1739 = vpack.c.b16 %v1571, %v1567
    %v1740 = vpack.c.b16 %v1572, %v1568
    %v1741 = vpack.c.b16 %v1577, %v1573
    %v1742 = vpack.c.b16 %v1578, %v1574
    %v1743 = vpack.c.b16 %v1579, %v1575
    %v1744 = vpack.c.b16 %v1580, %v1576
    %v1745 = vpack.c.b16 %v1585, %v1581
    %v1746 = vpack.c.b16 %v1586, %v1582
    %v1747 = vpack.c.b16 %v1587, %v1583
    %v1748 = vpack.c.b16 %v1588, %v1584
    %v1749 = vpack.c.b16 %v1593, %v1589
    %v1750 = vpack.c.b16 %v1594, %v1590
    %v1751 = vpack.c.b16 %v1595, %v1591
    %v1752 = vpack.c.b16 %v1596, %v1592
    %v1753 = vpack.c.b16 %v1601, %v1597
    %v1754 = vpack.c.b16 %v1602, %v1598
    %v1755 = vpack.c.b16 %v1603, %v1599
    %v1756 = vpack.c.b16 %v1604, %v1600
    %v1757 = vpack.c.b16 %v1609, %v1605
    %v1758 = vpack.c.b16 %v1610, %v1606
    %v1759 = vpack.c.b16 %v1611, %v1607
    %v1760 = vpack.c.b16 %v1612, %v1608
    %v1761 = vpack.c.b16 %v1617, %v1613
    %v1762 = vpack.c.b16 %v1618, %v1614
    %v1763 = vpack.c.b16 %v1619, %v1615
    %v1764 = vpack.c.b16 %v1620, %v1616
    %v1765 = vpack.c.b16 %v1625, %v1621
    %v1766 = vpack.c.b16 %v1626, %v1622
    %v1767 = vpack.c.b16 %v1627, %v1623
    %v1768 = vpack.c.b16 %v1628, %v1624
    %v1769 = vpack.c.b16 %v1633, %v1629
    %v1770 = vpack.c.b16 %v1634, %v1630
    %v1771 = vpack.c.b16 %v1635, %v1631
    %v1772 = vpack.c.b16 %v1636, %v1632
    %v1773 = vpack.c.b16 %v1641, %v1637
    %v1774 = vpack.c.b16 %v1642, %v1638
    %v1775 = vpack.c.b16 %v1643, %v1639
    %v1776 = vpack.c.b16 %v1644, %v1640
    %v1777 = vpack.c.b16 %v1649, %v1645
    %v1778 = vpack.c.b16 %v1650, %v1646
    %v1779 = vpack.c.b16 %v1651, %v1647
    %v1780 = vpack.c.b16 %v1652, %v1648
    %v1781 = vpack.c.b16 %v1657, %v1653
    %v1782 = vpack.c.b16 %v1658, %v1654
    %v1783 = vpack.c.b16 %v1659, %v1655
    %v1784 = vpack.c.b16 %v1660, %v1656
    %v1785 = vpack.c.b16 %v1665, %v1661
    %v1786 = vpack.c.b16 %v1666, %v1662
    %v1787 = vpack.c.b16 %v1667, %v1663
    %v1788 = vpack.c.b16 %v1668, %v1664
    %v1789 = vpack.c.b16 %v1673, %v1669
    %v1790 = vpack.c.b16 %v1674, %v1670
    %v1791 = vpack.c.b16 %v1675, %v1671
    %v1792 = vpack.c.b16 %v1676, %v1672
    %v1793 = vpack.c.b16 %v1681, %v1677
    %v1794 = vpack.c.b16 %v1682, %v1678
    %v1795 = vpack.c.b16 %v1683, %v1679
    %v1796 = vpack.c.b16 %v1684, %v1680
    %v1797 = vpack.c.b16 %v1689, %v1685
    %v1798 = vpack.c.b16 %v1690, %v1686
    %v1799 = vpack.c.b16 %v1691, %v1687
    %v1800 = vpack.c.b16 %v1692, %v1688
    %v1801 = vpack.c.b16 %v1697, %v1693
    %v1802 = vpack.c.b16 %v1698, %v1694
    %v1803 = vpack.c.b16 %v1699, %v1695
    %v1804 = vpack.c.b16 %v1700, %v1696
    %v1805 = vpack.c.b16 %v1705, %v1701
    %v1806 = vpack.c.b16 %v1706, %v1702
    %v1807 = vpack.c.b16 %v1707, %v1703
    %v1808 = vpack.c.b16 %v1708, %v1704
    %v1809 = vpack.c.b16 %v1713, %v1709
    %v1810 = vpack.c.b16 %v1714, %v1710
    %v1811 = vpack.c.b16 %v1715, %v1711
    %v1812 = vpack.c.b16 %v1716, %v1712
    %1909 = vmatprep.subr.bf16.mxu0 %v1746
    %1910 = vmatpush1.bf16.msra.mxu0 %v1745
    %1911 = vmatprep.subr.bf16.mxu0 %v1742
    %1912 = vmatpush1.bf16.msra.mxu0 %v1741
    %1913 = vmatprep.subr.bf16.mxu0 %v1738
    %1914 = vmatpush1.bf16.msra.mxu0 %v1737
    %1915 = vmatprep.subr.bf16.mxu0 %v1734
    %1916 = vmatpush1.bf16.msra.mxu0 %v1733
    %1917 = vmatprep.subr.bf16.mxu0 %v1730
    %1918 = vmatpush1.bf16.msra.mxu0 %v1729
    %1919 = vmatprep.subr.bf16.mxu0 %v1726
    %1920 = vmatpush1.bf16.msra.mxu0 %v1725
    %1921 = vmatprep.subr.bf16.mxu0 %v1722
    %1922 = vmatpush1.bf16.msra.mxu0 %v1721
    %1923 = vmatprep.subr.bf16.mxu0 %v1718
    %1924 = vmatpush1.bf16.msra.mxu0 %v1717
    %1925 = vmatprep.subr.bf16.mxu0 %v1778
    %1926 = vmatpush2.bf16.msra.mxu0 %v1777
    %1927 = vmatprep.subr.bf16.mxu0 %v1774
    %1928 = vmatpush2.bf16.msra.mxu0 %v1773
    %1929 = vmatprep.subr.bf16.mxu0 %v1770
    %1930 = vmatpush2.bf16.msra.mxu0 %v1769
    %1931 = vmatprep.subr.bf16.mxu0 %v1766
    %1932 = vmatpush2.bf16.msra.mxu0 %v1765
    %1933 = vmatprep.subr.bf16.mxu0 %v1762
    %1934 = vmatpush2.bf16.msra.mxu0 %v1761
    %1935 = vmatprep.subr.bf16.mxu0 %v1758
    %1936 = vmatpush2.bf16.msra.mxu0 %v1757
    %1937 = vmatprep.subr.bf16.mxu0 %v1754
    %1938 = vmatpush2.bf16.msra.mxu0 %v1753
    %1939 = vmatprep.subr.bf16.mxu0 %v1750
    %1940 = vmatpush2.bf16.msra.mxu0 %v1749
    %1941 = vmatprep.mubr.bf16.mxu0 %v1309
    %1942 = vmatmul.mubr.bf16.gmra.mxu0 %v160
    %v1943 = vpop.f32.mrf.mxu0
    %v1944 = vadd.f32 %v1412, %v1943
    %v1945 = vpop.f32.mrf.mxu0
    %v1946 = vadd.f32 %v1416, %v1945
    %v1947 = vpop.f32.mrf.mxu0
    %v1948 = vpop.f32.mrf.mxu0
    %1949 = vdwg.mxu0
    %1950 = vmatprep.subr.bf16.mxu0 %v1810
    %1951 = vmatpush1.bf16.msra.mxu0 %v1809
    %1952 = vmatprep.subr.bf16.mxu0 %v1806
    %1953 = vmatpush1.bf16.msra.mxu0 %v1805
    %1954 = vmatprep.subr.bf16.mxu0 %v1802
    %1955 = vmatpush1.bf16.msra.mxu0 %v1801
    %1956 = vmatprep.subr.bf16.mxu0 %v1798
    %1957 = vmatpush1.bf16.msra.mxu0 %v1797
    %1958 = vmatprep.subr.bf16.mxu0 %v1794
    %1959 = vmatpush1.bf16.msra.mxu0 %v1793
    %1960 = vmatprep.subr.bf16.mxu0 %v1790
    %1961 = vmatpush1.bf16.msra.mxu0 %v1789
    %1962 = vmatprep.subr.bf16.mxu0 %v1786
    %1963 = vmatpush1.bf16.msra.mxu0 %v1785
    %1964 = vmatprep.subr.bf16.mxu0 %v1782
    %1965 = vmatpush1.bf16.msra.mxu0 %v1781
    %1966 = vmatprep.subr.bf16.mxu0 0
    %1967 = vmatpush2.bf16.msra.mxu0 0
    %1968 = vmatprep.subr.bf16.mxu0 0
    %1969 = vmatpush2.bf16.msra.mxu0 0
    %1970 = vmatprep.subr.bf16.mxu0 0
    %1971 = vmatpush2.bf16.msra.mxu0 0
    %1972 = vmatprep.subr.bf16.mxu0 0
    %1973 = vmatpush2.bf16.msra.mxu0 0
    %1974 = vmatprep.subr.bf16.mxu0 0
    %1975 = vmatpush2.bf16.msra.mxu0 0
    %1976 = vmatprep.subr.bf16.mxu0 0
    %1977 = vmatpush2.bf16.msra.mxu0 0
    %1978 = vmatprep.subr.bf16.mxu0 0
    %1979 = vmatpush2.bf16.msra.mxu0 0
    %1980 = vmatprep.subr.bf16.mxu0 0
    %1981 = vmatpush2.bf16.msra.mxu0 0
    %1982 = vmatprep.mubr.bf16.mxu0 0
    %1983 = vmatmul.mubr.bf16.gmra.mxu0 %v161
    %v1984 = vpop.f32.mrf.mxu0
    %v1985 = vadd.f32 %v1944, %v1984
    %v1986 = vpop.f32.mrf.mxu0
    %v1987 = vadd.f32 %v1946, %v1986
    %v1988 = vpop.f32.mrf.mxu0
    %v1989 = vpop.f32.mrf.mxu0
    %1990 = vdwg.mxu0
    %1991 = vmatprep.subr.bf16.mxu0 %v1748
    %1992 = vmatpush1.bf16.msra.mxu0 %v1747
    %1993 = vmatprep.subr.bf16.mxu0 %v1744
    %1994 = vmatpush1.bf16.msra.mxu0 %v1743
    %1995 = vmatprep.subr.bf16.mxu0 %v1740
    %1996 = vmatpush1.bf16.msra.mxu0 %v1739
    %1997 = vmatprep.subr.bf16.mxu0 %v1736
    %1998 = vmatpush1.bf16.msra.mxu0 %v1735
    %1999 = vmatprep.subr.bf16.mxu0 %v1732
    %2000 = vmatpush1.bf16.msra.mxu0 %v1731
    %2001 = vmatprep.subr.bf16.mxu0 %v1728
    %2002 = vmatpush1.bf16.msra.mxu0 %v1727
    %2003 = vmatprep.subr.bf16.mxu0 %v1724
    %2004 = vmatpush1.bf16.msra.mxu0 %v1723
    %2005 = vmatprep.subr.bf16.mxu0 %v1720
    %2006 = vmatpush1.bf16.msra.mxu0 %v1719
    %2007 = vmatprep.subr.bf16.mxu0 %v1780
    %2008 = vmatpush2.bf16.msra.mxu0 %v1779
    %2009 = vmatprep.subr.bf16.mxu0 %v1776
    %2010 = vmatpush2.bf16.msra.mxu0 %v1775
    %2011 = vmatprep.subr.bf16.mxu0 %v1772
    %2012 = vmatpush2.bf16.msra.mxu0 %v1771
    %2013 = vmatprep.subr.bf16.mxu0 %v1768
    %2014 = vmatpush2.bf16.msra.mxu0 %v1767
    %2015 = vmatprep.subr.bf16.mxu0 %v1764
    %2016 = vmatpush2.bf16.msra.mxu0 %v1763
    %2017 = vmatprep.subr.bf16.mxu0 %v1760
    %2018 = vmatpush2.bf16.msra.mxu0 %v1759
    %2019 = vmatprep.subr.bf16.mxu0 %v1756
    %2020 = vmatpush2.bf16.msra.mxu0 %v1755
    %2021 = vmatprep.subr.bf16.mxu0 %v1752
    %2022 = vmatpush2.bf16.msra.mxu0 %v1751
    %2023 = vmatprep.mubr.bf16.mxu0 %v1309
    %2024 = vmatmul.mubr.bf16.gmra.mxu0 %v160
    %v2025 = vpop.f32.mrf.mxu0
    %v2026 = vadd.f32 %v1420, %v2025
    %v2027 = vpop.f32.mrf.mxu0
    %v2028 = vadd.f32 %v1424, %v2027
    %v2029 = vpop.f32.mrf.mxu0
    %v2030 = vpop.f32.mrf.mxu0
    %2031 = vdwg.mxu0
    %2032 = vmatprep.subr.bf16.mxu0 %v1812
    %2033 = vmatpush1.bf16.msra.mxu0 %v1811
    %2034 = vmatprep.subr.bf16.mxu0 %v1808
    %2035 = vmatpush1.bf16.msra.mxu0 %v1807
    %2036 = vmatprep.subr.bf16.mxu0 %v1804
    %2037 = vmatpush1.bf16.msra.mxu0 %v1803
    %2038 = vmatprep.subr.bf16.mxu0 %v1800
    %2039 = vmatpush1.bf16.msra.mxu0 %v1799
    %2040 = vmatprep.subr.bf16.mxu0 %v1796
    %2041 = vmatpush1.bf16.msra.mxu0 %v1795
    %2042 = vmatprep.subr.bf16.mxu0 %v1792
    %2043 = vmatpush1.bf16.msra.mxu0 %v1791
    %2044 = vmatprep.subr.bf16.mxu0 %v1788
    %2045 = vmatpush1.bf16.msra.mxu0 %v1787
    %2046 = vmatprep.subr.bf16.mxu0 %v1784
    %2047 = vmatpush1.bf16.msra.mxu0 %v1783
    %2048 = vmatprep.subr.bf16.mxu0 0
    %2049 = vmatpush2.bf16.msra.mxu0 0
    %2050 = vmatprep.subr.bf16.mxu0 0
    %2051 = vmatpush2.bf16.msra.mxu0 0
    %2052 = vmatprep.subr.bf16.mxu0 0
    %2053 = vmatpush2.bf16.msra.mxu0 0
    %2054 = vmatprep.subr.bf16.mxu0 0
    %2055 = vmatpush2.bf16.msra.mxu0 0
    %2056 = vmatprep.subr.bf16.mxu0 0
    %2057 = vmatpush2.bf16.msra.mxu0 0
    %2058 = vmatprep.subr.bf16.mxu0 0
    %2059 = vmatpush2.bf16.msra.mxu0 0
    %2060 = vmatprep.subr.bf16.mxu0 0
    %2061 = vmatpush2.bf16.msra.mxu0 0
    %2062 = vmatprep.subr.bf16.mxu0 0
    %2063 = vmatpush2.bf16.msra.mxu0 0
    %2064 = vmatprep.mubr.bf16.mxu0 0
    %2065 = vmatmul.mubr.bf16.gmra.mxu0 %v161
    %v2066 = vpop.f32.mrf.mxu0
    %v2067 = vadd.f32 %v2026, %v2066
    %v2068 = vpop.f32.mrf.mxu0
    %v2069 = vadd.f32 %v2028, %v2068
    %v2070 = vpop.f32.mrf.mxu0
    %v2071 = vpop.f32.mrf.mxu0
    %2072 = vdwg.mxu0
    %v2073 = vxor.u32 %v1985, 2147483648
    %v2074 = vmul.f32 %v2073, 1.442695
    %v2075 = vpow.pop %v2074
    %v2076 = vadd.f32 %v2075, 1.0
    %v2077 = vrcp.pop %v2076
    %v2078 = vmul.f32 1.0, %v2077
    %v2079 = vxor.u32 %v1987, 2147483648
    %v2080 = vmul.f32 %v2079, 1.442695
    %v2081 = vpow.pop %v2080
    %v2082 = vadd.f32 %v2081, 1.0
    %v2083 = vrcp.pop %v2082
    %v2084 = vmul.f32 1.0, %v2083
    %v2085 = vtanh.pop %v2067
    %v2086 = vxor.u32 %v2069, 2147483648
    %v2087 = vmul.f32 %v2086, 1.442695
    %v2088 = vpow.pop %v2087
    %v2089 = vadd.f32 %v2088, 1.0
    %v2090 = vrcp.pop %v2089
    %v2091 = vmul.f32 1.0, %v2090
    %v2092 = vmul.f32 %v2084, %v151
    %v2093 = vmul.f32 %v2078, %v2085
    %v2094 = vadd.f32 %v2092, %v2093
    %v2095 = vtanh.pop %v2094
    %v2096 = vmul.f32 %v2091, %v2095
    %v2097 = vpack.c.bf16 %v2096, %v2096
    %v2098 = vld [vmem:[#allocation14] sm:$0xf]
    %v2099 = vld [vmem:[#allocation14 + $0x4] sm:$0xf]
    %v2100 = vld [vmem:[#allocation14 + $0x8] sm:$0xf]
    %v2101 = vld [vmem:[#allocation14 + $0xc] sm:$0xf]
    %v2102 = vld [vmem:[#allocation14 + $0x10] sm:$0xf]
    %v2103 = vld [vmem:[#allocation14 + $0x14] sm:$0xf]
    %v2104 = vld [vmem:[#allocation14 + $0x18] sm:$0xf]
    %v2105 = vld [vmem:[#allocation14 + $0x1c] sm:$0xf]
    %v2106 = vld [vmem:[#allocation14 + $0x20] sm:$0xf]
    %v2107 = vld [vmem:[#allocation14 + $0x24] sm:$0xf]
    %v2108 = vld [vmem:[#allocation14 + $0x28] sm:$0xf]
    %v2109 = vld [vmem:[#allocation14 + $0x2c] sm:$0xf]
    %v2110 = vld [vmem:[#allocation14 + $0x30] sm:$0xf]
    %v2111 = vld [vmem:[#allocation14 + $0x34] sm:$0xf]
    %v2112 = vld [vmem:[#allocation14 + $0x38] sm:$0xf]
    %v2113 = vld [vmem:[#allocation14 + $0x3c] sm:$0xf]
    %v2114 = vld [vmem:[#allocation14 + $0x40] sm:$0xf]
    %v2115 = vld [vmem:[#allocation14 + $0x44] sm:$0xf]
    %v2116 = vld [vmem:[#allocation14 + $0x48] sm:$0xf]
    %v2117 = vld [vmem:[#allocation14 + $0x4c] sm:$0xf]
    %v2118 = vld [vmem:[#allocation14 + $0x50] sm:$0xf]
    %v2119 = vld [vmem:[#allocation14 + $0x54] sm:$0xf]
    %v2120 = vld [vmem:[#allocation14 + $0x58] sm:$0xf]
    %v2121 = vld [vmem:[#allocation14 + $0x5c] sm:$0xf]
    %v2122 = vld [vmem:[#allocation14 + $0x60] sm:$0xf]
    %v2123 = vld [vmem:[#allocation14 + $0x64] sm:$0xf]
    %v2124 = vld [vmem:[#allocation14 + $0x68] sm:$0xf]
    %v2125 = vld [vmem:[#allocation14 + $0x6c] sm:$0xf]
    %v2126 = vld [vmem:[#allocation14 + $0x70] sm:$0xf]
    %v2127 = vld [vmem:[#allocation14 + $0x74] sm:$0xf]
    %v2128 = vld [vmem:[#allocation14 + $0x78] sm:$0xf]
    %v2129 = vld [vmem:[#allocation14 + $0x7c] sm:$0xf]
    %v2130 = vld [vmem:[#allocation14 + $0x80] sm:$0xf]
    %v2131 = vld [vmem:[#allocation14 + $0x84] sm:$0xf]
    %v2132 = vld [vmem:[#allocation14 + $0x88] sm:$0xf]
    %v2133 = vld [vmem:[#allocation14 + $0x8c] sm:$0xf]
    %v2134 = vld [vmem:[#allocation14 + $0x90] sm:$0xf]
    %v2135 = vld [vmem:[#allocation14 + $0x94] sm:$0xf]
    %v2136 = vld [vmem:[#allocation14 + $0x98] sm:$0xf]
    %v2137 = vld [vmem:[#allocation14 + $0x9c] sm:$0xf]
    %v2138 = vld [vmem:[#allocation14 + $0xa0] sm:$0xf]
    %v2139 = vld [vmem:[#allocation14 + $0xa4] sm:$0xf]
    %v2140 = vld [vmem:[#allocation14 + $0xa8] sm:$0xf]
    %v2141 = vld [vmem:[#allocation14 + $0xac] sm:$0xf]
    %v2142 = vld [vmem:[#allocation14 + $0xb0] sm:$0xf]
    %v2143 = vld [vmem:[#allocation14 + $0xb4] sm:$0xf]
    %v2144 = vld [vmem:[#allocation14 + $0xb8] sm:$0xf]
    %v2145 = vld [vmem:[#allocation14 + $0xbc] sm:$0xf]
    %v2146 = vld [vmem:[%s11] sm:$0x1]
    %v2148 = vlaneseq
    %v2149 = vshrl.u32 %v2148, 7
    %v2150 = vsub.s32 0, %v2149
    %v2151 = vrot.slane %v2146, %v2150
    %v2201 = vunpack.c.l.b16 %v2098
    %v2202 = vunpack.c.l.b16 %v2099
    %v2203 = vunpack.c.l.b16 %v2100
    %v2204 = vunpack.c.l.b16 %v2101
    %v2205 = vunpack.c.l.b16 %v2102
    %v2206 = vunpack.c.l.b16 %v2103
    %v2207 = vunpack.c.l.b16 %v2104
    %v2208 = vunpack.c.l.b16 %v2105
    %v2209 = vunpack.c.l.b16 %v2106
    %v2210 = vunpack.c.l.b16 %v2107
    %v2211 = vunpack.c.l.b16 %v2108
    %v2212 = vunpack.c.l.b16 %v2109
    %v2213 = vunpack.c.l.b16 %v2110
    %v2214 = vunpack.c.l.b16 %v2111
    %v2215 = vunpack.c.l.b16 %v2112
    %v2216 = vunpack.c.l.b16 %v2113
    %v2217 = vunpack.c.l.b16 %v2114
    %v2218 = vunpack.c.l.b16 %v2115
    %v2219 = vunpack.c.l.b16 %v2116
    %v2220 = vunpack.c.l.b16 %v2117
    %v2221 = vunpack.c.l.b16 %v2118
    %v2222 = vunpack.c.l.b16 %v2119
    %v2223 = vunpack.c.l.b16 %v2120
    %v2224 = vunpack.c.l.b16 %v2121
    %v2225 = vunpack.c.l.b16 %v2122
    %v2226 = vunpack.c.l.b16 %v2123
    %v2227 = vunpack.c.l.b16 %v2124
    %v2228 = vunpack.c.l.b16 %v2125
    %v2229 = vunpack.c.l.b16 %v2126
    %v2230 = vunpack.c.l.b16 %v2127
    %v2231 = vunpack.c.l.b16 %v2128
    %v2232 = vunpack.c.l.b16 %v2129
    %v2233 = vunpack.c.l.b16 %v2130
    %v2234 = vunpack.c.l.b16 %v2131
    %v2235 = vunpack.c.l.b16 %v2132
    %v2236 = vunpack.c.l.b16 %v2133
    %v2237 = vunpack.c.l.b16 %v2134
    %v2238 = vunpack.c.l.b16 %v2135
    %v2239 = vunpack.c.l.b16 %v2136
    %v2240 = vunpack.c.l.b16 %v2137
    %v2241 = vunpack.c.l.b16 %v2138
    %v2242 = vunpack.c.l.b16 %v2139
    %v2243 = vunpack.c.l.b16 %v2140
    %v2244 = vunpack.c.l.b16 %v2141
    %v2245 = vunpack.c.l.b16 %v2142
    %v2246 = vunpack.c.l.b16 %v2143
    %v2247 = vunpack.c.l.b16 %v2144
    %v2248 = vunpack.c.l.b16 %v2145
    %v2249 = vpack.c.b16 %v2202, %v2201
    %v2250 = vpack.c.b16 %v2204, %v2203
    %v2251 = vpack.c.b16 %v2206, %v2205
    %v2252 = vpack.c.b16 %v2208, %v2207
    %v2253 = vpack.c.b16 %v2210, %v2209
    %v2254 = vpack.c.b16 %v2212, %v2211
    %v2255 = vpack.c.b16 %v2214, %v2213
    %v2256 = vpack.c.b16 %v2216, %v2215
    %v2257 = vpack.c.b16 %v2218, %v2217
    %v2258 = vpack.c.b16 %v2220, %v2219
    %v2259 = vpack.c.b16 %v2222, %v2221
    %v2260 = vpack.c.b16 %v2224, %v2223
    %v2261 = vpack.c.b16 %v2226, %v2225
    %v2262 = vpack.c.b16 %v2228, %v2227
    %v2263 = vpack.c.b16 %v2230, %v2229
    %v2264 = vpack.c.b16 %v2232, %v2231
    %v2265 = vpack.c.b16 %v2234, %v2233
    %v2266 = vpack.c.b16 %v2236, %v2235
    %v2267 = vpack.c.b16 %v2238, %v2237
    %v2268 = vpack.c.b16 %v2240, %v2239
    %v2269 = vpack.c.b16 %v2242, %v2241
    %v2270 = vpack.c.b16 %v2244, %v2243
    %v2271 = vpack.c.b16 %v2246, %v2245
    %v2272 = vpack.c.b16 %v2248, %v2247
    %2297 = vmatprep.subr.bf16.mxu0 0
    %2298 = vmatpush1.bf16.msra.mxu0 %v2256
    %2299 = vmatprep.subr.bf16.mxu0 0
    %2300 = vmatpush1.bf16.msra.mxu0 %v2255
    %2301 = vmatprep.subr.bf16.mxu0 0
    %2302 = vmatpush1.bf16.msra.mxu0 %v2254
    %2303 = vmatprep.subr.bf16.mxu0 0
    %2304 = vmatpush1.bf16.msra.mxu0 %v2253
    %2305 = vmatprep.subr.bf16.mxu0 0
    %2306 = vmatpush1.bf16.msra.mxu0 %v2252
    %2307 = vmatprep.subr.bf16.mxu0 0
    %2308 = vmatpush1.bf16.msra.mxu0 %v2251
    %2309 = vmatprep.subr.bf16.mxu0 0
    %2310 = vmatpush1.bf16.msra.mxu0 %v2250
    %2311 = vmatprep.subr.bf16.mxu0 0
    %2312 = vmatpush1.bf16.msra.mxu0 %v2249
    %2313 = vmatprep.subr.bf16.mxu0 0
    %2314 = vmatpush2.bf16.msra.mxu0 %v2264
    %2315 = vmatprep.subr.bf16.mxu0 0
    %2316 = vmatpush2.bf16.msra.mxu0 %v2263
    %2317 = vmatprep.subr.bf16.mxu0 0
    %2318 = vmatpush2.bf16.msra.mxu0 %v2262
    %2319 = vmatprep.subr.bf16.mxu0 0
    %2320 = vmatpush2.bf16.msra.mxu0 %v2261
    %2321 = vmatprep.subr.bf16.mxu0 0
    %2322 = vmatpush2.bf16.msra.mxu0 %v2260
    %2323 = vmatprep.subr.bf16.mxu0 0
    %2324 = vmatpush2.bf16.msra.mxu0 %v2259
    %2325 = vmatprep.subr.bf16.mxu0 0
    %2326 = vmatpush2.bf16.msra.mxu0 %v2258
    %2327 = vmatprep.subr.bf16.mxu0 0
    %2328 = vmatpush2.bf16.msra.mxu0 %v2257
    %2329 = vmatprep.mubr.bf16.mxu0 %v1309
    %2330 = vmatmul.mubr.bf16.gmra.mxu0 %v2097
    %v2331 = vpop.f32.mrf.mxu0
    %v2332 = vadd.f32 %v2151, %v2331
    %v2333 = vpop.f32.mrf.mxu0
    %v2334 = vpop.f32.mrf.mxu0
    %v2335 = vpop.f32.mrf.mxu0
    %2336 = vdwg.mxu0
    %2337 = vmatprep.subr.bf16.mxu0 0
    %2338 = vmatpush1.bf16.msra.mxu0 %v2272
    %2339 = vmatprep.subr.bf16.mxu0 0
    %2340 = vmatpush1.bf16.msra.mxu0 %v2271
    %2341 = vmatprep.subr.bf16.mxu0 0
    %2342 = vmatpush1.bf16.msra.mxu0 %v2270
    %2343 = vmatprep.subr.bf16.mxu0 0
    %2344 = vmatpush1.bf16.msra.mxu0 %v2269
    %2345 = vmatprep.subr.bf16.mxu0 0
    %2346 = vmatpush1.bf16.msra.mxu0 %v2268
    %2347 = vmatprep.subr.bf16.mxu0 0
    %2348 = vmatpush1.bf16.msra.mxu0 %v2267
    %2349 = vmatprep.subr.bf16.mxu0 0
    %2350 = vmatpush1.bf16.msra.mxu0 %v2266
    %2351 = vmatprep.subr.bf16.mxu0 0
    %2352 = vmatpush1.bf16.msra.mxu0 %v2265
    %2353 = vmatprep.subr.bf16.mxu0 0
    %2354 = vmatpush2.bf16.msra.mxu0 0
    %2355 = vmatprep.subr.bf16.mxu0 0
    %2356 = vmatpush2.bf16.msra.mxu0 0
    %2357 = vmatprep.subr.bf16.mxu0 0
    %2358 = vmatpush2.bf16.msra.mxu0 0
    %2359 = vmatprep.subr.bf16.mxu0 0
    %2360 = vmatpush2.bf16.msra.mxu0 0
    %2361 = vmatprep.subr.bf16.mxu0 0
    %2362 = vmatpush2.bf16.msra.mxu0 0
    %2363 = vmatprep.subr.bf16.mxu0 0
    %2364 = vmatpush2.bf16.msra.mxu0 0
    %2365 = vmatprep.subr.bf16.mxu0 0
    %2366 = vmatpush2.bf16.msra.mxu0 0
    %2367 = vmatprep.subr.bf16.mxu0 0
    %2368 = vmatpush2.bf16.msra.mxu0 0
    %2369 = vmatprep.mubr.bf16.mxu0 0
    %2370 = vmatmul.mubr.bf16.gmra.mxu0 %v160
    %v2371 = vpop.f32.mrf.mxu0
    %v2372 = vadd.f32 %v2332, %v2371
    %v2373 = vpop.f32.mrf.mxu0
    %v2374 = vpop.f32.mrf.mxu0
    %v2375 = vpop.f32.mrf.mxu0
    %2376 = vdwg.mxu0
    %2377 = vst [vmem:[#allocation16] sm:$0xff] %v2372
    %2378 = vst [vmem:[#allocation17] sm:$0xff] %v2096
    %2379 = vst [vmem:[#allocation19] sm:$0xff] %v2094
    // Predicated region
    $region82: #{tpu_custom_call.1} parent=1 // pred_check
      _
    $region83: #{tpu_custom_call.1} parent=1 // pred_check_branch
      %2381 = sbr.rel (0) target = $region85
    $region84: #{tpu_custom_call.1} parent=1 // pred_region
      %s2383 = ssub.s32 128, 128
      %2384 = vsyncadd [#allocation4], %s2383
      %s2386 = sshll.u32 [#allocation16], 4
      %s2387 = int_to_ptr.vmem [resolvable:$true] %s2386
      %2389 = dma.vmem_to_hbm [thread:$0]  %s2387, 128, %s12, [#allocation4]
    $region85: #{tpu_custom_call.1} parent=1 // pred_fallthru
      _
    // Predicated region
    $region86: #{tpu_custom_call.1} parent=1 // pred_check
      _
    $region87: #{tpu_custom_call.1} parent=1 // pred_check_branch
      %2391 = sbr.rel (0) target = $region89
    $region88: #{tpu_custom_call.1} parent=1 // pred_region
      %s2393 = ssub.s32 128, 128
      %2394 = vsyncadd [#allocation18], %s2393
      %s2396 = sshll.u32 [#allocation17], 4
      %s2397 = int_to_ptr.vmem [resolvable:$true] %s2396
      %2399 = dma.vmem_to_hbm [thread:$0]  %s2397, 128, %s13, [#allocation18]
    $region89: #{tpu_custom_call.1} parent=1 // pred_fallthru
      _
    // Predicated region
    $region90: #{tpu_custom_call.1} parent=1 // pred_check
      _
    $region91: #{tpu_custom_call.1} parent=1 // pred_check_branch
      %2401 = sbr.rel (0) target = $region93
    $region92: #{tpu_custom_call.1} parent=1 // pred_region
      %s2403 = ssub.s32 128, 128
      %2404 = vsyncadd [#allocation18], %s2403
      %s2406 = sshll.u32 [#allocation19], 4
      %s2407 = int_to_ptr.vmem [resolvable:$true] %s2406
      %2409 = dma.vmem_to_hbm [thread:$0]  %s2407, 128, %s14, [#allocation18]
    $region93: #{tpu_custom_call.1} parent=1 // pred_fallthru
      _
    // Predicated region
    $region94: #{tpu_custom_call.1} parent=1 // pred_check
      _
    $region95: #{tpu_custom_call.1} parent=1 // pred_check_branch
      %2411 = sbr.rel (0) target = $region97
    $region96: #{tpu_custom_call.1} parent=1 // pred_region
      %2412 = dma.done [#allocation4], 128
    $region97: #{tpu_custom_call.1} parent=1 // pred_fallthru
      _
    // Predicated region
    $region98: #{tpu_custom_call.1} parent=1 // pred_check
      _
    $region99: #{tpu_custom_call.1} parent=1 // pred_check_branch
      %2414 = sbr.rel (0) target = $region101
    $region100: #{tpu_custom_call.1} parent=1 // pred_region
      %2415 = dma.done [#allocation18], 128
    $region101: #{tpu_custom_call.1} parent=1 // pred_fallthru
      _
    // Predicated region
    $region102: #{tpu_custom_call.1} parent=1 // pred_check
      _
    $region103: #{tpu_custom_call.1} parent=1 // pred_check_branch
      %2417 = sbr.rel (0) target = $region105
    $region104: #{tpu_custom_call.1} parent=1 // pred_region
      %2418 = dma.done [#allocation18], 128
    $region105: #{tpu_custom_call.1} parent=1 // pred_fallthru
      _
    %2419 = vsyncpa [#allocation3], 1
    %2420 = vsyncpa [#allocation6], 1
    %2421 = vsyncpa [#allocation9], 1
    %2422 = vsyncpa [#allocation12], 1
    %2423 = vsyncpa [#allocation15], 1
    %2424 = vsyncpa [#allocation4], 1
    %2425 = vsyncpa [#allocation18], 1

// kernel: tpu_custom_call.1
$region0: #{tpu_custom_call.1}
  #allocation0 [shape = 'u32[]', space=smem, size = 0x4, offset = 0x4, fixed_abs, tag = 'smem constant byte address 0x4 - core index']
  #allocation1 [shape = 'u32[144,128]{1,0:T(1,128)}', space=vmem, size = 0x12000, scoped, tag = 'internal scratch']
  %s0 = inlined_call_operand.hbm [shape: f32[8,128], index: 0, kind: input, shape index: {}]
  %s1 = inlined_call_operand.hbm [shape: f32[8,128], index: 1, kind: input, shape index: {}]
  %s2 = inlined_call_operand.hbm [shape: bf16[8,128], index: 2, kind: input, shape index: {}]
  %s3 = inlined_call_operand.hbm [shape: bf16[8,8,128], index: 3, kind: input, shape index: {}]
  %s4 = inlined_call_operand.hbm [shape: bf16[128,128], index: 4, kind: input, shape index: {}]
  %s5 = inlined_call_operand.hbm [shape: bf16[128,128], index: 5, kind: input, shape index: {}]
  %s6 = inlined_call_operand.vmem [shape: f32[1,128], index: 6, kind: input, shape index: {}]
  %s7 = inlined_call_operand.vmem [shape: f32[1,128], index: 7, kind: input, shape index: {}]
  %s8 = inlined_call_operand.hbm [shape: bf16[384,512], index: 8, kind: input, shape index: {}]
  %s9 = inlined_call_operand.vmem [shape: f32[1,512], index: 9, kind: input, shape index: {}]
  %s10 = inlined_call_operand.hbm [shape: bf16[384,128], index: 10, kind: input, shape index: {}]
  %s11 = inlined_call_operand.vmem [shape: f32[1,128], index: 11, kind: input, shape index: {}]
  %s12 = inlined_call_operand.hbm [shape: f32[8,128], index: 12, kind: output, shape index: {0}]
  %s13 = inlined_call_operand.hbm [shape: f32[8,128], index: 13, kind: output, shape index: {1}]
  %s14 = inlined_call_operand.hbm [shape: f32[8,128], index: 14, kind: output, shape index: {2}]
  %15 = xla_tuple %s12, %s13, %s14
  %s16 = sld [smem:[#allocation0]]
  $region106: #{tpu_custom_call.1} parent=0
    _
  %s18 = ssub.s32 1, %s16
  %s19 = scalar_select 0, %s18, %s16
  $region1: #{tpu_custom_call.1} parent=0
    #allocation2 [shape = 'u8[4096]{0}', space=vmem, size = 0x1000, scoped, tag = 'input window, operand 0, single buffered']
    #allocation3 [shape = 's32[1]{0}', space=sflag, size = 0x4, scoped, tag = 'scoped memory for tpu_custom_call.1']
    #allocation4 [shape = 's32[1]{0}', space=sflag, size = 0x4, scoped, tag = 'scoped memory for tpu_custom_call.1']
    #allocation5 [shape = 'u8[4096]{0}', space=vmem, size = 0x1000, scoped, tag = 'input window, operand 1, single buffered']
    #allocation6 [shape = 's32[1]{0}', space=sflag, size = 0x4, scoped, tag = 'scoped memory for tpu_custom_call.1']
    #allocation7 [shape = 'u8[2048]{0}', space=vmem, size = 0x800, scoped, tag = 'input window, operand 2, single buffered']
    #allocation8 [shape = 'u8[16384]{0}', space=vmem, size = 0x4000, scoped, tag = 'input window, operand 3, single buffered']
    #allocation9 [shape = 's32[1]{0}', space=sflag, size = 0x4, scoped, tag = 'scoped memory for tpu_custom_call.1']
    #allocation10 [shape = 'u8[32768]{0}', space=vmem, size = 0x8000, scoped, tag = 'input window, operand 4, single buffered']
    #allocation11 [shape = 'u8[32768]{0}', space=vmem, size = 0x8000, scoped, tag = 'input window, operand 5, single buffered']
    #allocation12 [shape = 's32[1]{0}', space=sflag, size = 0x4, scoped, tag = 'scoped memory for tpu_custom_call.1']
    #allocation13 [shape = 'u8[393216]{0}', space=vmem, size = 0x60000, scoped, tag = 'input window, operand 8, single buffered']
    #allocation14 [shape = 'u8[98304]{0}', space=vmem, size = 0x18000, scoped, tag = 'input window, operand 10, single buffered']
    #allocation15 [shape = 's32[1]{0}', space=sflag, size = 0x4, scoped, tag = 'scoped memory for tpu_custom_call.1']
    #allocation16 [shape = 'u8[4096]{0}', space=vmem, size = 0x1000, scoped, tag = 'output window, operand 0, single buffered']
    #allocation17 [shape = 'u8[4096]{0}', space=vmem, size = 0x1000, scoped, tag = 'output window, operand 1, single buffered']
    #allocation18 [shape = 's32[1]{0}', space=sflag, size = 0x4, scoped, tag = 'scoped memory for tpu_custom_call.1']
    #allocation19 [shape = 'u8[4096]{0}', space=vmem, size = 0x1000, scoped, tag = 'output window, operand 2, single buffered']
    %20 = vsyncpa [#allocation3], 0
    %21 = vsyncpa [#allocation6], 0
    %22 = vsyncpa [#allocation9], 0
    %23 = vsyncpa [#allocation12], 0
    %24 = vsyncpa [#allocation15], 0
    %25 = vsyncpa [#allocation4], 0
    %26 = vsyncpa [#allocation18], 0
    // Predicated region
    $region2: #{tpu_custom_call.1} parent=1 // pred_check
      _
    $region3: #{tpu_custom_call.1} parent=1 // pred_check_branch
      %28 = sbr.rel (0) target = $region5
    $region4: #{tpu_custom_call.1} parent=1 // pred_region
      %s30 = ssub.s32 128, 128
      %31 = vsyncadd [#allocation3], %s30
      %s33 = sshll.u32 [#allocation2], 4
      %s34 = int_to_ptr.vmem [resolvable:$true] %s33
      %36 = dma.hbm_to_vmem [thread:$0]  %s0, 128, %s34, [#allocation3]
    $region5: #{tpu_custom_call.1} parent=1 // pred_fallthru
      _
    // Predicated region
    $region6: #{tpu_custom_call.1} parent=1 // pred_check
      _
    $region7: #{tpu_custom_call.1} parent=1 // pred_check_branch
      %38 = sbr.rel (0) target = $region9
    $region8: #{tpu_custom_call.1} parent=1 // pred_region
      %s40 = ssub.s32 128, 128
      %41 = vsyncadd [#allocation6], %s40
      %s43 = sshll.u32 [#allocation5], 4
      %s44 = int_to_ptr.vmem [resolvable:$true] %s43
      %46 = dma.hbm_to_vmem [thread:$0]  %s1, 128, %s44, [#allocation6]
    $region9: #{tpu_custom_call.1} parent=1 // pred_fallthru
      _
    // Predicated region
    $region10: #{tpu_custom_call.1} parent=1 // pred_check
      _
    $region11: #{tpu_custom_call.1} parent=1 // pred_check_branch
      %48 = sbr.rel (0) target = $region13
    $region12: #{tpu_custom_call.1} parent=1 // pred_region
      %s50 = ssub.s32 64, 64
      %51 = vsyncadd [#allocation6], %s50
      %s53 = sshll.u32 [#allocation7], 4
      %s54 = int_to_ptr.vmem [resolvable:$true] %s53
      %56 = dma.hbm_to_vmem [thread:$0]  %s2, 64, %s54, [#allocation6]
    $region13: #{tpu_custom_call.1} parent=1 // pred_fallthru
      _
    // Predicated region
    $region14: #{tpu_custom_call.1} parent=1 // pred_check
      _
    $region15: #{tpu_custom_call.1} parent=1 // pred_check_branch
      %58 = sbr.rel (0) target = $region17
    $region16: #{tpu_custom_call.1} parent=1 // pred_region
      %s60 = ssub.s32 512, 512
      %61 = vsyncadd [#allocation9], %s60
      %s62 = sshll.u32 [#allocation8], 4
      %s63 = int_to_ptr.vmem [resolvable:$true] %s62
      %68 = dma.hbm_to_vmem [thread:$0]  %s3, 512, %s63, [#allocation9], 64, 64, 4
    $region17: #{tpu_custom_call.1} parent=1 // pred_fallthru
      _
    // Predicated region
    $region18: #{tpu_custom_call.1} parent=1 // pred_check
      _
    $region19: #{tpu_custom_call.1} parent=1 // pred_check_branch
      %70 = sbr.rel (0) target = $region21
    $region20: #{tpu_custom_call.1} parent=1 // pred_region
      %s72 = ssub.s32 1024, 1024
      %73 = vsyncadd [#allocation9], %s72
      %s74 = sshll.u32 [#allocation10], 4
      %s75 = int_to_ptr.vmem [resolvable:$true] %s74
      %80 = dma.hbm_to_vmem [thread:$0]  %s4, 1024, %s75, [#allocation9], 64, 64, 4
    $region21: #{tpu_custom_call.1} parent=1 // pred_fallthru
      _
    // Predicated region
    $region22: #{tpu_custom_call.1} parent=1 // pred_check
      _
    $region23: #{tpu_custom_call.1} parent=1 // pred_check_branch
      %82 = sbr.rel (0) target = $region25
    $region24: #{tpu_custom_call.1} parent=1 // pred_region
      %s84 = ssub.s32 1024, 1024
      %85 = vsyncadd [#allocation12], %s84
      %s86 = sshll.u32 [#allocation11], 4
      %s87 = int_to_ptr.vmem [resolvable:$true] %s86
      %92 = dma.hbm_to_vmem [thread:$0]  %s5, 1024, %s87, [#allocation12], 64, 64, 4
    $region25: #{tpu_custom_call.1} parent=1 // pred_fallthru
      _
    // Predicated region
    $region26: #{tpu_custom_call.1} parent=1 // pred_check
      _
    $region27: #{tpu_custom_call.1} parent=1 // pred_check_branch
      %94 = sbr.rel (0) target = $region29
    $region28: #{tpu_custom_call.1} parent=1 // pred_region
      _
    $region29: #{tpu_custom_call.1} parent=1 // pred_fallthru
      _
    // Predicated region
    $region30: #{tpu_custom_call.1} parent=1 // pred_check
      _
    $region31: #{tpu_custom_call.1} parent=1 // pred_check_branch
      %96 = sbr.rel (0) target = $region33
    $region32: #{tpu_custom_call.1} parent=1 // pred_region
      _
    $region33: #{tpu_custom_call.1} parent=1 // pred_fallthru
      _
    // Predicated region
    $region34: #{tpu_custom_call.1} parent=1 // pred_check
      _
    $region35: #{tpu_custom_call.1} parent=1 // pred_check_branch
      %98 = sbr.rel (0) target = $region37
    $region36: #{tpu_custom_call.1} parent=1 // pred_region
      %s100 = ssub.s32 12288, 12288
      %101 = vsyncadd [#allocation12], %s100
      %s102 = sshll.u32 [#allocation13], 4
      %s103 = int_to_ptr.vmem [resolvable:$true] %s102
      %108 = dma.hbm_to_vmem [thread:$0]  %s8, 12288, %s103, [#allocation12], 256, 256, 16
    $region37: #{tpu_custom_call.1} parent=1 // pred_fallthru
      _
    // Predicated region
    $region38: #{tpu_custom_call.1} parent=1 // pred_check
      _
    $region39: #{tpu_custom_call.1} parent=1 // pred_check_branch
      %110 = sbr.rel (0) target = $region41
    $region40: #{tpu_custom_call.1} parent=1 // pred_region
      _
    $region41: #{tpu_custom_call.1} parent=1 // pred_fallthru
      _
    // Predicated region
    $region42: #{tpu_custom_call.1} parent=1 // pred_check
      _
    $region43: #{tpu_custom_call.1} parent=1 // pred_check_branch
      %112 = sbr.rel (0) target = $region45
    $region44: #{tpu_custom_call.1} parent=1 // pred_region
      %s114 = ssub.s32 3072, 3072
      %115 = vsyncadd [#allocation15], %s114
      %s116 = sshll.u32 [#allocation14], 4
      %s117 = int_to_ptr.vmem [resolvable:$true] %s116
      %122 = dma.hbm_to_vmem [thread:$0]  %s10, 3072, %s117, [#allocation15], 64, 64, 4
    $region45: #{tpu_custom_call.1} parent=1 // pred_fallthru
      _
    // Predicated region
    $region46: #{tpu_custom_call.1} parent=1 // pred_check
      _
    $region47: #{tpu_custom_call.1} parent=1 // pred_check_branch
      %124 = sbr.rel (0) target = $region49
    $region48: #{tpu_custom_call.1} parent=1 // pred_region
      _
    $region49: #{tpu_custom_call.1} parent=1 // pred_fallthru
      _
    // Predicated region
    $region50: #{tpu_custom_call.1} parent=1 // pred_check
      _
    $region51: #{tpu_custom_call.1} parent=1 // pred_check_branch
      %126 = sbr.rel (0) target = $region53
    $region52: #{tpu_custom_call.1} parent=1 // pred_region
      %127 = dma.done [#allocation3], 128
    $region53: #{tpu_custom_call.1} parent=1 // pred_fallthru
      _
    // Predicated region
    $region54: #{tpu_custom_call.1} parent=1 // pred_check
      _
    $region55: #{tpu_custom_call.1} parent=1 // pred_check_branch
      %129 = sbr.rel (0) target = $region57
    $region56: #{tpu_custom_call.1} parent=1 // pred_region
      %130 = dma.done [#allocation6], 128
    $region57: #{tpu_custom_call.1} parent=1 // pred_fallthru
      _
    // Predicated region
    $region58: #{tpu_custom_call.1} parent=1 // pred_check
      _
    $region59: #{tpu_custom_call.1} parent=1 // pred_check_branch
      %132 = sbr.rel (0) target = $region61
    $region60: #{tpu_custom_call.1} parent=1 // pred_region
      %133 = dma.done [#allocation6], 64
    $region61: #{tpu_custom_call.1} parent=1 // pred_fallthru
      _
    // Predicated region
    $region62: #{tpu_custom_call.1} parent=1 // pred_check
      _
    $region63: #{tpu_custom_call.1} parent=1 // pred_check_branch
      %135 = sbr.rel (0) target = $region65
    $region64: #{tpu_custom_call.1} parent=1 // pred_region
      %136 = dma.done [#allocation9], 512
    $region65: #{tpu_custom_call.1} parent=1 // pred_fallthru
      _
    // Predicated region
    $region66: #{tpu_custom_call.1} parent=1 // pred_check
      _
    $region67: #{tpu_custom_call.1} parent=1 // pred_check_branch
      %138 = sbr.rel (0) target = $region69
    $region68: #{tpu_custom_call.1} parent=1 // pred_region
      %139 = dma.done [#allocation9], 1024
    $region69: #{tpu_custom_call.1} parent=1 // pred_fallthru
      _
    // Predicated region
    $region70: #{tpu_custom_call.1} parent=1 // pred_check
      _
    $region71: #{tpu_custom_call.1} parent=1 // pred_check_branch
      %141 = sbr.rel (0) target = $region73
    $region72: #{tpu_custom_call.1} parent=1 // pred_region
      %142 = dma.done [#allocation12], 1024
    $region73: #{tpu_custom_call.1} parent=1 // pred_fallthru
      _
    // Predicated region
    $region74: #{tpu_custom_call.1} parent=1 // pred_check
      _
    $region75: #{tpu_custom_call.1} parent=1 // pred_check_branch
      %144 = sbr.rel (0) target = $region77
    $region76: #{tpu_custom_call.1} parent=1 // pred_region
      %145 = dma.done [#allocation12], 12288
    $region77: #{tpu_custom_call.1} parent=1 // pred_fallthru
      _
    // Predicated region
    $region78: #{tpu_custom_call.1} parent=1 // pred_check
      _
    $region79: #{tpu_custom_call.1} parent=1 // pred_check_branch
      %147 = sbr.rel (0) target = $region81
    $region80: #{tpu_custom_call.1} parent=1 // pred_region
      %148 = dma.done [#allocation15], 3072
    $region81: #{tpu_custom_call.1} parent=1 // pred_fallthru
      _
    %v150 = vld [vmem:[#allocation2] sm:$0xff]
    %v151 = vld [vmem:[#allocation5] sm:$0xff]
    %v152 = vld [vmem:[#allocation8] sm:$0xf]
    %v153 = vld [vmem:[#allocation8 + $0x4] sm:$0xf]
    %v154 = vld [vmem:[#allocation8 + $0x8] sm:$0xf]
    %v155 = vld [vmem:[#allocation8 + $0xc] sm:$0xf]
    %v156 = vld [vmem:[#allocation8 + $0x10] sm:$0xf]
    %v157 = vld [vmem:[#allocation8 + $0x14] sm:$0xf]
    %v158 = vld [vmem:[#allocation8 + $0x18] sm:$0xf]
    %v159 = vld [vmem:[#allocation8 + $0x1c] sm:$0xf]
    %v160 = vld [vmem:[#allocation7] sm:$0xf]
    %v161 = vpack.c.bf16 %v150, %v150
    %v162 = vld [vmem:[#allocation11] sm:$0xf]
    %v163 = vld [vmem:[#allocation11 + $0x4] sm:$0xf]
    %v164 = vld [vmem:[#allocation11 + $0x8] sm:$0xf]
    %v165 = vld [vmem:[#allocation11 + $0xc] sm:$0xf]
    %v166 = vld [vmem:[#allocation11 + $0x10] sm:$0xf]
    %v167 = vld [vmem:[#allocation11 + $0x14] sm:$0xf]
    %v168 = vld [vmem:[#allocation11 + $0x18] sm:$0xf]
    %v169 = vld [vmem:[#allocation11 + $0x1c] sm:$0xf]
    %v170 = vld [vmem:[#allocation11 + $0x20] sm:$0xf]
    %v171 = vld [vmem:[#allocation11 + $0x24] sm:$0xf]
    %v172 = vld [vmem:[#allocation11 + $0x28] sm:$0xf]
    %v173 = vld [vmem:[#allocation11 + $0x2c] sm:$0xf]
    %v174 = vld [vmem:[#allocation11 + $0x30] sm:$0xf]
    %v175 = vld [vmem:[#allocation11 + $0x34] sm:$0xf]
    %v176 = vld [vmem:[#allocation11 + $0x38] sm:$0xf]
    %v177 = vld [vmem:[#allocation11 + $0x3c] sm:$0xf]
    %v186 = vunpack.c.l.b16 %v152
    %v187 = vunpack.c.l.b16 %v153
    %v188 = vunpack.c.l.b16 %v154
    %v189 = vunpack.c.l.b16 %v155
    %v190 = vunpack.c.l.b16 %v156
    %v191 = vunpack.c.l.b16 %v157
    %v192 = vunpack.c.l.b16 %v158
    %v193 = vunpack.c.l.b16 %v159
    %v194 = vpack.c.b16 %v187, %v186
    %v195 = vpack.c.b16 %v189, %v188
    %v196 = vpack.c.b16 %v191, %v190
    %v197 = vpack.c.b16 %v193, %v192
    %v218 = vunpack.c.l.b16 %v162
    %v219 = vunpack.c.l.b16 %v163
    %v220 = vunpack.c.l.b16 %v164
    %v221 = vunpack.c.l.b16 %v165
    %v222 = vunpack.c.l.b16 %v166
    %v223 = vunpack.c.l.b16 %v167
    %v224 = vunpack.c.l.b16 %v168
    %v225 = vunpack.c.l.b16 %v169
    %v226 = vunpack.c.l.b16 %v170
    %v227 = vunpack.c.l.b16 %v171
    %v228 = vunpack.c.l.b16 %v172
    %v229 = vunpack.c.l.b16 %v173
    %v230 = vunpack.c.l.b16 %v174
    %v231 = vunpack.c.l.b16 %v175
    %v232 = vunpack.c.l.b16 %v176
    %v233 = vunpack.c.l.b16 %v177
    %v234 = vpack.c.b16 %v219, %v218
    %v235 = vpack.c.b16 %v221, %v220
    %v236 = vpack.c.b16 %v223, %v222
    %v237 = vpack.c.b16 %v225, %v224
    %v238 = vpack.c.b16 %v227, %v226
    %v239 = vpack.c.b16 %v229, %v228
    %v240 = vpack.c.b16 %v231, %v230
    %v241 = vpack.c.b16 %v233, %v232
    %250 = vmatprep.subr.bf16.mxu0 0
    %251 = vmatpush1.bf16.msra.mxu0 %v241
    %252 = vmatprep.subr.bf16.mxu0 0
    %253 = vmatpush1.bf16.msra.mxu0 %v240
    %254 = vmatprep.subr.bf16.mxu0 0
    %255 = vmatpush1.bf16.msra.mxu0 %v239
    %256 = vmatprep.subr.bf16.mxu0 0
    %257 = vmatpush1.bf16.msra.mxu0 %v238
    %258 = vmatprep.subr.bf16.mxu0 0
    %259 = vmatpush1.bf16.msra.mxu0 %v237
    %260 = vmatprep.subr.bf16.mxu0 0
    %261 = vmatpush1.bf16.msra.mxu0 %v236
    %262 = vmatprep.subr.bf16.mxu0 0
    %263 = vmatpush1.bf16.msra.mxu0 %v235
    %264 = vmatprep.subr.bf16.mxu0 0
    %265 = vmatpush1.bf16.msra.mxu0 %v234
    %266 = vmatprep.subr.bf16.mxu0 0
    %267 = vmatpush2.bf16.msra.mxu0 0
    %268 = vmatprep.subr.bf16.mxu0 0
    %269 = vmatpush2.bf16.msra.mxu0 0
    %270 = vmatprep.subr.bf16.mxu0 0
    %271 = vmatpush2.bf16.msra.mxu0 0
    %272 = vmatprep.subr.bf16.mxu0 0
    %273 = vmatpush2.bf16.msra.mxu0 0
    %274 = vmatprep.subr.bf16.mxu0 0
    %275 = vmatpush2.bf16.msra.mxu0 0
    %276 = vmatprep.subr.bf16.mxu0 0
    %277 = vmatpush2.bf16.msra.mxu0 0
    %278 = vmatprep.subr.bf16.mxu0 0
    %279 = vmatpush2.bf16.msra.mxu0 0
    %280 = vmatprep.subr.bf16.mxu0 0
    %281 = vmatpush2.bf16.msra.mxu0 0
    %282 = vmatprep.mubr.bf16.mxu0 0
    %283 = vmatmul.mubr.bf16.gmra.mxu0 %v194
    %v284 = vpop.f32.mrf.mxu0
    %v285 = vadd.f32 0.0, %v284
    %v286 = vpop.f32.mrf.mxu0
    %v287 = vpop.f32.mrf.mxu0
    %v288 = vadd.f32 0.0, %v287
    %v289 = vpop.f32.mrf.mxu0
    %290 = vmatprep.mubr.bf16.mxu0 0
    %291 = vmatmul.mubr.bf16.gmra.mxu0 %v195
    %v292 = vpop.f32.mrf.mxu0
    %v293 = vadd.f32 0.0, %v292
    %v294 = vpop.f32.mrf.mxu0
    %v295 = vpop.f32.mrf.mxu0
    %v296 = vadd.f32 0.0, %v295
    %v297 = vpop.f32.mrf.mxu0
    %298 = vmatprep.mubr.bf16.mxu0 0
    %299 = vmatmul.mubr.bf16.gmra.mxu0 %v196
    %v300 = vpop.f32.mrf.mxu0
    %v301 = vadd.f32 0.0, %v300
    %v302 = vpop.f32.mrf.mxu0
    %v303 = vpop.f32.mrf.mxu0
    %v304 = vadd.f32 0.0, %v303
    %v305 = vpop.f32.mrf.mxu0
    %306 = vmatprep.mubr.bf16.mxu0 0
    %307 = vmatmul.mubr.bf16.gmra.mxu0 %v197
    %v308 = vpop.f32.mrf.mxu0
    %v309 = vadd.f32 0.0, %v308
    %v310 = vpop.f32.mrf.mxu0
    %v311 = vpop.f32.mrf.mxu0
    %v312 = vadd.f32 0.0, %v311
    %v313 = vpop.f32.mrf.mxu0
    %314 = vdwg.mxu0
    %v315 = vld [vmem:[#allocation10] sm:$0xf]
    %v316 = vld [vmem:[#allocation10 + $0x4] sm:$0xf]
    %v317 = vld [vmem:[#allocation10 + $0x8] sm:$0xf]
    %v318 = vld [vmem:[#allocation10 + $0xc] sm:$0xf]
    %v319 = vld [vmem:[#allocation10 + $0x10] sm:$0xf]
    %v320 = vld [vmem:[#allocation10 + $0x14] sm:$0xf]
    %v321 = vld [vmem:[#allocation10 + $0x18] sm:$0xf]
    %v322 = vld [vmem:[#allocation10 + $0x1c] sm:$0xf]
    %v323 = vld [vmem:[#allocation10 + $0x20] sm:$0xf]
    %v324 = vld [vmem:[#allocation10 + $0x24] sm:$0xf]
    %v325 = vld [vmem:[#allocation10 + $0x28] sm:$0xf]
    %v326 = vld [vmem:[#allocation10 + $0x2c] sm:$0xf]
    %v327 = vld [vmem:[#allocation10 + $0x30] sm:$0xf]
    %v328 = vld [vmem:[#allocation10 + $0x34] sm:$0xf]
    %v329 = vld [vmem:[#allocation10 + $0x38] sm:$0xf]
    %v330 = vld [vmem:[#allocation10 + $0x3c] sm:$0xf]
    %v331 = vld [vmem:[%s6] sm:$0x1]
    %v333 = vlaneseq
    %v334 = vshrl.u32 %v333, 7
    %v335 = vsub.s32 0, %v334
    %v336 = vrot.slane %v331, %v335
    %v354 = vunpack.c.l.b16 %v315
    %v355 = vunpack.c.l.b16 %v316
    %v356 = vunpack.c.l.b16 %v317
    %v357 = vunpack.c.l.b16 %v318
    %v358 = vunpack.c.l.b16 %v319
    %v359 = vunpack.c.l.b16 %v320
    %v360 = vunpack.c.l.b16 %v321
    %v361 = vunpack.c.l.b16 %v322
    %v362 = vunpack.c.l.b16 %v323
    %v363 = vunpack.c.l.b16 %v324
    %v364 = vunpack.c.l.b16 %v325
    %v365 = vunpack.c.l.b16 %v326
    %v366 = vunpack.c.l.b16 %v327
    %v367 = vunpack.c.l.b16 %v328
    %v368 = vunpack.c.l.b16 %v329
    %v369 = vunpack.c.l.b16 %v330
    %v370 = vpack.c.b16 %v355, %v354
    %v371 = vpack.c.b16 %v357, %v356
    %v372 = vpack.c.b16 %v359, %v358
    %v373 = vpack.c.b16 %v361, %v360
    %v374 = vpack.c.b16 %v363, %v362
    %v375 = vpack.c.b16 %v365, %v364
    %v376 = vpack.c.b16 %v367, %v366
    %v377 = vpack.c.b16 %v369, %v368
    %386 = vmatprep.subr.bf16.mxu0 0
    %387 = vmatpush1.bf16.msra.mxu0 %v377
    %388 = vmatprep.subr.bf16.mxu0 0
    %389 = vmatpush1.bf16.msra.mxu0 %v376
    %390 = vmatprep.subr.bf16.mxu0 0
    %391 = vmatpush1.bf16.msra.mxu0 %v375
    %392 = vmatprep.subr.bf16.mxu0 0
    %393 = vmatpush1.bf16.msra.mxu0 %v374
    %394 = vmatprep.subr.bf16.mxu0 0
    %395 = vmatpush1.bf16.msra.mxu0 %v373
    %396 = vmatprep.subr.bf16.mxu0 0
    %397 = vmatpush1.bf16.msra.mxu0 %v372
    %398 = vmatprep.subr.bf16.mxu0 0
    %399 = vmatpush1.bf16.msra.mxu0 %v371
    %400 = vmatprep.subr.bf16.mxu0 0
    %401 = vmatpush1.bf16.msra.mxu0 %v370
    %402 = vmatprep.subr.bf16.mxu0 0
    %403 = vmatpush2.bf16.msra.mxu0 0
    %404 = vmatprep.subr.bf16.mxu0 0
    %405 = vmatpush2.bf16.msra.mxu0 0
    %406 = vmatprep.subr.bf16.mxu0 0
    %407 = vmatpush2.bf16.msra.mxu0 0
    %408 = vmatprep.subr.bf16.mxu0 0
    %409 = vmatpush2.bf16.msra.mxu0 0
    %410 = vmatprep.subr.bf16.mxu0 0
    %411 = vmatpush2.bf16.msra.mxu0 0
    %412 = vmatprep.subr.bf16.mxu0 0
    %413 = vmatpush2.bf16.msra.mxu0 0
    %414 = vmatprep.subr.bf16.mxu0 0
    %415 = vmatpush2.bf16.msra.mxu0 0
    %416 = vmatprep.subr.bf16.mxu0 0
    %417 = vmatpush2.bf16.msra.mxu0 0
    %418 = vmatprep.mubr.bf16.mxu0 0
    %419 = vmatmul.mubr.bf16.gmra.mxu0 %v161
    %v420 = vpop.f32.mrf.mxu0
    %v421 = vadd.f32 %v336, %v420
    %v422 = vpop.f32.mrf.mxu0
    %v423 = vpop.f32.mrf.mxu0
    %v424 = vpop.f32.mrf.mxu0
    %425 = vdwg.mxu0
    %v427 = vcombine.high %v421, %v421
    %v429 = vunpack.c.l.s4 1966171168
    %v430 = vunpack.c.0.s8 %v429
    %v431 = vlaneseq
    %v432 = vshrl.u32 %v431, 7
    %v433 = vsub.s32 %v430, %v432
    %v434 = vrot.slane %v421, %v433
    %v436 = vunpack.c.l.s4 1966171168
    %v437 = vunpack.c.0.s8 %v436
    %v438 = vlaneseq
    %v439 = vshrl.u32 %v438, 7
    %v440 = vsub.s32 %v437, %v439
    %v441 = vrot.slane %v427, %v440
    %v442 = vcombine.high %v434, %v434
    %v443 = vcombine.high %v441, %v441
    %v445 = vunpack.c.l.s4 1966171168
    %v446 = vunpack.c.0.s8 %v445
    %v447 = vlaneseq
    %v448 = vshrl.u32 %v447, 7
    %v449 = vsub.s32 %v446, %v448
    %v450 = vrot.slane %v434, %v449
    %v452 = vunpack.c.l.s4 1966171168
    %v453 = vunpack.c.0.s8 %v452
    %v454 = vlaneseq
    %v455 = vshrl.u32 %v454, 7
    %v456 = vsub.s32 %v453, %v455
    %v457 = vrot.slane %v441, %v456
    %v459 = vunpack.c.l.s4 1966171168
    %v460 = vunpack.c.0.s8 %v459
    %v461 = vlaneseq
    %v462 = vshrl.u32 %v461, 7
    %v463 = vsub.s32 %v460, %v462
    %v464 = vrot.slane %v442, %v463
    %v466 = vunpack.c.l.s4 1966171168
    %v467 = vunpack.c.0.s8 %v466
    %v468 = vlaneseq
    %v469 = vshrl.u32 %v468, 7
    %v470 = vsub.s32 %v467, %v469
    %v471 = vrot.slane %v443, %v470
    %v472 = vcombine.high %v450, %v450
    %v473 = vcombine.high %v457, %v457
    %v474 = vcombine.high %v464, %v464
    %v475 = vcombine.high %v471, %v471
    %v476 = vlaneseq
    %v477 = vshrl.u32 %v476, 7
    %v478 = vsub.s32 0, %v477
    %v479 = vrot.slane %v450, %v478
    %v480 = vlaneseq
    %v481 = vshrl.u32 %v480, 7
    %v482 = vsub.s32 0, %v481
    %v483 = vrot.slane %v464, %v482
    %v484 = vlaneseq
    %v485 = vshrl.u32 %v484, 7
    %v486 = vsub.s32 0, %v485
    %v487 = vrot.slane %v472, %v486
    %v488 = vlaneseq
    %v489 = vshrl.u32 %v488, 7
    %v490 = vsub.s32 0, %v489
    %v491 = vrot.slane %v474, %v490
    %v492 = vlaneseq
    %v493 = vshrl.u32 %v492, 7
    %v494 = vsub.s32 0, %v493
    %v495 = vrot.slane %v457, %v494
    %v496 = vlaneseq
    %v497 = vshrl.u32 %v496, 7
    %v498 = vsub.s32 0, %v497
    %v499 = vrot.slane %v471, %v498
    %v500 = vlaneseq
    %v501 = vshrl.u32 %v500, 7
    %v502 = vsub.s32 0, %v501
    %v503 = vrot.slane %v473, %v502
    %v504 = vlaneseq
    %v505 = vshrl.u32 %v504, 7
    %v506 = vsub.s32 0, %v505
    %v507 = vrot.slane %v475, %v506
    %v516 = vadd.f32 %v285, %v479
    %v517 = vadd.f32 %v288, %v483
    %v518 = vadd.f32 %v293, %v487
    %v519 = vadd.f32 %v296, %v491
    %v520 = vadd.f32 %v301, %v495
    %v521 = vadd.f32 %v304, %v499
    %v522 = vadd.f32 %v309, %v503
    %v523 = vadd.f32 %v312, %v507
    %v524 = vtanh.pop %v516
    %v525 = vtanh.pop %v517
    %v526 = vtanh.pop %v518
    %v527 = vtanh.pop %v519
    %v528 = vtanh.pop %v520
    %v529 = vtanh.pop %v521
    %v530 = vtanh.pop %v522
    %v531 = vtanh.pop %v523
    %v532 = vld [vmem:[%s7] sm:$0x1]
    %v534 = vlaneseq
    %v535 = vshrl.u32 %v534, 7
    %v536 = vsub.s32 0, %v535
    %v537 = vrot.slane %v532, %v536
    %v539 = vmul.f32 %v524, %v537
    %v540 = vmul.f32 %v525, %v537
    %v541 = vmul.f32 %v526, %v537
    %v542 = vmul.f32 %v527, %v537
    %v543 = vmul.f32 %v528, %v537
    %v544 = vmul.f32 %v529, %v537
    %v545 = vmul.f32 %v530, %v537
    %v546 = vmul.f32 %v531, %v537
    %547 = vadd.xlane.f32.xlu0 %v539
    %v548 = vpop.xlane.xlu0 %547
    %549 = vadd.xlane.f32.xlu0 %v540
    %v550 = vpop.xlane.xlu0 %549
    %551 = vadd.xlane.f32.xlu0 %v541
    %v552 = vpop.xlane.xlu0 %551
    %553 = vadd.xlane.f32.xlu0 %v542
    %v554 = vpop.xlane.xlu0 %553
    %555 = vadd.xlane.f32.xlu0 %v543
    %v556 = vpop.xlane.xlu0 %555
    %557 = vadd.xlane.f32.xlu0 %v544
    %v558 = vpop.xlane.xlu0 %557
    %559 = vadd.xlane.f32.xlu0 %v545
    %v560 = vpop.xlane.xlu0 %559
    %561 = vadd.xlane.f32.xlu0 %v546
    %v562 = vpop.xlane.xlu0 %561
    %v571 = vlaneseq
    %v572 = vand.u32 %v571, 127
    %v573 = vlaneseq
    %v574 = vshrl.u32 %v573, 7
    %v575 = vsub.s32 %v572, %v574
    %v576 = vrot.slane %v548, %v575
    %v577 = vlaneseq
    %v578 = vshrl.u32 %v577, 7
    %v579 = vsub.s32 %v572, %v578
    %v580 = vrot.slane %v550, %v579
    %v581 = vlaneseq
    %v582 = vshrl.u32 %v581, 7
    %v583 = vsub.s32 %v572, %v582
    %v584 = vrot.slane %v552, %v583
    %v585 = vlaneseq
    %v586 = vshrl.u32 %v585, 7
    %v587 = vsub.s32 %v572, %v586
    %v588 = vrot.slane %v554, %v587
    %v589 = vlaneseq
    %v590 = vshrl.u32 %v589, 7
    %v591 = vsub.s32 %v572, %v590
    %v592 = vrot.slane %v556, %v591
    %v593 = vlaneseq
    %v594 = vshrl.u32 %v593, 7
    %v595 = vsub.s32 %v572, %v594
    %v596 = vrot.slane %v558, %v595
    %v597 = vlaneseq
    %v598 = vshrl.u32 %v597, 7
    %v599 = vsub.s32 %v572, %v598
    %v600 = vrot.slane %v560, %v599
    %v601 = vlaneseq
    %v602 = vshrl.u32 %v601, 7
    %v603 = vsub.s32 %v572, %v602
    %v604 = vrot.slane %v562, %v603
    %vm605 = vcmask 1041409
    %v606 = vsel %vm605, %v580, %v576
    %vm607 = vcmask 1042434
    %v608 = vsel %vm607, %v584, %v606
    %vm609 = vcmask 1043459
    %v610 = vsel %vm609, %v588, %v608
    %vm611 = vcmask 1044484
    %v612 = vsel %vm611, %v592, %v610
    %vm613 = vcmask 1045509
    %v614 = vsel %vm613, %v596, %v612
    %vm615 = vcmask 1046534
    %v616 = vsel %vm615, %v600, %v614
    %vm617 = vcmask 1047559
    %v618 = vsel %vm617, %v604, %v616
    %vm620 = vcmask 64512
    %v621 = vsel %vm620, %v618, -inf
    %622 = vmax.xlane.f32.xlu0 %v621
    %v623 = vpop.xlane.xlu0 %622
    %v625 = vlaneseq
    %v626 = vshrl.u32 %v625, 7
    %v627 = vsub.s32 0, %v626
    %v628 = vrot.slane %v623, %v627
    %v629 = vlaneseq
    %v630 = vshrl.u32 %v629, 7
    %v631 = vsub.s32 1, %v630
    %v632 = vrot.slane %v623, %v631
    %v633 = vlaneseq
    %v634 = vshrl.u32 %v633, 7
    %v635 = vsub.s32 2, %v634
    %v636 = vrot.slane %v623, %v635
    %v637 = vlaneseq
    %v638 = vshrl.u32 %v637, 7
    %v639 = vsub.s32 3, %v638
    %v640 = vrot.slane %v623, %v639
    %v641 = vlaneseq
    %v642 = vshrl.u32 %v641, 7
    %v643 = vsub.s32 4, %v642
    %v644 = vrot.slane %v623, %v643
    %v645 = vlaneseq
    %v646 = vshrl.u32 %v645, 7
    %v647 = vsub.s32 5, %v646
    %v648 = vrot.slane %v623, %v647
    %v649 = vlaneseq
    %v650 = vshrl.u32 %v649, 7
    %v651 = vsub.s32 6, %v650
    %v652 = vrot.slane %v623, %v651
    %v653 = vlaneseq
    %v654 = vshrl.u32 %v653, 7
    %v655 = vsub.s32 7, %v654
    %v656 = vrot.slane %v623, %v655
    %v665 = vsub.f32 %v548, %v628
    %v666 = vsub.f32 %v550, %v632
    %v667 = vsub.f32 %v552, %v636
    %v668 = vsub.f32 %v554, %v640
    %v669 = vsub.f32 %v556, %v644
    %v670 = vsub.f32 %v558, %v648
    %v671 = vsub.f32 %v560, %v652
    %v672 = vsub.f32 %v562, %v656
    %v673 = vmul.f32 %v665, 1.442695
    %v674 = vpow.pop %v673
    %v675 = vmul.f32 %v666, 1.442695
    %v676 = vpow.pop %v675
    %v677 = vmul.f32 %v667, 1.442695
    %v678 = vpow.pop %v677
    %v679 = vmul.f32 %v668, 1.442695
    %v680 = vpow.pop %v679
    %v681 = vmul.f32 %v669, 1.442695
    %v682 = vpow.pop %v681
    %v683 = vmul.f32 %v670, 1.442695
    %v684 = vpow.pop %v683
    %v685 = vmul.f32 %v671, 1.442695
    %v686 = vpow.pop %v685
    %v687 = vmul.f32 %v672, 1.442695
    %v688 = vpow.pop %v687
    %697 = vset.pattern.permute.xlu0 0
    %698 = vperm.xlu0 %697, %v674
    %v699 = vpop.permute.xlu0 %698
    %700 = vset.pattern.permute.xlu0 0
    %701 = vperm.xlu0 %700, %v676
    %v702 = vpop.permute.xlu0 %701
    %703 = vset.pattern.permute.xlu0 0
    %704 = vperm.xlu0 %703, %v678
    %v705 = vpop.permute.xlu0 %704
    %706 = vset.pattern.permute.xlu0 0
    %707 = vperm.xlu0 %706, %v680
    %v708 = vpop.permute.xlu0 %707
    %709 = vset.pattern.permute.xlu0 0
    %710 = vperm.xlu0 %709, %v682
    %v711 = vpop.permute.xlu0 %710
    %712 = vset.pattern.permute.xlu0 0
    %713 = vperm.xlu0 %712, %v684
    %v714 = vpop.permute.xlu0 %713
    %715 = vset.pattern.permute.xlu0 0
    %716 = vperm.xlu0 %715, %v686
    %v717 = vpop.permute.xlu0 %716
    %718 = vset.pattern.permute.xlu0 0
    %719 = vperm.xlu0 %718, %v688
    %v720 = vpop.permute.xlu0 %719
    %v721 = vlaneseq
    %v722 = vshrl.u32 %v721, 7
    %v723 = vsub.s32 %v572, %v722
    %v724 = vrot.slane %v699, %v723
    %v725 = vlaneseq
    %v726 = vshrl.u32 %v725, 7
    %v727 = vsub.s32 %v572, %v726
    %v728 = vrot.slane %v702, %v727
    %v729 = vlaneseq
    %v730 = vshrl.u32 %v729, 7
    %v731 = vsub.s32 %v572, %v730
    %v732 = vrot.slane %v705, %v731
    %v733 = vlaneseq
    %v734 = vshrl.u32 %v733, 7
    %v735 = vsub.s32 %v572, %v734
    %v736 = vrot.slane %v708, %v735
    %v737 = vlaneseq
    %v738 = vshrl.u32 %v737, 7
    %v739 = vsub.s32 %v572, %v738
    %v740 = vrot.slane %v711, %v739
    %v741 = vlaneseq
    %v742 = vshrl.u32 %v741, 7
    %v743 = vsub.s32 %v572, %v742
    %v744 = vrot.slane %v714, %v743
    %v745 = vlaneseq
    %v746 = vshrl.u32 %v745, 7
    %v747 = vsub.s32 %v572, %v746
    %v748 = vrot.slane %v717, %v747
    %v749 = vlaneseq
    %v750 = vshrl.u32 %v749, 7
    %v751 = vsub.s32 %v572, %v750
    %v752 = vrot.slane %v720, %v751
    %v753 = vsel %vm605, %v728, %v724
    %v754 = vsel %vm607, %v732, %v753
    %v755 = vsel %vm609, %v736, %v754
    %v756 = vsel %vm611, %v740, %v755
    %v757 = vsel %vm613, %v744, %v756
    %v758 = vsel %vm615, %v748, %v757
    %v759 = vsel %vm617, %v752, %v758
    %v761 = vsel %vm620, %v759, 0.0
    %762 = vadd.xlane.f32.xlu0 %v761
    %v763 = vpop.xlane.xlu0 %762
    %v764 = vrcp.pop %v763
    %v766 = vlaneseq
    %v767 = vshrl.u32 %v766, 7
    %v768 = vsub.s32 0, %v767
    %v769 = vrot.slane %v764, %v768
    %v770 = vlaneseq
    %v771 = vshrl.u32 %v770, 7
    %v772 = vsub.s32 1, %v771
    %v773 = vrot.slane %v764, %v772
    %v774 = vlaneseq
    %v775 = vshrl.u32 %v774, 7
    %v776 = vsub.s32 2, %v775
    %v777 = vrot.slane %v764, %v776
    %v778 = vlaneseq
    %v779 = vshrl.u32 %v778, 7
    %v780 = vsub.s32 3, %v779
    %v781 = vrot.slane %v764, %v780
    %v782 = vlaneseq
    %v783 = vshrl.u32 %v782, 7
    %v784 = vsub.s32 4, %v783
    %v785 = vrot.slane %v764, %v784
    %v786 = vlaneseq
    %v787 = vshrl.u32 %v786, 7
    %v788 = vsub.s32 5, %v787
    %v789 = vrot.slane %v764, %v788
    %v790 = vlaneseq
    %v791 = vshrl.u32 %v790, 7
    %v792 = vsub.s32 6, %v791
    %v793 = vrot.slane %v764, %v792
    %v794 = vlaneseq
    %v795 = vshrl.u32 %v794, 7
    %v796 = vsub.s32 7, %v795
    %v797 = vrot.slane %v764, %v796
    %v806 = vmul.f32 %v674, %v769
    %v807 = vmul.f32 %v676, %v773
    %v808 = vmul.f32 %v678, %v777
    %v809 = vmul.f32 %v680, %v781
    %v810 = vmul.f32 %v682, %v785
    %v811 = vmul.f32 %v684, %v789
    %v812 = vmul.f32 %v686, %v793
    %v813 = vmul.f32 %v688, %v797
    %v814 = vpack.c.bf16 %v806, %v806
    %v815 = vpack.c.bf16 %v807, %v807
    %v816 = vpack.c.bf16 %v808, %v808
    %v817 = vpack.c.bf16 %v809, %v809
    %v818 = vpack.c.bf16 %v810, %v810
    %v819 = vpack.c.bf16 %v811, %v811
    %v820 = vpack.c.bf16 %v812, %v812
    %v821 = vpack.c.bf16 %v813, %v813
    %v823 = vunpack.c.l.b16 %v814
    %824 = vset.pattern.permute.xlu0 0
    %825 = vperm.xlu0 %824, %v823
    %v826 = vpop.permute.xlu0 %825
    %v827 = vlaneseq
    %v828 = vshrl.u32 %v827, 7
    %v829 = vsub.s32 %v572, %v828
    %v830 = vrot.slane %v826, %v829
    %v831 = vpack.c.b16 %v830, %v830
    %v833 = vsel %vm620, %v831, 0
    %vm835 = vcmask 1043456
    %v837 = vsel %vm835, %v152, 0
    %839 = vmatprep.subr.bf16.mxu0 0
    %840 = vmatpush1.bf16.msra.mxu0 0
    %841 = vmatprep.subr.bf16.mxu0 0
    %842 = vmatpush1.bf16.msra.mxu0 0
    %843 = vmatprep.subr.bf16.mxu0 0
    %844 = vmatpush1.bf16.msra.mxu0 0
    %845 = vmatprep.subr.bf16.mxu0 0
    %846 = vmatpush1.bf16.msra.mxu0 0
    %847 = vmatprep.subr.bf16.mxu0 0
    %848 = vmatpush1.bf16.msra.mxu0 0
    %849 = vmatprep.subr.bf16.mxu0 0
    %850 = vmatpush1.bf16.msra.mxu0 0
    %851 = vmatprep.subr.bf16.mxu0 0
    %852 = vmatpush1.bf16.msra.mxu0 0
    %853 = vmatprep.subr.bf16.mxu0 0
    %854 = vmatpush1.bf16.msra.mxu0 %v837
    %855 = vmatprep.subr.bf16.mxu0 0
    %856 = vmatpush2.bf16.msra.mxu0 0
    %857 = vmatprep.subr.bf16.mxu0 0
    %858 = vmatpush2.bf16.msra.mxu0 0
    %859 = vmatprep.subr.bf16.mxu0 0
    %860 = vmatpush2.bf16.msra.mxu0 0
    %861 = vmatprep.subr.bf16.mxu0 0
    %862 = vmatpush2.bf16.msra.mxu0 0
    %863 = vmatprep.subr.bf16.mxu0 0
    %864 = vmatpush2.bf16.msra.mxu0 0
    %865 = vmatprep.subr.bf16.mxu0 0
    %866 = vmatpush2.bf16.msra.mxu0 0
    %867 = vmatprep.subr.bf16.mxu0 0
    %868 = vmatpush2.bf16.msra.mxu0 0
    %869 = vmatprep.subr.bf16.mxu0 0
    %870 = vmatpush2.bf16.msra.mxu0 0
    %871 = vmatprep.mubr.bf16.mxu0 0
    %872 = vmatmul.mubr.bf16.gmra.mxu0 %v833
    %v873 = vpop.f32.mrf.mxu0
    %v874 = vadd.f32 0.0, %v873
    %v875 = vpop.f32.mrf.mxu0
    %v876 = vpop.f32.mrf.mxu0
    %v877 = vpop.f32.mrf.mxu0
    %878 = vdwg.mxu0
    %v880 = vunpack.c.l.b16 %v815
    %881 = vset.pattern.permute.xlu0 0
    %882 = vperm.xlu0 %881, %v880
    %v883 = vpop.permute.xlu0 %882
    %v884 = vlaneseq
    %v885 = vshrl.u32 %v884, 7
    %v886 = vsub.s32 %v572, %v885
    %v887 = vrot.slane %v883, %v886
    %v888 = vpack.c.b16 %v887, %v887
    %v890 = vsel %vm620, %v888, 0
    %v893 = vsel %vm835, %v153, 0
    %895 = vmatprep.subr.bf16.mxu0 0
    %896 = vmatpush1.bf16.msra.mxu0 0
    %897 = vmatprep.subr.bf16.mxu0 0
    %898 = vmatpush1.bf16.msra.mxu0 0
    %899 = vmatprep.subr.bf16.mxu0 0
    %900 = vmatpush1.bf16.msra.mxu0 0
    %901 = vmatprep.subr.bf16.mxu0 0
    %902 = vmatpush1.bf16.msra.mxu0 0
    %903 = vmatprep.subr.bf16.mxu0 0
    %904 = vmatpush1.bf16.msra.mxu0 0
    %905 = vmatprep.subr.bf16.mxu0 0
    %906 = vmatpush1.bf16.msra.mxu0 0
    %907 = vmatprep.subr.bf16.mxu0 0
    %908 = vmatpush1.bf16.msra.mxu0 0
    %909 = vmatprep.subr.bf16.mxu0 0
    %910 = vmatpush1.bf16.msra.mxu0 %v893
    %911 = vmatprep.subr.bf16.mxu0 0
    %912 = vmatpush2.bf16.msra.mxu0 0
    %913 = vmatprep.subr.bf16.mxu0 0
    %914 = vmatpush2.bf16.msra.mxu0 0
    %915 = vmatprep.subr.bf16.mxu0 0
    %916 = vmatpush2.bf16.msra.mxu0 0
    %917 = vmatprep.subr.bf16.mxu0 0
    %918 = vmatpush2.bf16.msra.mxu0 0
    %919 = vmatprep.subr.bf16.mxu0 0
    %920 = vmatpush2.bf16.msra.mxu0 0
    %921 = vmatprep.subr.bf16.mxu0 0
    %922 = vmatpush2.bf16.msra.mxu0 0
    %923 = vmatprep.subr.bf16.mxu0 0
    %924 = vmatpush2.bf16.msra.mxu0 0
    %925 = vmatprep.subr.bf16.mxu0 0
    %926 = vmatpush2.bf16.msra.mxu0 0
    %927 = vmatprep.mubr.bf16.mxu0 0
    %928 = vmatmul.mubr.bf16.gmra.mxu0 %v890
    %v929 = vpop.f32.mrf.mxu0
    %v930 = vadd.f32 0.0, %v929
    %v931 = vpop.f32.mrf.mxu0
    %v932 = vpop.f32.mrf.mxu0
    %v933 = vpop.f32.mrf.mxu0
    %934 = vdwg.mxu0
    %v936 = vunpack.c.l.b16 %v816
    %937 = vset.pattern.permute.xlu0 0
    %938 = vperm.xlu0 %937, %v936
    %v939 = vpop.permute.xlu0 %938
    %v940 = vlaneseq
    %v941 = vshrl.u32 %v940, 7
    %v942 = vsub.s32 %v572, %v941
    %v943 = vrot.slane %v939, %v942
    %v944 = vpack.c.b16 %v943, %v943
    %v946 = vsel %vm620, %v944, 0
    %v949 = vsel %vm835, %v154, 0
    %951 = vmatprep.subr.bf16.mxu0 0
    %952 = vmatpush1.bf16.msra.mxu0 0
    %953 = vmatprep.subr.bf16.mxu0 0
    %954 = vmatpush1.bf16.msra.mxu0 0
    %955 = vmatprep.subr.bf16.mxu0 0
    %956 = vmatpush1.bf16.msra.mxu0 0
    %957 = vmatprep.subr.bf16.mxu0 0
    %958 = vmatpush1.bf16.msra.mxu0 0
    %959 = vmatprep.subr.bf16.mxu0 0
    %960 = vmatpush1.bf16.msra.mxu0 0
    %961 = vmatprep.subr.bf16.mxu0 0
    %962 = vmatpush1.bf16.msra.mxu0 0
    %963 = vmatprep.subr.bf16.mxu0 0
    %964 = vmatpush1.bf16.msra.mxu0 0
    %965 = vmatprep.subr.bf16.mxu0 0
    %966 = vmatpush1.bf16.msra.mxu0 %v949
    %967 = vmatprep.subr.bf16.mxu0 0
    %968 = vmatpush2.bf16.msra.mxu0 0
    %969 = vmatprep.subr.bf16.mxu0 0
    %970 = vmatpush2.bf16.msra.mxu0 0
    %971 = vmatprep.subr.bf16.mxu0 0
    %972 = vmatpush2.bf16.msra.mxu0 0
    %973 = vmatprep.subr.bf16.mxu0 0
    %974 = vmatpush2.bf16.msra.mxu0 0
    %975 = vmatprep.subr.bf16.mxu0 0
    %976 = vmatpush2.bf16.msra.mxu0 0
    %977 = vmatprep.subr.bf16.mxu0 0
    %978 = vmatpush2.bf16.msra.mxu0 0
    %979 = vmatprep.subr.bf16.mxu0 0
    %980 = vmatpush2.bf16.msra.mxu0 0
    %981 = vmatprep.subr.bf16.mxu0 0
    %982 = vmatpush2.bf16.msra.mxu0 0
    %983 = vmatprep.mubr.bf16.mxu0 0
    %984 = vmatmul.mubr.bf16.gmra.mxu0 %v946
    %v985 = vpop.f32.mrf.mxu0
    %v986 = vadd.f32 0.0, %v985
    %v987 = vpop.f32.mrf.mxu0
    %v988 = vpop.f32.mrf.mxu0
    %v989 = vpop.f32.mrf.mxu0
    %990 = vdwg.mxu0
    %v992 = vunpack.c.l.b16 %v817
    %993 = vset.pattern.permute.xlu0 0
    %994 = vperm.xlu0 %993, %v992
    %v995 = vpop.permute.xlu0 %994
    %v996 = vlaneseq
    %v997 = vshrl.u32 %v996, 7
    %v998 = vsub.s32 %v572, %v997
    %v999 = vrot.slane %v995, %v998
    %v1000 = vpack.c.b16 %v999, %v999
    %v1002 = vsel %vm620, %v1000, 0
    %v1005 = vsel %vm835, %v155, 0
    %1007 = vmatprep.subr.bf16.mxu0 0
    %1008 = vmatpush1.bf16.msra.mxu0 0
    %1009 = vmatprep.subr.bf16.mxu0 0
    %1010 = vmatpush1.bf16.msra.mxu0 0
    %1011 = vmatprep.subr.bf16.mxu0 0
    %1012 = vmatpush1.bf16.msra.mxu0 0
    %1013 = vmatprep.subr.bf16.mxu0 0
    %1014 = vmatpush1.bf16.msra.mxu0 0
    %1015 = vmatprep.subr.bf16.mxu0 0
    %1016 = vmatpush1.bf16.msra.mxu0 0
    %1017 = vmatprep.subr.bf16.mxu0 0
    %1018 = vmatpush1.bf16.msra.mxu0 0
    %1019 = vmatprep.subr.bf16.mxu0 0
    %1020 = vmatpush1.bf16.msra.mxu0 0
    %1021 = vmatprep.subr.bf16.mxu0 0
    %1022 = vmatpush1.bf16.msra.mxu0 %v1005
    %1023 = vmatprep.subr.bf16.mxu0 0
    %1024 = vmatpush2.bf16.msra.mxu0 0
    %1025 = vmatprep.subr.bf16.mxu0 0
    %1026 = vmatpush2.bf16.msra.mxu0 0
    %1027 = vmatprep.subr.bf16.mxu0 0
    %1028 = vmatpush2.bf16.msra.mxu0 0
    %1029 = vmatprep.subr.bf16.mxu0 0
    %1030 = vmatpush2.bf16.msra.mxu0 0
    %1031 = vmatprep.subr.bf16.mxu0 0
    %1032 = vmatpush2.bf16.msra.mxu0 0
    %1033 = vmatprep.subr.bf16.mxu0 0
    %1034 = vmatpush2.bf16.msra.mxu0 0
    %1035 = vmatprep.subr.bf16.mxu0 0
    %1036 = vmatpush2.bf16.msra.mxu0 0
    %1037 = vmatprep.subr.bf16.mxu0 0
    %1038 = vmatpush2.bf16.msra.mxu0 0
    %1039 = vmatprep.mubr.bf16.mxu0 0
    %1040 = vmatmul.mubr.bf16.gmra.mxu0 %v1002
    %v1041 = vpop.f32.mrf.mxu0
    %v1042 = vadd.f32 0.0, %v1041
    %v1043 = vpop.f32.mrf.mxu0
    %v1044 = vpop.f32.mrf.mxu0
    %v1045 = vpop.f32.mrf.mxu0
    %1046 = vdwg.mxu0
    %v1048 = vunpack.c.l.b16 %v818
    %1049 = vset.pattern.permute.xlu0 0
    %1050 = vperm.xlu0 %1049, %v1048
    %v1051 = vpop.permute.xlu0 %1050
    %v1052 = vlaneseq
    %v1053 = vshrl.u32 %v1052, 7
    %v1054 = vsub.s32 %v572, %v1053
    %v1055 = vrot.slane %v1051, %v1054
    %v1056 = vpack.c.b16 %v1055, %v1055
    %v1058 = vsel %vm620, %v1056, 0
    %v1061 = vsel %vm835, %v156, 0
    %1063 = vmatprep.subr.bf16.mxu0 0
    %1064 = vmatpush1.bf16.msra.mxu0 0
    %1065 = vmatprep.subr.bf16.mxu0 0
    %1066 = vmatpush1.bf16.msra.mxu0 0
    %1067 = vmatprep.subr.bf16.mxu0 0
    %1068 = vmatpush1.bf16.msra.mxu0 0
    %1069 = vmatprep.subr.bf16.mxu0 0
    %1070 = vmatpush1.bf16.msra.mxu0 0
    %1071 = vmatprep.subr.bf16.mxu0 0
    %1072 = vmatpush1.bf16.msra.mxu0 0
    %1073 = vmatprep.subr.bf16.mxu0 0
    %1074 = vmatpush1.bf16.msra.mxu0 0
    %1075 = vmatprep.subr.bf16.mxu0 0
    %1076 = vmatpush1.bf16.msra.mxu0 0
    %1077 = vmatprep.subr.bf16.mxu0 0
    %1078 = vmatpush1.bf16.msra.mxu0 %v1061
    %1079 = vmatprep.subr.bf16.mxu0 0
    %1080 = vmatpush2.bf16.msra.mxu0 0
    %1081 = vmatprep.subr.bf16.mxu0 0
    %1082 = vmatpush2.bf16.msra.mxu0 0
    %1083 = vmatprep.subr.bf16.mxu0 0
    %1084 = vmatpush2.bf16.msra.mxu0 0
    %1085 = vmatprep.subr.bf16.mxu0 0
    %1086 = vmatpush2.bf16.msra.mxu0 0
    %1087 = vmatprep.subr.bf16.mxu0 0
    %1088 = vmatpush2.bf16.msra.mxu0 0
    %1089 = vmatprep.subr.bf16.mxu0 0
    %1090 = vmatpush2.bf16.msra.mxu0 0
    %1091 = vmatprep.subr.bf16.mxu0 0
    %1092 = vmatpush2.bf16.msra.mxu0 0
    %1093 = vmatprep.subr.bf16.mxu0 0
    %1094 = vmatpush2.bf16.msra.mxu0 0
    %1095 = vmatprep.mubr.bf16.mxu0 0
    %1096 = vmatmul.mubr.bf16.gmra.mxu0 %v1058
    %v1097 = vpop.f32.mrf.mxu0
    %v1098 = vadd.f32 0.0, %v1097
    %v1099 = vpop.f32.mrf.mxu0
    %v1100 = vpop.f32.mrf.mxu0
    %v1101 = vpop.f32.mrf.mxu0
    %1102 = vdwg.mxu0
    %v1104 = vunpack.c.l.b16 %v819
    %1105 = vset.pattern.permute.xlu0 0
    %1106 = vperm.xlu0 %1105, %v1104
    %v1107 = vpop.permute.xlu0 %1106
    %v1108 = vlaneseq
    %v1109 = vshrl.u32 %v1108, 7
    %v1110 = vsub.s32 %v572, %v1109
    %v1111 = vrot.slane %v1107, %v1110
    %v1112 = vpack.c.b16 %v1111, %v1111
    %v1114 = vsel %vm620, %v1112, 0
    %v1117 = vsel %vm835, %v157, 0
    %1119 = vmatprep.subr.bf16.mxu0 0
    %1120 = vmatpush1.bf16.msra.mxu0 0
    %1121 = vmatprep.subr.bf16.mxu0 0
    %1122 = vmatpush1.bf16.msra.mxu0 0
    %1123 = vmatprep.subr.bf16.mxu0 0
    %1124 = vmatpush1.bf16.msra.mxu0 0
    %1125 = vmatprep.subr.bf16.mxu0 0
    %1126 = vmatpush1.bf16.msra.mxu0 0
    %1127 = vmatprep.subr.bf16.mxu0 0
    %1128 = vmatpush1.bf16.msra.mxu0 0
    %1129 = vmatprep.subr.bf16.mxu0 0
    %1130 = vmatpush1.bf16.msra.mxu0 0
    %1131 = vmatprep.subr.bf16.mxu0 0
    %1132 = vmatpush1.bf16.msra.mxu0 0
    %1133 = vmatprep.subr.bf16.mxu0 0
    %1134 = vmatpush1.bf16.msra.mxu0 %v1117
    %1135 = vmatprep.subr.bf16.mxu0 0
    %1136 = vmatpush2.bf16.msra.mxu0 0
    %1137 = vmatprep.subr.bf16.mxu0 0
    %1138 = vmatpush2.bf16.msra.mxu0 0
    %1139 = vmatprep.subr.bf16.mxu0 0
    %1140 = vmatpush2.bf16.msra.mxu0 0
    %1141 = vmatprep.subr.bf16.mxu0 0
    %1142 = vmatpush2.bf16.msra.mxu0 0
    %1143 = vmatprep.subr.bf16.mxu0 0
    %1144 = vmatpush2.bf16.msra.mxu0 0
    %1145 = vmatprep.subr.bf16.mxu0 0
    %1146 = vmatpush2.bf16.msra.mxu0 0
    %1147 = vmatprep.subr.bf16.mxu0 0
    %1148 = vmatpush2.bf16.msra.mxu0 0
    %1149 = vmatprep.subr.bf16.mxu0 0
    %1150 = vmatpush2.bf16.msra.mxu0 0
    %1151 = vmatprep.mubr.bf16.mxu0 0
    %1152 = vmatmul.mubr.bf16.gmra.mxu0 %v1114
    %v1153 = vpop.f32.mrf.mxu0
    %v1154 = vadd.f32 0.0, %v1153
    %v1155 = vpop.f32.mrf.mxu0
    %v1156 = vpop.f32.mrf.mxu0
    %v1157 = vpop.f32.mrf.mxu0
    %1158 = vdwg.mxu0
    %v1160 = vunpack.c.l.b16 %v820
    %1161 = vset.pattern.permute.xlu0 0
    %1162 = vperm.xlu0 %1161, %v1160
    %v1163 = vpop.permute.xlu0 %1162
    %v1164 = vlaneseq
    %v1165 = vshrl.u32 %v1164, 7
    %v1166 = vsub.s32 %v572, %v1165
    %v1167 = vrot.slane %v1163, %v1166
    %v1168 = vpack.c.b16 %v1167, %v1167
    %v1170 = vsel %vm620, %v1168, 0
    %v1173 = vsel %vm835, %v158, 0
    %1175 = vmatprep.subr.bf16.mxu0 0
    %1176 = vmatpush1.bf16.msra.mxu0 0
    %1177 = vmatprep.subr.bf16.mxu0 0
    %1178 = vmatpush1.bf16.msra.mxu0 0
    %1179 = vmatprep.subr.bf16.mxu0 0
    %1180 = vmatpush1.bf16.msra.mxu0 0
    %1181 = vmatprep.subr.bf16.mxu0 0
    %1182 = vmatpush1.bf16.msra.mxu0 0
    %1183 = vmatprep.subr.bf16.mxu0 0
    %1184 = vmatpush1.bf16.msra.mxu0 0
    %1185 = vmatprep.subr.bf16.mxu0 0
    %1186 = vmatpush1.bf16.msra.mxu0 0
    %1187 = vmatprep.subr.bf16.mxu0 0
    %1188 = vmatpush1.bf16.msra.mxu0 0
    %1189 = vmatprep.subr.bf16.mxu0 0
    %1190 = vmatpush1.bf16.msra.mxu0 %v1173
    %1191 = vmatprep.subr.bf16.mxu0 0
    %1192 = vmatpush2.bf16.msra.mxu0 0
    %1193 = vmatprep.subr.bf16.mxu0 0
    %1194 = vmatpush2.bf16.msra.mxu0 0
    %1195 = vmatprep.subr.bf16.mxu0 0
    %1196 = vmatpush2.bf16.msra.mxu0 0
    %1197 = vmatprep.subr.bf16.mxu0 0
    %1198 = vmatpush2.bf16.msra.mxu0 0
    %1199 = vmatprep.subr.bf16.mxu0 0
    %1200 = vmatpush2.bf16.msra.mxu0 0
    %1201 = vmatprep.subr.bf16.mxu0 0
    %1202 = vmatpush2.bf16.msra.mxu0 0
    %1203 = vmatprep.subr.bf16.mxu0 0
    %1204 = vmatpush2.bf16.msra.mxu0 0
    %1205 = vmatprep.subr.bf16.mxu0 0
    %1206 = vmatpush2.bf16.msra.mxu0 0
    %1207 = vmatprep.mubr.bf16.mxu0 0
    %1208 = vmatmul.mubr.bf16.gmra.mxu0 %v1170
    %v1209 = vpop.f32.mrf.mxu0
    %v1210 = vadd.f32 0.0, %v1209
    %v1211 = vpop.f32.mrf.mxu0
    %v1212 = vpop.f32.mrf.mxu0
    %v1213 = vpop.f32.mrf.mxu0
    %1214 = vdwg.mxu0
    %v1216 = vunpack.c.l.b16 %v821
    %1217 = vset.pattern.permute.xlu0 0
    %1218 = vperm.xlu0 %1217, %v1216
    %v1219 = vpop.permute.xlu0 %1218
    %v1220 = vlaneseq
    %v1221 = vshrl.u32 %v1220, 7
    %v1222 = vsub.s32 %v572, %v1221
    %v1223 = vrot.slane %v1219, %v1222
    %v1224 = vpack.c.b16 %v1223, %v1223
    %v1226 = vsel %vm620, %v1224, 0
    %v1229 = vsel %vm835, %v159, 0
    %1231 = vmatprep.subr.bf16.mxu0 0
    %1232 = vmatpush1.bf16.msra.mxu0 0
    %1233 = vmatprep.subr.bf16.mxu0 0
    %1234 = vmatpush1.bf16.msra.mxu0 0
    %1235 = vmatprep.subr.bf16.mxu0 0
    %1236 = vmatpush1.bf16.msra.mxu0 0
    %1237 = vmatprep.subr.bf16.mxu0 0
    %1238 = vmatpush1.bf16.msra.mxu0 0
    %1239 = vmatprep.subr.bf16.mxu0 0
    %1240 = vmatpush1.bf16.msra.mxu0 0
    %1241 = vmatprep.subr.bf16.mxu0 0
    %1242 = vmatpush1.bf16.msra.mxu0 0
    %1243 = vmatprep.subr.bf16.mxu0 0
    %1244 = vmatpush1.bf16.msra.mxu0 0
    %1245 = vmatprep.subr.bf16.mxu0 0
    %1246 = vmatpush1.bf16.msra.mxu0 %v1229
    %1247 = vmatprep.subr.bf16.mxu0 0
    %1248 = vmatpush2.bf16.msra.mxu0 0
    %1249 = vmatprep.subr.bf16.mxu0 0
    %1250 = vmatpush2.bf16.msra.mxu0 0
    %1251 = vmatprep.subr.bf16.mxu0 0
    %1252 = vmatpush2.bf16.msra.mxu0 0
    %1253 = vmatprep.subr.bf16.mxu0 0
    %1254 = vmatpush2.bf16.msra.mxu0 0
    %1255 = vmatprep.subr.bf16.mxu0 0
    %1256 = vmatpush2.bf16.msra.mxu0 0
    %1257 = vmatprep.subr.bf16.mxu0 0
    %1258 = vmatpush2.bf16.msra.mxu0 0
    %1259 = vmatprep.subr.bf16.mxu0 0
    %1260 = vmatpush2.bf16.msra.mxu0 0
    %1261 = vmatprep.subr.bf16.mxu0 0
    %1262 = vmatpush2.bf16.msra.mxu0 0
    %1263 = vmatprep.mubr.bf16.mxu0 0
    %1264 = vmatmul.mubr.bf16.gmra.mxu0 %v1226
    %v1265 = vpop.f32.mrf.mxu0
    %v1266 = vadd.f32 0.0, %v1265
    %v1267 = vpop.f32.mrf.mxu0
    %v1268 = vpop.f32.mrf.mxu0
    %v1269 = vpop.f32.mrf.mxu0
    %1270 = vdwg.mxu0
    %v1271 = vpack.c.bf16 %v874, %v874
    %v1272 = vpack.c.bf16 %v930, %v930
    %v1273 = vpack.c.bf16 %v986, %v986
    %v1274 = vpack.c.bf16 %v1042, %v1042
    %v1275 = vpack.c.bf16 %v1098, %v1098
    %v1276 = vpack.c.bf16 %v1154, %v1154
    %v1277 = vpack.c.bf16 %v1210, %v1210
    %v1278 = vpack.c.bf16 %v1266, %v1266
    %v1287 = vunpack.c.l.b16 %v1271
    %v1288 = vunpack.c.l.b16 %v1272
    %v1289 = vunpack.c.l.b16 %v1273
    %v1290 = vunpack.c.l.b16 %v1274
    %v1291 = vunpack.c.l.b16 %v1275
    %v1292 = vunpack.c.l.b16 %v1276
    %v1293 = vunpack.c.l.b16 %v1277
    %v1294 = vunpack.c.l.b16 %v1278
    %v1295 = vrot.slane %v1288, 7
    %v1296 = vsel %vm605, %v1295, %v1287
    %v1297 = vrot.slane %v1289, 6
    %v1298 = vsel %vm607, %v1297, %v1296
    %v1299 = vrot.slane %v1290, 5
    %v1300 = vsel %vm609, %v1299, %v1298
    %v1301 = vrot.slane %v1291, 4
    %v1302 = vsel %vm611, %v1301, %v1300
    %v1303 = vrot.slane %v1292, 3
    %v1304 = vsel %vm613, %v1303, %v1302
    %v1305 = vrot.slane %v1293, 2
    %v1306 = vsel %vm615, %v1305, %v1304
    %v1307 = vrot.slane %v1294, 1
    %v1308 = vsel %vm617, %v1307, %v1306
    %v1309 = vpack.c.b16 %v1308, %v1308
    %v1311 = vld [vmem:[#allocation13] sm:$0xff]
    %v1312 = vld [vmem:[#allocation13 + $0x8] sm:$0xff]
    %v1313 = vld [vmem:[#allocation13 + $0x10] sm:$0xff]
    %v1314 = vld [vmem:[#allocation13 + $0x18] sm:$0xff]
    %v1315 = vld [vmem:[#allocation13 + $0x20] sm:$0xff]
    %v1316 = vld [vmem:[#allocation13 + $0x28] sm:$0xff]
    %v1317 = vld [vmem:[#allocation13 + $0x30] sm:$0xff]
    %v1318 = vld [vmem:[#allocation13 + $0x38] sm:$0xff]
    %v1319 = vld [vmem:[#allocation13 + $0x40] sm:$0xff]
    %v1320 = vld [vmem:[#allocation13 + $0x48] sm:$0xff]
    %v1321 = vld [vmem:[#allocation13 + $0x50] sm:$0xff]
    %v1322 = vld [vmem:[#allocation13 + $0x58] sm:$0xff]
    %v1323 = vld [vmem:[#allocation13 + $0x60] sm:$0xff]
    %v1324 = vld [vmem:[#allocation13 + $0x68] sm:$0xff]
    %v1325 = vld [vmem:[#allocation13 + $0x70] sm:$0xff]
    %v1326 = vld [vmem:[#allocation13 + $0x78] sm:$0xff]
    %v1327 = vld [vmem:[#allocation13 + $0x80] sm:$0xff]
    %v1328 = vld [vmem:[#allocation13 + $0x88] sm:$0xff]
    %v1329 = vld [vmem:[#allocation13 + $0x90] sm:$0xff]
    %v1330 = vld [vmem:[#allocation13 + $0x98] sm:$0xff]
    %v1331 = vld [vmem:[#allocation13 + $0xa0] sm:$0xff]
    %v1332 = vld [vmem:[#allocation13 + $0xa8] sm:$0xff]
    %v1333 = vld [vmem:[#allocation13 + $0xb0] sm:$0xff]
    %v1334 = vld [vmem:[#allocation13 + $0xb8] sm:$0xff]
    %v1335 = vld [vmem:[#allocation13 + $0xc0] sm:$0xff]
    %v1336 = vld [vmem:[#allocation13 + $0xc8] sm:$0xff]
    %v1337 = vld [vmem:[#allocation13 + $0xd0] sm:$0xff]
    %v1338 = vld [vmem:[#allocation13 + $0xd8] sm:$0xff]
    %v1339 = vld [vmem:[#allocation13 + $0xe0] sm:$0xff]
    %v1340 = vld [vmem:[#allocation13 + $0xe8] sm:$0xff]
    %v1341 = vld [vmem:[#allocation13 + $0xf0] sm:$0xff]
    %v1342 = vld [vmem:[#allocation13 + $0xf8] sm:$0xff]
    %v1343 = vld [vmem:[#allocation13 + $0x100] sm:$0xff]
    %v1344 = vld [vmem:[#allocation13 + $0x108] sm:$0xff]
    %v1345 = vld [vmem:[#allocation13 + $0x110] sm:$0xff]
    %v1346 = vld [vmem:[#allocation13 + $0x118] sm:$0xff]
    %v1347 = vld [vmem:[#allocation13 + $0x120] sm:$0xff]
    %v1348 = vld [vmem:[#allocation13 + $0x128] sm:$0xff]
    %v1349 = vld [vmem:[#allocation13 + $0x130] sm:$0xff]
    %v1350 = vld [vmem:[#allocation13 + $0x138] sm:$0xff]
    %v1351 = vld [vmem:[#allocation13 + $0x140] sm:$0xff]
    %v1352 = vld [vmem:[#allocation13 + $0x148] sm:$0xff]
    %v1353 = vld [vmem:[#allocation13 + $0x150] sm:$0xff]
    %v1354 = vld [vmem:[#allocation13 + $0x158] sm:$0xff]
    %v1355 = vld [vmem:[#allocation13 + $0x160] sm:$0xff]
    %v1356 = vld [vmem:[#allocation13 + $0x168] sm:$0xff]
    %v1357 = vld [vmem:[#allocation13 + $0x170] sm:$0xff]
    %v1358 = vld [vmem:[#allocation13 + $0x178] sm:$0xff]
    %v1359 = vld [vmem:[#allocation13 + $0x180] sm:$0xff]
    %v1360 = vld [vmem:[#allocation13 + $0x188] sm:$0xff]
    %v1361 = vld [vmem:[#allocation13 + $0x190] sm:$0xff]
    %v1362 = vld [vmem:[#allocation13 + $0x198] sm:$0xff]
    %v1363 = vld [vmem:[#allocation13 + $0x1a0] sm:$0xff]
    %v1364 = vld [vmem:[#allocation13 + $0x1a8] sm:$0xff]
    %v1365 = vld [vmem:[#allocation13 + $0x1b0] sm:$0xff]
    %v1366 = vld [vmem:[#allocation13 + $0x1b8] sm:$0xff]
    %v1367 = vld [vmem:[#allocation13 + $0x1c0] sm:$0xff]
    %v1368 = vld [vmem:[#allocation13 + $0x1c8] sm:$0xff]
    %v1369 = vld [vmem:[#allocation13 + $0x1d0] sm:$0xff]
    %v1370 = vld [vmem:[#allocation13 + $0x1d8] sm:$0xff]
    %v1371 = vld [vmem:[#allocation13 + $0x1e0] sm:$0xff]
    %v1372 = vld [vmem:[#allocation13 + $0x1e8] sm:$0xff]
    %v1373 = vld [vmem:[#allocation13 + $0x1f0] sm:$0xff]
    %v1374 = vld [vmem:[#allocation13 + $0x1f8] sm:$0xff]
    %v1375 = vld [vmem:[#allocation13 + $0x200] sm:$0xff]
    %v1376 = vld [vmem:[#allocation13 + $0x208] sm:$0xff]
    %v1377 = vld [vmem:[#allocation13 + $0x210] sm:$0xff]
    %v1378 = vld [vmem:[#allocation13 + $0x218] sm:$0xff]
    %v1379 = vld [vmem:[#allocation13 + $0x220] sm:$0xff]
    %v1380 = vld [vmem:[#allocation13 + $0x228] sm:$0xff]
    %v1381 = vld [vmem:[#allocation13 + $0x230] sm:$0xff]
    %v1382 = vld [vmem:[#allocation13 + $0x238] sm:$0xff]
    %v1383 = vld [vmem:[#allocation13 + $0x240] sm:$0xff]
    %v1384 = vld [vmem:[#allocation13 + $0x248] sm:$0xff]
    %v1385 = vld [vmem:[#allocation13 + $0x250] sm:$0xff]
    %v1386 = vld [vmem:[#allocation13 + $0x258] sm:$0xff]
    %v1387 = vld [vmem:[#allocation13 + $0x260] sm:$0xff]
    %v1388 = vld [vmem:[#allocation13 + $0x268] sm:$0xff]
    %v1389 = vld [vmem:[#allocation13 + $0x270] sm:$0xff]
    %v1390 = vld [vmem:[#allocation13 + $0x278] sm:$0xff]
    %v1391 = vld [vmem:[#allocation13 + $0x280] sm:$0xff]
    %v1392 = vld [vmem:[#allocation13 + $0x288] sm:$0xff]
    %v1393 = vld [vmem:[#allocation13 + $0x290] sm:$0xff]
    %v1394 = vld [vmem:[#allocation13 + $0x298] sm:$0xff]
    %v1395 = vld [vmem:[#allocation13 + $0x2a0] sm:$0xff]
    %v1396 = vld [vmem:[#allocation13 + $0x2a8] sm:$0xff]
    %v1397 = vld [vmem:[#allocation13 + $0x2b0] sm:$0xff]
    %v1398 = vld [vmem:[#allocation13 + $0x2b8] sm:$0xff]
    %v1399 = vld [vmem:[#allocation13 + $0x2c0] sm:$0xff]
    %v1400 = vld [vmem:[#allocation13 + $0x2c8] sm:$0xff]
    %v1401 = vld [vmem:[#allocation13 + $0x2d0] sm:$0xff]
    %v1402 = vld [vmem:[#allocation13 + $0x2d8] sm:$0xff]
    %v1403 = vld [vmem:[#allocation13 + $0x2e0] sm:$0xff]
    %v1404 = vld [vmem:[#allocation13 + $0x2e8] sm:$0xff]
    %v1405 = vld [vmem:[#allocation13 + $0x2f0] sm:$0xff]
    %v1406 = vld [vmem:[#allocation13 + $0x2f8] sm:$0xff]
    %v1407 = vld [vmem:[%s9] sm:$0xf]
    %v1409 = vlaneseq
    %v1410 = vshrl.u32 %v1409, 7
    %v1411 = vsub.s32 0, %v1410
    %v1412 = vrot.slane %v1407, %v1411
    %v1413 = vlaneseq
    %v1414 = vshrl.u32 %v1413, 7
    %v1415 = vsub.s32 1, %v1414
    %v1416 = vrot.slane %v1407, %v1415
    %v1417 = vlaneseq
    %v1418 = vshrl.u32 %v1417, 7
    %v1419 = vsub.s32 2, %v1418
    %v1420 = vrot.slane %v1407, %v1419
    %v1421 = vlaneseq
    %v1422 = vshrl.u32 %v1421, 7
    %v1423 = vsub.s32 3, %v1422
    %v1424 = vrot.slane %v1407, %v1423
    %v1525 = vunpack.c.l.b16 %v1311
    %v1526 = vunpack.c.h.b16 %v1311
    %v1527 = vunpack.c.l.b16 %v1312
    %v1528 = vunpack.c.h.b16 %v1312
    %v1529 = vunpack.c.l.b16 %v1313
    %v1530 = vunpack.c.h.b16 %v1313
    %v1531 = vunpack.c.l.b16 %v1314
    %v1532 = vunpack.c.h.b16 %v1314
    %v1533 = vunpack.c.l.b16 %v1315
    %v1534 = vunpack.c.h.b16 %v1315
    %v1535 = vunpack.c.l.b16 %v1316
    %v1536 = vunpack.c.h.b16 %v1316
    %v1537 = vunpack.c.l.b16 %v1317
    %v1538 = vunpack.c.h.b16 %v1317
    %v1539 = vunpack.c.l.b16 %v1318
    %v1540 = vunpack.c.h.b16 %v1318
    %v1541 = vunpack.c.l.b16 %v1319
    %v1542 = vunpack.c.h.b16 %v1319
    %v1543 = vunpack.c.l.b16 %v1320
    %v1544 = vunpack.c.h.b16 %v1320
    %v1545 = vunpack.c.l.b16 %v1321
    %v1546 = vunpack.c.h.b16 %v1321
    %v1547 = vunpack.c.l.b16 %v1322
    %v1548 = vunpack.c.h.b16 %v1322
    %v1549 = vunpack.c.l.b16 %v1323
    %v1550 = vunpack.c.h.b16 %v1323
    %v1551 = vunpack.c.l.b16 %v1324
    %v1552 = vunpack.c.h.b16 %v1324
    %v1553 = vunpack.c.l.b16 %v1325
    %v1554 = vunpack.c.h.b16 %v1325
    %v1555 = vunpack.c.l.b16 %v1326
    %v1556 = vunpack.c.h.b16 %v1326
    %v1557 = vunpack.c.l.b16 %v1327
    %v1558 = vunpack.c.h.b16 %v1327
    %v1559 = vunpack.c.l.b16 %v1328
    %v1560 = vunpack.c.h.b16 %v1328
    %v1561 = vunpack.c.l.b16 %v1329
    %v1562 = vunpack.c.h.b16 %v1329
    %v1563 = vunpack.c.l.b16 %v1330
    %v1564 = vunpack.c.h.b16 %v1330
    %v1565 = vunpack.c.l.b16 %v1331
    %v1566 = vunpack.c.h.b16 %v1331
    %v1567 = vunpack.c.l.b16 %v1332
    %v1568 = vunpack.c.h.b16 %v1332
    %v1569 = vunpack.c.l.b16 %v1333
    %v1570 = vunpack.c.h.b16 %v1333
    %v1571 = vunpack.c.l.b16 %v1334
    %v1572 = vunpack.c.h.b16 %v1334
    %v1573 = vunpack.c.l.b16 %v1335
    %v1574 = vunpack.c.h.b16 %v1335
    %v1575 = vunpack.c.l.b16 %v1336
    %v1576 = vunpack.c.h.b16 %v1336
    %v1577 = vunpack.c.l.b16 %v1337
    %v1578 = vunpack.c.h.b16 %v1337
    %v1579 = vunpack.c.l.b16 %v1338
    %v1580 = vunpack.c.h.b16 %v1338
    %v1581 = vunpack.c.l.b16 %v1339
    %v1582 = vunpack.c.h.b16 %v1339
    %v1583 = vunpack.c.l.b16 %v1340
    %v1584 = vunpack.c.h.b16 %v1340
    %v1585 = vunpack.c.l.b16 %v1341
    %v1586 = vunpack.c.h.b16 %v1341
    %v1587 = vunpack.c.l.b16 %v1342
    %v1588 = vunpack.c.h.b16 %v1342
    %v1589 = vunpack.c.l.b16 %v1343
    %v1590 = vunpack.c.h.b16 %v1343
    %v1591 = vunpack.c.l.b16 %v1344
    %v1592 = vunpack.c.h.b16 %v1344
    %v1593 = vunpack.c.l.b16 %v1345
    %v1594 = vunpack.c.h.b16 %v1345
    %v1595 = vunpack.c.l.b16 %v1346
    %v1596 = vunpack.c.h.b16 %v1346
    %v1597 = vunpack.c.l.b16 %v1347
    %v1598 = vunpack.c.h.b16 %v1347
    %v1599 = vunpack.c.l.b16 %v1348
    %v1600 = vunpack.c.h.b16 %v1348
    %v1601 = vunpack.c.l.b16 %v1349
    %v1602 = vunpack.c.h.b16 %v1349
    %v1603 = vunpack.c.l.b16 %v1350
    %v1604 = vunpack.c.h.b16 %v1350
    %v1605 = vunpack.c.l.b16 %v1351
    %v1606 = vunpack.c.h.b16 %v1351
    %v1607 = vunpack.c.l.b16 %v1352
    %v1608 = vunpack.c.h.b16 %v1352
    %v1609 = vunpack.c.l.b16 %v1353
    %v1610 = vunpack.c.h.b16 %v1353
    %v1611 = vunpack.c.l.b16 %v1354
    %v1612 = vunpack.c.h.b16 %v1354
    %v1613 = vunpack.c.l.b16 %v1355
    %v1614 = vunpack.c.h.b16 %v1355
    %v1615 = vunpack.c.l.b16 %v1356
    %v1616 = vunpack.c.h.b16 %v1356
    %v1617 = vunpack.c.l.b16 %v1357
    %v1618 = vunpack.c.h.b16 %v1357
    %v1619 = vunpack.c.l.b16 %v1358
    %v1620 = vunpack.c.h.b16 %v1358
    %v1621 = vunpack.c.l.b16 %v1359
    %v1622 = vunpack.c.h.b16 %v1359
    %v1623 = vunpack.c.l.b16 %v1360
    %v1624 = vunpack.c.h.b16 %v1360
    %v1625 = vunpack.c.l.b16 %v1361
    %v1626 = vunpack.c.h.b16 %v1361
    %v1627 = vunpack.c.l.b16 %v1362
    %v1628 = vunpack.c.h.b16 %v1362
    %v1629 = vunpack.c.l.b16 %v1363
    %v1630 = vunpack.c.h.b16 %v1363
    %v1631 = vunpack.c.l.b16 %v1364
    %v1632 = vunpack.c.h.b16 %v1364
    %v1633 = vunpack.c.l.b16 %v1365
    %v1634 = vunpack.c.h.b16 %v1365
    %v1635 = vunpack.c.l.b16 %v1366
    %v1636 = vunpack.c.h.b16 %v1366
    %v1637 = vunpack.c.l.b16 %v1367
    %v1638 = vunpack.c.h.b16 %v1367
    %v1639 = vunpack.c.l.b16 %v1368
    %v1640 = vunpack.c.h.b16 %v1368
    %v1641 = vunpack.c.l.b16 %v1369
    %v1642 = vunpack.c.h.b16 %v1369
    %v1643 = vunpack.c.l.b16 %v1370
    %v1644 = vunpack.c.h.b16 %v1370
    %v1645 = vunpack.c.l.b16 %v1371
    %v1646 = vunpack.c.h.b16 %v1371
    %v1647 = vunpack.c.l.b16 %v1372
    %v1648 = vunpack.c.h.b16 %v1372
    %v1649 = vunpack.c.l.b16 %v1373
    %v1650 = vunpack.c.h.b16 %v1373
    %v1651 = vunpack.c.l.b16 %v1374
    %v1652 = vunpack.c.h.b16 %v1374
    %v1653 = vunpack.c.l.b16 %v1375
    %v1654 = vunpack.c.h.b16 %v1375
    %v1655 = vunpack.c.l.b16 %v1376
    %v1656 = vunpack.c.h.b16 %v1376
    %v1657 = vunpack.c.l.b16 %v1377
    %v1658 = vunpack.c.h.b16 %v1377
    %v1659 = vunpack.c.l.b16 %v1378
    %v1660 = vunpack.c.h.b16 %v1378
    %v1661 = vunpack.c.l.b16 %v1379
    %v1662 = vunpack.c.h.b16 %v1379
    %v1663 = vunpack.c.l.b16 %v1380
    %v1664 = vunpack.c.h.b16 %v1380
    %v1665 = vunpack.c.l.b16 %v1381
    %v1666 = vunpack.c.h.b16 %v1381
    %v1667 = vunpack.c.l.b16 %v1382
    %v1668 = vunpack.c.h.b16 %v1382
    %v1669 = vunpack.c.l.b16 %v1383
    %v1670 = vunpack.c.h.b16 %v1383
    %v1671 = vunpack.c.l.b16 %v1384
    %v1672 = vunpack.c.h.b16 %v1384
    %v1673 = vunpack.c.l.b16 %v1385
    %v1674 = vunpack.c.h.b16 %v1385
    %v1675 = vunpack.c.l.b16 %v1386
    %v1676 = vunpack.c.h.b16 %v1386
    %v1677 = vunpack.c.l.b16 %v1387
    %v1678 = vunpack.c.h.b16 %v1387
    %v1679 = vunpack.c.l.b16 %v1388
    %v1680 = vunpack.c.h.b16 %v1388
    %v1681 = vunpack.c.l.b16 %v1389
    %v1682 = vunpack.c.h.b16 %v1389
    %v1683 = vunpack.c.l.b16 %v1390
    %v1684 = vunpack.c.h.b16 %v1390
    %v1685 = vunpack.c.l.b16 %v1391
    %v1686 = vunpack.c.h.b16 %v1391
    %v1687 = vunpack.c.l.b16 %v1392
    %v1688 = vunpack.c.h.b16 %v1392
    %v1689 = vunpack.c.l.b16 %v1393
    %v1690 = vunpack.c.h.b16 %v1393
    %v1691 = vunpack.c.l.b16 %v1394
    %v1692 = vunpack.c.h.b16 %v1394
    %v1693 = vunpack.c.l.b16 %v1395
    %v1694 = vunpack.c.h.b16 %v1395
    %v1695 = vunpack.c.l.b16 %v1396
    %v1696 = vunpack.c.h.b16 %v1396
    %v1697 = vunpack.c.l.b16 %v1397
    %v1698 = vunpack.c.h.b16 %v1397
    %v1699 = vunpack.c.l.b16 %v1398
    %v1700 = vunpack.c.h.b16 %v1398
    %v1701 = vunpack.c.l.b16 %v1399
    %v1702 = vunpack.c.h.b16 %v1399
    %v1703 = vunpack.c.l.b16 %v1400
    %v1704 = vunpack.c.h.b16 %v1400
    %v1705 = vunpack.c.l.b16 %v1401
    %v1706 = vunpack.c.h.b16 %v1401
    %v1707 = vunpack.c.l.b16 %v1402
    %v1708 = vunpack.c.h.b16 %v1402
    %v1709 = vunpack.c.l.b16 %v1403
    %v1710 = vunpack.c.h.b16 %v1403
    %v1711 = vunpack.c.l.b16 %v1404
    %v1712 = vunpack.c.h.b16 %v1404
    %v1713 = vunpack.c.l.b16 %v1405
    %v1714 = vunpack.c.h.b16 %v1405
    %v1715 = vunpack.c.l.b16 %v1406
    %v1716 = vunpack.c.h.b16 %v1406
    %v1717 = vpack.c.b16 %v1529, %v1525
    %v1718 = vpack.c.b16 %v1530, %v1526
    %v1719 = vpack.c.b16 %v1531, %v1527
    %v1720 = vpack.c.b16 %v1532, %v1528
    %v1721 = vpack.c.b16 %v1537, %v1533
    %v1722 = vpack.c.b16 %v1538, %v1534
    %v1723 = vpack.c.b16 %v1539, %v1535
    %v1724 = vpack.c.b16 %v1540, %v1536
    %v1725 = vpack.c.b16 %v1545, %v1541
    %v1726 = vpack.c.b16 %v1546, %v1542
    %v1727 = vpack.c.b16 %v1547, %v1543
    %v1728 = vpack.c.b16 %v1548, %v1544
    %v1729 = vpack.c.b16 %v1553, %v1549
    %v1730 = vpack.c.b16 %v1554, %v1550
    %v1731 = vpack.c.b16 %v1555, %v1551
    %v1732 = vpack.c.b16 %v1556, %v1552
    %v1733 = vpack.c.b16 %v1561, %v1557
    %v1734 = vpack.c.b16 %v1562, %v1558
    %v1735 = vpack.c.b16 %v1563, %v1559
    %v1736 = vpack.c.b16 %v1564, %v1560
    %v1737 = vpack.c.b16 %v1569, %v1565
    %v1738 = vpack.c.b16 %v1570, %v1566
    %v1739 = vpack.c.b16 %v1571, %v1567
    %v1740 = vpack.c.b16 %v1572, %v1568
    %v1741 = vpack.c.b16 %v1577, %v1573
    %v1742 = vpack.c.b16 %v1578, %v1574
    %v1743 = vpack.c.b16 %v1579, %v1575
    %v1744 = vpack.c.b16 %v1580, %v1576
    %v1745 = vpack.c.b16 %v1585, %v1581
    %v1746 = vpack.c.b16 %v1586, %v1582
    %v1747 = vpack.c.b16 %v1587, %v1583
    %v1748 = vpack.c.b16 %v1588, %v1584
    %v1749 = vpack.c.b16 %v1593, %v1589
    %v1750 = vpack.c.b16 %v1594, %v1590
    %v1751 = vpack.c.b16 %v1595, %v1591
    %v1752 = vpack.c.b16 %v1596, %v1592
    %v1753 = vpack.c.b16 %v1601, %v1597
    %v1754 = vpack.c.b16 %v1602, %v1598
    %v1755 = vpack.c.b16 %v1603, %v1599
    %v1756 = vpack.c.b16 %v1604, %v1600
    %v1757 = vpack.c.b16 %v1609, %v1605
    %v1758 = vpack.c.b16 %v1610, %v1606
    %v1759 = vpack.c.b16 %v1611, %v1607
    %v1760 = vpack.c.b16 %v1612, %v1608
    %v1761 = vpack.c.b16 %v1617, %v1613
    %v1762 = vpack.c.b16 %v1618, %v1614
    %v1763 = vpack.c.b16 %v1619, %v1615
    %v1764 = vpack.c.b16 %v1620, %v1616
    %v1765 = vpack.c.b16 %v1625, %v1621
    %v1766 = vpack.c.b16 %v1626, %v1622
    %v1767 = vpack.c.b16 %v1627, %v1623
    %v1768 = vpack.c.b16 %v1628, %v1624
    %v1769 = vpack.c.b16 %v1633, %v1629
    %v1770 = vpack.c.b16 %v1634, %v1630
    %v1771 = vpack.c.b16 %v1635, %v1631
    %v1772 = vpack.c.b16 %v1636, %v1632
    %v1773 = vpack.c.b16 %v1641, %v1637
    %v1774 = vpack.c.b16 %v1642, %v1638
    %v1775 = vpack.c.b16 %v1643, %v1639
    %v1776 = vpack.c.b16 %v1644, %v1640
    %v1777 = vpack.c.b16 %v1649, %v1645
    %v1778 = vpack.c.b16 %v1650, %v1646
    %v1779 = vpack.c.b16 %v1651, %v1647
    %v1780 = vpack.c.b16 %v1652, %v1648
    %v1781 = vpack.c.b16 %v1657, %v1653
    %v1782 = vpack.c.b16 %v1658, %v1654
    %v1783 = vpack.c.b16 %v1659, %v1655
    %v1784 = vpack.c.b16 %v1660, %v1656
    %v1785 = vpack.c.b16 %v1665, %v1661
    %v1786 = vpack.c.b16 %v1666, %v1662
    %v1787 = vpack.c.b16 %v1667, %v1663
    %v1788 = vpack.c.b16 %v1668, %v1664
    %v1789 = vpack.c.b16 %v1673, %v1669
    %v1790 = vpack.c.b16 %v1674, %v1670
    %v1791 = vpack.c.b16 %v1675, %v1671
    %v1792 = vpack.c.b16 %v1676, %v1672
    %v1793 = vpack.c.b16 %v1681, %v1677
    %v1794 = vpack.c.b16 %v1682, %v1678
    %v1795 = vpack.c.b16 %v1683, %v1679
    %v1796 = vpack.c.b16 %v1684, %v1680
    %v1797 = vpack.c.b16 %v1689, %v1685
    %v1798 = vpack.c.b16 %v1690, %v1686
    %v1799 = vpack.c.b16 %v1691, %v1687
    %v1800 = vpack.c.b16 %v1692, %v1688
    %v1801 = vpack.c.b16 %v1697, %v1693
    %v1802 = vpack.c.b16 %v1698, %v1694
    %v1803 = vpack.c.b16 %v1699, %v1695
    %v1804 = vpack.c.b16 %v1700, %v1696
    %v1805 = vpack.c.b16 %v1705, %v1701
    %v1806 = vpack.c.b16 %v1706, %v1702
    %v1807 = vpack.c.b16 %v1707, %v1703
    %v1808 = vpack.c.b16 %v1708, %v1704
    %v1809 = vpack.c.b16 %v1713, %v1709
    %v1810 = vpack.c.b16 %v1714, %v1710
    %v1811 = vpack.c.b16 %v1715, %v1711
    %v1812 = vpack.c.b16 %v1716, %v1712
    %1909 = vmatprep.subr.bf16.mxu0 %v1746
    %1910 = vmatpush1.bf16.msra.mxu0 %v1745
    %1911 = vmatprep.subr.bf16.mxu0 %v1742
    %1912 = vmatpush1.bf16.msra.mxu0 %v1741
    %1913 = vmatprep.subr.bf16.mxu0 %v1738
    %1914 = vmatpush1.bf16.msra.mxu0 %v1737
    %1915 = vmatprep.subr.bf16.mxu0 %v1734
    %1916 = vmatpush1.bf16.msra.mxu0 %v1733
    %1917 = vmatprep.subr.bf16.mxu0 %v1730
    %1918 = vmatpush1.bf16.msra.mxu0 %v1729
    %1919 = vmatprep.subr.bf16.mxu0 %v1726
    %1920 = vmatpush1.bf16.msra.mxu0 %v1725
    %1921 = vmatprep.subr.bf16.mxu0 %v1722
    %1922 = vmatpush1.bf16.msra.mxu0 %v1721
    %1923 = vmatprep.subr.bf16.mxu0 %v1718
    %1924 = vmatpush1.bf16.msra.mxu0 %v1717
    %1925 = vmatprep.subr.bf16.mxu0 %v1778
    %1926 = vmatpush2.bf16.msra.mxu0 %v1777
    %1927 = vmatprep.subr.bf16.mxu0 %v1774
    %1928 = vmatpush2.bf16.msra.mxu0 %v1773
    %1929 = vmatprep.subr.bf16.mxu0 %v1770
    %1930 = vmatpush2.bf16.msra.mxu0 %v1769
    %1931 = vmatprep.subr.bf16.mxu0 %v1766
    %1932 = vmatpush2.bf16.msra.mxu0 %v1765
    %1933 = vmatprep.subr.bf16.mxu0 %v1762
    %1934 = vmatpush2.bf16.msra.mxu0 %v1761
    %1935 = vmatprep.subr.bf16.mxu0 %v1758
    %1936 = vmatpush2.bf16.msra.mxu0 %v1757
    %1937 = vmatprep.subr.bf16.mxu0 %v1754
    %1938 = vmatpush2.bf16.msra.mxu0 %v1753
    %1939 = vmatprep.subr.bf16.mxu0 %v1750
    %1940 = vmatpush2.bf16.msra.mxu0 %v1749
    %1941 = vmatprep.mubr.bf16.mxu0 %v1309
    %1942 = vmatmul.mubr.bf16.gmra.mxu0 %v160
    %v1943 = vpop.f32.mrf.mxu0
    %v1944 = vadd.f32 %v1412, %v1943
    %v1945 = vpop.f32.mrf.mxu0
    %v1946 = vadd.f32 %v1416, %v1945
    %v1947 = vpop.f32.mrf.mxu0
    %v1948 = vpop.f32.mrf.mxu0
    %1949 = vdwg.mxu0
    %1950 = vmatprep.subr.bf16.mxu0 %v1810
    %1951 = vmatpush1.bf16.msra.mxu0 %v1809
    %1952 = vmatprep.subr.bf16.mxu0 %v1806
    %1953 = vmatpush1.bf16.msra.mxu0 %v1805
    %1954 = vmatprep.subr.bf16.mxu0 %v1802
    %1955 = vmatpush1.bf16.msra.mxu0 %v1801
    %1956 = vmatprep.subr.bf16.mxu0 %v1798
    %1957 = vmatpush1.bf16.msra.mxu0 %v1797
    %1958 = vmatprep.subr.bf16.mxu0 %v1794
    %1959 = vmatpush1.bf16.msra.mxu0 %v1793
    %1960 = vmatprep.subr.bf16.mxu0 %v1790
    %1961 = vmatpush1.bf16.msra.mxu0 %v1789
    %1962 = vmatprep.subr.bf16.mxu0 %v1786
    %1963 = vmatpush1.bf16.msra.mxu0 %v1785
    %1964 = vmatprep.subr.bf16.mxu0 %v1782
    %1965 = vmatpush1.bf16.msra.mxu0 %v1781
    %1966 = vmatprep.subr.bf16.mxu0 0
    %1967 = vmatpush2.bf16.msra.mxu0 0
    %1968 = vmatprep.subr.bf16.mxu0 0
    %1969 = vmatpush2.bf16.msra.mxu0 0
    %1970 = vmatprep.subr.bf16.mxu0 0
    %1971 = vmatpush2.bf16.msra.mxu0 0
    %1972 = vmatprep.subr.bf16.mxu0 0
    %1973 = vmatpush2.bf16.msra.mxu0 0
    %1974 = vmatprep.subr.bf16.mxu0 0
    %1975 = vmatpush2.bf16.msra.mxu0 0
    %1976 = vmatprep.subr.bf16.mxu0 0
    %1977 = vmatpush2.bf16.msra.mxu0 0
    %1978 = vmatprep.subr.bf16.mxu0 0
    %1979 = vmatpush2.bf16.msra.mxu0 0
    %1980 = vmatprep.subr.bf16.mxu0 0
    %1981 = vmatpush2.bf16.msra.mxu0 0
    %1982 = vmatprep.mubr.bf16.mxu0 0
    %1983 = vmatmul.mubr.bf16.gmra.mxu0 %v161
    %v1984 = vpop.f32.mrf.mxu0
    %v1985 = vadd.f32 %v1944, %v1984
    %v1986 = vpop.f32.mrf.mxu0
    %v1987 = vadd.f32 %v1946, %v1986
    %v1988 = vpop.f32.mrf.mxu0
    %v1989 = vpop.f32.mrf.mxu0
    %1990 = vdwg.mxu0
    %1991 = vmatprep.subr.bf16.mxu0 %v1748
    %1992 = vmatpush1.bf16.msra.mxu0 %v1747
    %1993 = vmatprep.subr.bf16.mxu0 %v1744
    %1994 = vmatpush1.bf16.msra.mxu0 %v1743
    %1995 = vmatprep.subr.bf16.mxu0 %v1740
    %1996 = vmatpush1.bf16.msra.mxu0 %v1739
    %1997 = vmatprep.subr.bf16.mxu0 %v1736
    %1998 = vmatpush1.bf16.msra.mxu0 %v1735
    %1999 = vmatprep.subr.bf16.mxu0 %v1732
    %2000 = vmatpush1.bf16.msra.mxu0 %v1731
    %2001 = vmatprep.subr.bf16.mxu0 %v1728
    %2002 = vmatpush1.bf16.msra.mxu0 %v1727
    %2003 = vmatprep.subr.bf16.mxu0 %v1724
    %2004 = vmatpush1.bf16.msra.mxu0 %v1723
    %2005 = vmatprep.subr.bf16.mxu0 %v1720
    %2006 = vmatpush1.bf16.msra.mxu0 %v1719
    %2007 = vmatprep.subr.bf16.mxu0 %v1780
    %2008 = vmatpush2.bf16.msra.mxu0 %v1779
    %2009 = vmatprep.subr.bf16.mxu0 %v1776
    %2010 = vmatpush2.bf16.msra.mxu0 %v1775
    %2011 = vmatprep.subr.bf16.mxu0 %v1772
    %2012 = vmatpush2.bf16.msra.mxu0 %v1771
    %2013 = vmatprep.subr.bf16.mxu0 %v1768
    %2014 = vmatpush2.bf16.msra.mxu0 %v1767
    %2015 = vmatprep.subr.bf16.mxu0 %v1764
    %2016 = vmatpush2.bf16.msra.mxu0 %v1763
    %2017 = vmatprep.subr.bf16.mxu0 %v1760
    %2018 = vmatpush2.bf16.msra.mxu0 %v1759
    %2019 = vmatprep.subr.bf16.mxu0 %v1756
    %2020 = vmatpush2.bf16.msra.mxu0 %v1755
    %2021 = vmatprep.subr.bf16.mxu0 %v1752
    %2022 = vmatpush2.bf16.msra.mxu0 %v1751
    %2023 = vmatprep.mubr.bf16.mxu0 %v1309
    %2024 = vmatmul.mubr.bf16.gmra.mxu0 %v160
    %v2025 = vpop.f32.mrf.mxu0
    %v2026 = vadd.f32 %v1420, %v2025
    %v2027 = vpop.f32.mrf.mxu0
    %v2028 = vadd.f32 %v1424, %v2027
    %v2029 = vpop.f32.mrf.mxu0
    %v2030 = vpop.f32.mrf.mxu0
    %2031 = vdwg.mxu0
    %2032 = vmatprep.subr.bf16.mxu0 %v1812
    %2033 = vmatpush1.bf16.msra.mxu0 %v1811
    %2034 = vmatprep.subr.bf16.mxu0 %v1808
    %2035 = vmatpush1.bf16.msra.mxu0 %v1807
    %2036 = vmatprep.subr.bf16.mxu0 %v1804
    %2037 = vmatpush1.bf16.msra.mxu0 %v1803
    %2038 = vmatprep.subr.bf16.mxu0 %v1800
    %2039 = vmatpush1.bf16.msra.mxu0 %v1799
    %2040 = vmatprep.subr.bf16.mxu0 %v1796
    %2041 = vmatpush1.bf16.msra.mxu0 %v1795
    %2042 = vmatprep.subr.bf16.mxu0 %v1792
    %2043 = vmatpush1.bf16.msra.mxu0 %v1791
    %2044 = vmatprep.subr.bf16.mxu0 %v1788
    %2045 = vmatpush1.bf16.msra.mxu0 %v1787
    %2046 = vmatprep.subr.bf16.mxu0 %v1784
    %2047 = vmatpush1.bf16.msra.mxu0 %v1783
    %2048 = vmatprep.subr.bf16.mxu0 0
    %2049 = vmatpush2.bf16.msra.mxu0 0
    %2050 = vmatprep.subr.bf16.mxu0 0
    %2051 = vmatpush2.bf16.msra.mxu0 0
    %2052 = vmatprep.subr.bf16.mxu0 0
    %2053 = vmatpush2.bf16.msra.mxu0 0
    %2054 = vmatprep.subr.bf16.mxu0 0
    %2055 = vmatpush2.bf16.msra.mxu0 0
    %2056 = vmatprep.subr.bf16.mxu0 0
    %2057 = vmatpush2.bf16.msra.mxu0 0
    %2058 = vmatprep.subr.bf16.mxu0 0
    %2059 = vmatpush2.bf16.msra.mxu0 0
    %2060 = vmatprep.subr.bf16.mxu0 0
    %2061 = vmatpush2.bf16.msra.mxu0 0
    %2062 = vmatprep.subr.bf16.mxu0 0
    %2063 = vmatpush2.bf16.msra.mxu0 0
    %2064 = vmatprep.mubr.bf16.mxu0 0
    %2065 = vmatmul.mubr.bf16.gmra.mxu0 %v161
    %v2066 = vpop.f32.mrf.mxu0
    %v2067 = vadd.f32 %v2026, %v2066
    %v2068 = vpop.f32.mrf.mxu0
    %v2069 = vadd.f32 %v2028, %v2068
    %v2070 = vpop.f32.mrf.mxu0
    %v2071 = vpop.f32.mrf.mxu0
    %2072 = vdwg.mxu0
    %v2073 = vxor.u32 %v1985, 2147483648
    %v2074 = vmul.f32 %v2073, 1.442695
    %v2075 = vpow.pop %v2074
    %v2076 = vadd.f32 %v2075, 1.0
    %v2077 = vrcp.pop %v2076
    %v2078 = vmul.f32 1.0, %v2077
    %v2079 = vxor.u32 %v1987, 2147483648
    %v2080 = vmul.f32 %v2079, 1.442695
    %v2081 = vpow.pop %v2080
    %v2082 = vadd.f32 %v2081, 1.0
    %v2083 = vrcp.pop %v2082
    %v2084 = vmul.f32 1.0, %v2083
    %v2085 = vtanh.pop %v2067
    %v2086 = vxor.u32 %v2069, 2147483648
    %v2087 = vmul.f32 %v2086, 1.442695
    %v2088 = vpow.pop %v2087
    %v2089 = vadd.f32 %v2088, 1.0
    %v2090 = vrcp.pop %v2089
    %v2091 = vmul.f32 1.0, %v2090
    %v2092 = vmul.f32 %v2084, %v151
    %v2093 = vmul.f32 %v2078, %v2085
    %v2094 = vadd.f32 %v2092, %v2093
    %v2095 = vtanh.pop %v2094
    %v2096 = vmul.f32 %v2091, %v2095
    %v2097 = vpack.c.bf16 %v2096, %v2096
    %v2098 = vld [vmem:[#allocation14] sm:$0xf]
    %v2099 = vld [vmem:[#allocation14 + $0x4] sm:$0xf]
    %v2100 = vld [vmem:[#allocation14 + $0x8] sm:$0xf]
    %v2101 = vld [vmem:[#allocation14 + $0xc] sm:$0xf]
    %v2102 = vld [vmem:[#allocation14 + $0x10] sm:$0xf]
    %v2103 = vld [vmem:[#allocation14 + $0x14] sm:$0xf]
    %v2104 = vld [vmem:[#allocation14 + $0x18] sm:$0xf]
    %v2105 = vld [vmem:[#allocation14 + $0x1c] sm:$0xf]
    %v2106 = vld [vmem:[#allocation14 + $0x20] sm:$0xf]
    %v2107 = vld [vmem:[#allocation14 + $0x24] sm:$0xf]
    %v2108 = vld [vmem:[#allocation14 + $0x28] sm:$0xf]
    %v2109 = vld [vmem:[#allocation14 + $0x2c] sm:$0xf]
    %v2110 = vld [vmem:[#allocation14 + $0x30] sm:$0xf]
    %v2111 = vld [vmem:[#allocation14 + $0x34] sm:$0xf]
    %v2112 = vld [vmem:[#allocation14 + $0x38] sm:$0xf]
    %v2113 = vld [vmem:[#allocation14 + $0x3c] sm:$0xf]
    %v2114 = vld [vmem:[#allocation14 + $0x40] sm:$0xf]
    %v2115 = vld [vmem:[#allocation14 + $0x44] sm:$0xf]
    %v2116 = vld [vmem:[#allocation14 + $0x48] sm:$0xf]
    %v2117 = vld [vmem:[#allocation14 + $0x4c] sm:$0xf]
    %v2118 = vld [vmem:[#allocation14 + $0x50] sm:$0xf]
    %v2119 = vld [vmem:[#allocation14 + $0x54] sm:$0xf]
    %v2120 = vld [vmem:[#allocation14 + $0x58] sm:$0xf]
    %v2121 = vld [vmem:[#allocation14 + $0x5c] sm:$0xf]
    %v2122 = vld [vmem:[#allocation14 + $0x60] sm:$0xf]
    %v2123 = vld [vmem:[#allocation14 + $0x64] sm:$0xf]
    %v2124 = vld [vmem:[#allocation14 + $0x68] sm:$0xf]
    %v2125 = vld [vmem:[#allocation14 + $0x6c] sm:$0xf]
    %v2126 = vld [vmem:[#allocation14 + $0x70] sm:$0xf]
    %v2127 = vld [vmem:[#allocation14 + $0x74] sm:$0xf]
    %v2128 = vld [vmem:[#allocation14 + $0x78] sm:$0xf]
    %v2129 = vld [vmem:[#allocation14 + $0x7c] sm:$0xf]
    %v2130 = vld [vmem:[#allocation14 + $0x80] sm:$0xf]
    %v2131 = vld [vmem:[#allocation14 + $0x84] sm:$0xf]
    %v2132 = vld [vmem:[#allocation14 + $0x88] sm:$0xf]
    %v2133 = vld [vmem:[#allocation14 + $0x8c] sm:$0xf]
    %v2134 = vld [vmem:[#allocation14 + $0x90] sm:$0xf]
    %v2135 = vld [vmem:[#allocation14 + $0x94] sm:$0xf]
    %v2136 = vld [vmem:[#allocation14 + $0x98] sm:$0xf]
    %v2137 = vld [vmem:[#allocation14 + $0x9c] sm:$0xf]
    %v2138 = vld [vmem:[#allocation14 + $0xa0] sm:$0xf]
    %v2139 = vld [vmem:[#allocation14 + $0xa4] sm:$0xf]
    %v2140 = vld [vmem:[#allocation14 + $0xa8] sm:$0xf]
    %v2141 = vld [vmem:[#allocation14 + $0xac] sm:$0xf]
    %v2142 = vld [vmem:[#allocation14 + $0xb0] sm:$0xf]
    %v2143 = vld [vmem:[#allocation14 + $0xb4] sm:$0xf]
    %v2144 = vld [vmem:[#allocation14 + $0xb8] sm:$0xf]
    %v2145 = vld [vmem:[#allocation14 + $0xbc] sm:$0xf]
    %v2146 = vld [vmem:[%s11] sm:$0x1]
    %v2148 = vlaneseq
    %v2149 = vshrl.u32 %v2148, 7
    %v2150 = vsub.s32 0, %v2149
    %v2151 = vrot.slane %v2146, %v2150
    %v2201 = vunpack.c.l.b16 %v2098
    %v2202 = vunpack.c.l.b16 %v2099
    %v2203 = vunpack.c.l.b16 %v2100
    %v2204 = vunpack.c.l.b16 %v2101
    %v2205 = vunpack.c.l.b16 %v2102
    %v2206 = vunpack.c.l.b16 %v2103
    %v2207 = vunpack.c.l.b16 %v2104
    %v2208 = vunpack.c.l.b16 %v2105
    %v2209 = vunpack.c.l.b16 %v2106
    %v2210 = vunpack.c.l.b16 %v2107
    %v2211 = vunpack.c.l.b16 %v2108
    %v2212 = vunpack.c.l.b16 %v2109
    %v2213 = vunpack.c.l.b16 %v2110
    %v2214 = vunpack.c.l.b16 %v2111
    %v2215 = vunpack.c.l.b16 %v2112
    %v2216 = vunpack.c.l.b16 %v2113
    %v2217 = vunpack.c.l.b16 %v2114
    %v2218 = vunpack.c.l.b16 %v2115
    %v2219 = vunpack.c.l.b16 %v2116
    %v2220 = vunpack.c.l.b16 %v2117
    %v2221 = vunpack.c.l.b16 %v2118
    %v2222 = vunpack.c.l.b16 %v2119
    %v2223 = vunpack.c.l.b16 %v2120
    %v2224 = vunpack.c.l.b16 %v2121
    %v2225 = vunpack.c.l.b16 %v2122
    %v2226 = vunpack.c.l.b16 %v2123
    %v2227 = vunpack.c.l.b16 %v2124
    %v2228 = vunpack.c.l.b16 %v2125
    %v2229 = vunpack.c.l.b16 %v2126
    %v2230 = vunpack.c.l.b16 %v2127
    %v2231 = vunpack.c.l.b16 %v2128
    %v2232 = vunpack.c.l.b16 %v2129
    %v2233 = vunpack.c.l.b16 %v2130
    %v2234 = vunpack.c.l.b16 %v2131
    %v2235 = vunpack.c.l.b16 %v2132
    %v2236 = vunpack.c.l.b16 %v2133
    %v2237 = vunpack.c.l.b16 %v2134
    %v2238 = vunpack.c.l.b16 %v2135
    %v2239 = vunpack.c.l.b16 %v2136
    %v2240 = vunpack.c.l.b16 %v2137
    %v2241 = vunpack.c.l.b16 %v2138
    %v2242 = vunpack.c.l.b16 %v2139
    %v2243 = vunpack.c.l.b16 %v2140
    %v2244 = vunpack.c.l.b16 %v2141
    %v2245 = vunpack.c.l.b16 %v2142
    %v2246 = vunpack.c.l.b16 %v2143
    %v2247 = vunpack.c.l.b16 %v2144
    %v2248 = vunpack.c.l.b16 %v2145
    %v2249 = vpack.c.b16 %v2202, %v2201
    %v2250 = vpack.c.b16 %v2204, %v2203
    %v2251 = vpack.c.b16 %v2206, %v2205
    %v2252 = vpack.c.b16 %v2208, %v2207
    %v2253 = vpack.c.b16 %v2210, %v2209
    %v2254 = vpack.c.b16 %v2212, %v2211
    %v2255 = vpack.c.b16 %v2214, %v2213
    %v2256 = vpack.c.b16 %v2216, %v2215
    %v2257 = vpack.c.b16 %v2218, %v2217
    %v2258 = vpack.c.b16 %v2220, %v2219
    %v2259 = vpack.c.b16 %v2222, %v2221
    %v2260 = vpack.c.b16 %v2224, %v2223
    %v2261 = vpack.c.b16 %v2226, %v2225
    %v2262 = vpack.c.b16 %v2228, %v2227
    %v2263 = vpack.c.b16 %v2230, %v2229
    %v2264 = vpack.c.b16 %v2232, %v2231
    %v2265 = vpack.c.b16 %v2234, %v2233
    %v2266 = vpack.c.b16 %v2236, %v2235
    %v2267 = vpack.c.b16 %v2238, %v2237
    %v2268 = vpack.c.b16 %v2240, %v2239
    %v2269 = vpack.c.b16 %v2242, %v2241
    %v2270 = vpack.c.b16 %v2244, %v2243
    %v2271 = vpack.c.b16 %v2246, %v2245
    %v2272 = vpack.c.b16 %v2248, %v2247
    %2297 = vmatprep.subr.bf16.mxu0 0
    %2298 = vmatpush1.bf16.msra.mxu0 %v2256
    %2299 = vmatprep.subr.bf16.mxu0 0
    %2300 = vmatpush1.bf16.msra.mxu0 %v2255
    %2301 = vmatprep.subr.bf16.mxu0 0
    %2302 = vmatpush1.bf16.msra.mxu0 %v2254
    %2303 = vmatprep.subr.bf16.mxu0 0
    %2304 = vmatpush1.bf16.msra.mxu0 %v2253
    %2305 = vmatprep.subr.bf16.mxu0 0
    %2306 = vmatpush1.bf16.msra.mxu0 %v2252
    %2307 = vmatprep.subr.bf16.mxu0 0
    %2308 = vmatpush1.bf16.msra.mxu0 %v2251
    %2309 = vmatprep.subr.bf16.mxu0 0
    %2310 = vmatpush1.bf16.msra.mxu0 %v2250
    %2311 = vmatprep.subr.bf16.mxu0 0
    %2312 = vmatpush1.bf16.msra.mxu0 %v2249
    %2313 = vmatprep.subr.bf16.mxu0 0
    %2314 = vmatpush2.bf16.msra.mxu0 %v2264
    %2315 = vmatprep.subr.bf16.mxu0 0
    %2316 = vmatpush2.bf16.msra.mxu0 %v2263
    %2317 = vmatprep.subr.bf16.mxu0 0
    %2318 = vmatpush2.bf16.msra.mxu0 %v2262
    %2319 = vmatprep.subr.bf16.mxu0 0
    %2320 = vmatpush2.bf16.msra.mxu0 %v2261
    %2321 = vmatprep.subr.bf16.mxu0 0
    %2322 = vmatpush2.bf16.msra.mxu0 %v2260
    %2323 = vmatprep.subr.bf16.mxu0 0
    %2324 = vmatpush2.bf16.msra.mxu0 %v2259
    %2325 = vmatprep.subr.bf16.mxu0 0
    %2326 = vmatpush2.bf16.msra.mxu0 %v2258
    %2327 = vmatprep.subr.bf16.mxu0 0
    %2328 = vmatpush2.bf16.msra.mxu0 %v2257
    %2329 = vmatprep.mubr.bf16.mxu0 %v1309
    %2330 = vmatmul.mubr.bf16.gmra.mxu0 %v2097
    %v2331 = vpop.f32.mrf.mxu0
    %v2332 = vadd.f32 %v2151, %v2331
    %v2333 = vpop.f32.mrf.mxu0
    %v2334 = vpop.f32.mrf.mxu0
    %v2335 = vpop.f32.mrf.mxu0
    %2336 = vdwg.mxu0
    %2337 = vmatprep.subr.bf16.mxu0 0
    %2338 = vmatpush1.bf16.msra.mxu0 %v2272
    %2339 = vmatprep.subr.bf16.mxu0 0
    %2340 = vmatpush1.bf16.msra.mxu0 %v2271
    %2341 = vmatprep.subr.bf16.mxu0 0
    %2342 = vmatpush1.bf16.msra.mxu0 %v2270
    %2343 = vmatprep.subr.bf16.mxu0 0
    %2344 = vmatpush1.bf16.msra.mxu0 %v2269
    %2345 = vmatprep.subr.bf16.mxu0 0
    %2346 = vmatpush1.bf16.msra.mxu0 %v2268
    %2347 = vmatprep.subr.bf16.mxu0 0
    %2348 = vmatpush1.bf16.msra.mxu0 %v2267
    %2349 = vmatprep.subr.bf16.mxu0 0
    %2350 = vmatpush1.bf16.msra.mxu0 %v2266
    %2351 = vmatprep.subr.bf16.mxu0 0
    %2352 = vmatpush1.bf16.msra.mxu0 %v2265
    %2353 = vmatprep.subr.bf16.mxu0 0
    %2354 = vmatpush2.bf16.msra.mxu0 0
    %2355 = vmatprep.subr.bf16.mxu0 0
    %2356 = vmatpush2.bf16.msra.mxu0 0
    %2357 = vmatprep.subr.bf16.mxu0 0
    %2358 = vmatpush2.bf16.msra.mxu0 0
    %2359 = vmatprep.subr.bf16.mxu0 0
    %2360 = vmatpush2.bf16.msra.mxu0 0
    %2361 = vmatprep.subr.bf16.mxu0 0
    %2362 = vmatpush2.bf16.msra.mxu0 0
    %2363 = vmatprep.subr.bf16.mxu0 0
    %2364 = vmatpush2.bf16.msra.mxu0 0
    %2365 = vmatprep.subr.bf16.mxu0 0
    %2366 = vmatpush2.bf16.msra.mxu0 0
    %2367 = vmatprep.subr.bf16.mxu0 0
    %2368 = vmatpush2.bf16.msra.mxu0 0
    %2369 = vmatprep.mubr.bf16.mxu0 0
    %2370 = vmatmul.mubr.bf16.gmra.mxu0 %v160
    %v2371 = vpop.f32.mrf.mxu0
    %v2372 = vadd.f32 %v2332, %v2371
    %v2373 = vpop.f32.mrf.mxu0
    %v2374 = vpop.f32.mrf.mxu0
    %v2375 = vpop.f32.mrf.mxu0
    %2376 = vdwg.mxu0
    %2377 = vst [vmem:[#allocation16] sm:$0xff] %v2372
    %2378 = vst [vmem:[#allocation17] sm:$0xff] %v2096
    %2379 = vst [vmem:[#allocation19] sm:$0xff] %v2094
    // Predicated region
    $region82: #{tpu_custom_call.1} parent=1 // pred_check
      _
    $region83: #{tpu_custom_call.1} parent=1 // pred_check_branch
      %2381 = sbr.rel (0) target = $region85
    $region84: #{tpu_custom_call.1} parent=1 // pred_region
      %s2383 = ssub.s32 128, 128
      %2384 = vsyncadd [#allocation4], %s2383
      %s2386 = sshll.u32 [#allocation16], 4
      %s2387 = int_to_ptr.vmem [resolvable:$true] %s2386
      %2389 = dma.vmem_to_hbm [thread:$0]  %s2387, 128, %s12, [#allocation4]
    $region85: #{tpu_custom_call.1} parent=1 // pred_fallthru
      _
    // Predicated region
    $region86: #{tpu_custom_call.1} parent=1 // pred_check
      _
    $region87: #{tpu_custom_call.1} parent=1 // pred_check_branch
      %2391 = sbr.rel (0) target = $region89
    $region88: #{tpu_custom_call.1} parent=1 // pred_region
      %s2393 = ssub.s32 128, 128
      %2394 = vsyncadd [#allocation18], %s2393
      %s2396 = sshll.u32 [#allocation17], 4
      %s2397 = int_to_ptr.vmem [resolvable:$true] %s2396
      %2399 = dma.vmem_to_hbm [thread:$0]  %s2397, 128, %s13, [#allocation18]
    $region89: #{tpu_custom_call.1} parent=1 // pred_fallthru
      _
    // Predicated region
    $region90: #{tpu_custom_call.1} parent=1 // pred_check
      _
    $region91: #{tpu_custom_call.1} parent=1 // pred_check_branch
      %2401 = sbr.rel (0) target = $region93
    $region92: #{tpu_custom_call.1} parent=1 // pred_region
      %s2403 = ssub.s32 128, 128
      %2404 = vsyncadd [#allocation18], %s2403
      %s2406 = sshll.u32 [#allocation19], 4
      %s2407 = int_to_ptr.vmem [resolvable:$true] %s2406
      %2409 = dma.vmem_to_hbm [thread:$0]  %s2407, 128, %s14, [#allocation18]
    $region93: #{tpu_custom_call.1} parent=1 // pred_fallthru
      _
    // Predicated region
    $region94: #{tpu_custom_call.1} parent=1 // pred_check
      _
    $region95: #{tpu_custom_call.1} parent=1 // pred_check_branch
      %2411 = sbr.rel (0) target = $region97
    $region96: #{tpu_custom_call.1} parent=1 // pred_region
      %2412 = dma.done [#allocation4], 128
    $region97: #{tpu_custom_call.1} parent=1 // pred_fallthru
      _
    // Predicated region
    $region98: #{tpu_custom_call.1} parent=1 // pred_check
      _
    $region99: #{tpu_custom_call.1} parent=1 // pred_check_branch
      %2414 = sbr.rel (0) target = $region101
    $region100: #{tpu_custom_call.1} parent=1 // pred_region
      %2415 = dma.done [#allocation18], 128
    $region101: #{tpu_custom_call.1} parent=1 // pred_fallthru
      _
    // Predicated region
    $region102: #{tpu_custom_call.1} parent=1 // pred_check
      _
    $region103: #{tpu_custom_call.1} parent=1 // pred_check_branch
      %2417 = sbr.rel (0) target = $region105
    $region104: #{tpu_custom_call.1} parent=1 // pred_region
      %2418 = dma.done [#allocation18], 128
    $region105: #{tpu_custom_call.1} parent=1 // pred_fallthru
      _
    %2419 = vsyncpa [#allocation3], 1
    %2420 = vsyncpa [#allocation6], 1
    %2421 = vsyncpa [#allocation9], 1
    %2422 = vsyncpa [#allocation12], 1
    %2423 = vsyncpa [#allocation15], 1
    %2424 = vsyncpa [#allocation4], 1
    %2425 = vsyncpa [#allocation18], 1

</llo_original>
